<compile_context>
chip_gen: v7x
topology: tpu7x:2x2x1
jax: 0.10.0
libtpu: 0.0.40
codegen_flags: <defaults>
</compile_context>

<pallas_src>
import functools
import numpy as np
import jax
import jax.numpy as jnp
from jax import lax
from jax.experimental import pallas as pl
from jax.experimental.pallas import tpu as pltpu

SPP_SIZES = (1, 3, 6, 8)          # -> K = 1 + 9 + 36 + 64 = 110 pooled positions
EMB = 256                         # internal channel count of the NL block
LANE = 128                        # TPU lane width (pad pooled axis to a multiple of this)


def adaptive_pool_matrix(H, W, sizes=SPP_SIZES):
    """Matrix P of shape (K, H*W): pooled[k] = sum_hw P[k, hw] * x[hw].

    Reproduces nn.AdaptiveAvgPool2d window semantics:
      start = floor(i*L/s), end = ceil((i+1)*L/s).
    """
    rows = []
    for s in sizes:
        rs = [(i * H) // s for i in range(s)]
        re = [-(-((i + 1) * H) // s) for i in range(s)]
        cs = [(j * W) // s for j in range(s)]
        ce = [-(-((j + 1) * W) // s) for j in range(s)]
        for i in range(s):
            for j in range(s):
                m = np.zeros((H, W), dtype=np.float32)
                area = (re[i] - rs[i]) * (ce[j] - cs[j])
                m[rs[i]:re[i], cs[j]:ce[j]] = 1.0 / area
                rows.append(m.reshape(-1))
    return np.stack(rows, axis=0)  # (K, H*W)


def nlblock_kernel(x_ref, wqkv_ref, bqkv_ref, pool_ref, wout_ref, bout_ref,
                   o_ref, *, k_valid):
    # x_ref:    (1, C, HW)  f32
    # wqkv_ref: (768, C)    bf16  (stacked [w_phi; w_theta; w_gamma])
    # bqkv_ref: (768, 1)    f32
    # pool_ref: (HW, Kp)    bf16  (zero-padded pooling matrix, Kp = 128-padded K)
    # wout_ref: (C, 256)    bf16
    # bout_ref: (C, 1)      f32
    x = x_ref[0]                                   # (C, HW) f32 (kept f32 for residual)
    hw = x.shape[1]
    xb = x.astype(jnp.bfloat16)

    # --- fused phi / theta / gamma 1x1 convs: one MXU pass over the stacked weight ---
    qkv = jnp.dot(wqkv_ref[...], xb, preferred_element_type=jnp.float32) + bqkv_ref[...]  # (768, HW)
    phi = jnp.maximum(qkv[:EMB], 0.0)              # (256, HW)  ReLU
    tg = qkv[EMB:]                                 # (512, HW)  [theta_pre ; gamma]
    row = lax.broadcasted_iota(jnp.int32, (2 * EMB, 1), 0)
    tg = jnp.where(row < EMB, jnp.maximum(tg, 0.0), tg)   # ReLU on the theta rows only

    # --- fused SPP adaptive-average pooling for theta and gamma: one pooling matmul ---
    tg_p = jnp.dot(tg.astype(jnp.bfloat16), pool_ref[...],
                   preferred_element_type=jnp.float32)    # (512, Kp)
    kp = tg_p.shape[1]
    # fold (h*w)^-0.25 into theta_p here: O(256*Kp) instead of O(HW*Kp)
    theta_p = tg_p[:EMB] * (float(hw) ** -0.25)           # (256, Kp)
    gamma_p = tg_p[EMB:]                                  # (256, Kp); padded cols exactly 0

    # torch.reshape(phi, (B, h*w, 256)) -- raw reshape, identity when h*w == 256
    phi_r = phi if hw == EMB else jnp.reshape(phi, (hw, EMB))   # (HW, 256)

    y1 = jnp.dot(phi_r.astype(jnp.bfloat16), theta_p.astype(jnp.bfloat16),
                 preferred_element_type=jnp.float32)            # (HW, Kp)

    # mask the zero-padded pooled positions to -inf before the softmax
    col = lax.broadcasted_iota(jnp.int32, (1, kp), 1)
    y1 = jnp.where(col < k_valid, y1, jnp.float32(-1e30))

    # softmax over the pooled-position axis (f32, reciprocal on the EUP)
    m = jnp.max(y1, axis=-1, keepdims=True)
    e = jnp.exp(y1 - m)
    denom = jnp.sum(e, axis=-1, keepdims=True)
    y1n = e * pl.reciprocal(denom, approx=True)

    # matmul(y1_norm, gamma_p.permute(0,2,1)) -> contract Kp of both operands
    y2 = lax.dot_general(y1n.astype(jnp.bfloat16), gamma_p.astype(jnp.bfloat16),
                         (((1,), (1,)), ((), ())),
                         preferred_element_type=jnp.float32)    # (HW, 256)

    # torch.reshape(y2, (B, 256, h, w)) -- raw reshape back, identity when h*w == 256
    y2_r = y2 if hw == EMB else jnp.reshape(y2, (EMB, hw))      # (256, HW)

    # output 1x1 conv + residual (residual in f32 against the original x)
    y2_w = jnp.dot(wout_ref[...], y2_r.astype(jnp.bfloat16),
                   preferred_element_type=jnp.float32) + bout_ref[...]
    o_ref[0] = (x + y2_w).astype(o_ref.dtype)


def nlblock_forward(x_nchw, params, pool_t):
    B, C, H, W = x_nchw.shape
    HW = H * W
    K = pool_t.shape[1]
    K_pad = ((K + LANE - 1) // LANE) * LANE        # 110 -> 128 (lane-dense attention path)

    x_flat = x_nchw.reshape(B, C, HW)

    # Fuse the three 1x1-conv weights/biases into one stacked operand (done once here).
    w_qkv = jnp.concatenate(
        [params["w_phi"], params["w_theta"], params["w_gamma"]], axis=0).astype(jnp.bfloat16)
    b_qkv = jnp.concatenate(
        [params["b_phi"], params["b_theta"], params["b_gamma"]], axis=0)          # f32
    pool_pad = jnp.pad(pool_t, ((0, 0), (0, K_pad - K))).astype(jnp.bfloat16)     # (HW, K_pad)
    w_out = params["w_out"].astype(jnp.bfloat16)
    b_out = params["b_out"]                                                        # f32

    kernel = functools.partial(nlblock_kernel, k_valid=K)

    # Weights/pool have constant index_maps; for very large models they could additionally be
    # single-buffered (pipeline_mode) or HW-tiled (two-phase grid) to cap VMEM on v7x.
    out = pl.pallas_call(
        kernel,
        out_shape=jax.ShapeDtypeStruct((B, C, HW), jnp.float32),
        grid=(B,),
        in_specs=[
            pl.BlockSpec((1, C, HW), lambda b: (b, 0, 0)),     # x (f32)
            pl.BlockSpec((3 * EMB, C), lambda b: (0, 0)),      # fused w_phi|w_theta|w_gamma
            pl.BlockSpec((3 * EMB, 1), lambda b: (0, 0)),      # fused biases
            pl.BlockSpec((HW, K_pad), lambda b: (0, 0)),       # padded pooling matrix
            pl.BlockSpec((C, EMB), lambda b: (0, 0)),          # w_out
            pl.BlockSpec((C, 1), lambda b: (0, 0)),            # b_out
        ],
        out_specs=pl.BlockSpec((1, C, HW), lambda b: (b, 0, 0)),
        compiler_params=pltpu.CompilerParams(
            dimension_semantics=("parallel",),                 # batch axis: megacore-shardable
            vmem_limit_bytes=64 * 1024 * 1024,
        ),
    )(x_flat, w_qkv, b_qkv, pool_pad, w_out, b_out)
    return out.reshape(B, C, H, W)


def nlblock_reference(x, params, pool_t):
    """Pure-JAX f32 reference mirroring the PyTorch forward exactly."""
    B, C, H, W = x.shape
    HW = H * W
    xf = x.reshape(B, C, HW)
    phi = jnp.maximum(jnp.einsum("oc,bcp->bop", params["w_phi"], xf) + params["b_phi"][None], 0.0)
    theta = jnp.maximum(jnp.einsum("oc,bcp->bop", params["w_theta"], xf) + params["b_theta"][None], 0.0)
    gamma = jnp.einsum("oc,bcp->bop", params["w_gamma"], xf) + params["b_gamma"][None]
    theta_p = jnp.einsum("bop,pk->bok", theta, pool_t)
    gamma_p = jnp.einsum("bop,pk->bok", gamma, pool_t)
    phi_r = phi.reshape(B, HW, EMB)
    y1 = jnp.einsum("bic,bck->bik", phi_r, theta_p) * (HW ** -0.25)
    y1n = jax.nn.softmax(y1, axis=-1)
    y2 = jnp.einsum("bik,bck->bic", y1n, gamma_p)
    y2_r = y2.reshape(B, EMB, HW)
    y2_w = jnp.einsum("oc,bcp->bop", params["w_out"], y2_r) + params["b_out"][None]
    return (xf + y2_w).reshape(B, C, H, W)


def init_params(key, channel_ga):
    # Deterministic synthetic init (original uses orthogonal init; any deterministic
    # init is fine for this synthetic kernel test).
    ks = jax.random.split(key, 8)
    return {
        "w_phi":   0.05 * jax.random.normal(ks[0], (EMB, channel_ga), jnp.float32),
        "b_phi":   0.05 * jax.random.normal(ks[1], (EMB, 1), jnp.float32),
        "w_theta": 0.05 * jax.random.normal(ks[2], (EMB, channel_ga), jnp.float32),
        "b_theta": 0.05 * jax.random.normal(ks[3], (EMB, 1), jnp.float32),
        "w_gamma": 0.05 * jax.random.normal(ks[4], (EMB, channel_ga), jnp.float32),
        "b_gamma": 0.05 * jax.random.normal(ks[5], (EMB, 1), jnp.float32),
        "w_out":   0.05 * jax.random.normal(ks[6], (channel_ga, EMB), jnp.float32),
        "b_out":   0.05 * jax.random.normal(ks[7], (channel_ga, 1), jnp.float32),
    }


if __name__ == "__main__":
    B, C, H, W = 2, 4, 16, 16
    key = jax.random.PRNGKey(0)
    kx, kp = jax.random.split(key)
    x = jax.random.normal(kx, (B, C, H, W), jnp.float32)
    params = init_params(kp, C)

    pool_t = jnp.asarray(adaptive_pool_matrix(H, W).T)   # (H*W, K=110), f32

    y = nlblock_forward(x, params, pool_t)
    y = jax.block_until_ready(y)

    y_ref = nlblock_reference(x, params, pool_t)
    # Tolerance accounts for the intentional bf16 MXU operands (f32 accumulation) and the
    # approximate EUP reciprocal in the softmax; observed error is ~1e-3, margin ~20x.
    np.testing.assert_allclose(np.asarray(y), np.asarray(y_ref), rtol=2e-2, atol=2e-2)

    print("KERNEL_OK")
</pallas_src>

<mosaic_0001>
module attributes {stable_mosaic.version = 11 : i64} {
  func.func @nlblock_kernel(%arg0: i32, %arg1: memref<1x4x256xf32, #tpu.memory_space<vmem>>, %arg2: memref<768x4xbf16, #tpu.memory_space<vmem>>, %arg3: memref<768x1xf32, #tpu.memory_space<vmem>>, %arg4: memref<256x128xbf16, #tpu.memory_space<vmem>>, %arg5: memref<4x256xbf16, #tpu.memory_space<vmem>>, %arg6: memref<4x1xf32, #tpu.memory_space<vmem>>, %arg7: memref<1x4x256xf32, #tpu.memory_space<vmem>>) attributes {dimension_semantics = [#tpu.dimension_semantics<parallel>], iteration_bounds = array<i64: 2>, scalar_prefetch = 0 : i64, scratch_operands = 0 : i64, tpu.core_type = #tpu.core_type<tc>, window_params = [{transform_indices = @transform_0, window_bounds = array<i64: 1, 4, 256>}, {pipeline_mode = #tpu.pipeline_mode<synchronous>, transform_indices = @transform_1, window_bounds = array<i64: 768, 4>}, {pipeline_mode = #tpu.pipeline_mode<synchronous>, transform_indices = @transform_2, window_bounds = array<i64: 768, 1>}, {pipeline_mode = #tpu.pipeline_mode<synchronous>, transform_indices = @transform_3, window_bounds = array<i64: 256, 128>}, {pipeline_mode = #tpu.pipeline_mode<synchronous>, transform_indices = @transform_4, window_bounds = array<i64: 4, 256>}, {pipeline_mode = #tpu.pipeline_mode<synchronous>, transform_indices = @transform_5, window_bounds = array<i64: 4, 1>}, {transform_indices = @transform_6, window_bounds = array<i64: 1, 4, 256>}]} {
    %c0 = arith.constant 0 : index
    %c0_0 = arith.constant 0 : index
    %c0_1 = arith.constant 0 : index
    %0 = vector.load %arg1[%c0, %c0_0, %c0_1] : memref<1x4x256xf32, #tpu.memory_space<vmem>>, vector<1x4x256xf32>
    %1 = vector.shape_cast %0 : vector<1x4x256xf32> to vector<4x256xf32>
    %2 = arith.truncf %1 : vector<4x256xf32> to vector<4x256xbf16>
    %c0_2 = arith.constant 0 : index
    %c0_3 = arith.constant 0 : index
    %3 = vector.load %arg2[%c0_2, %c0_3] : memref<768x4xbf16, #tpu.memory_space<vmem>>, vector<768x4xbf16>
    %cst = arith.constant dense<0.000000e+00> : vector<768x256xf32>
    %4 = tpu.matmul %3, %2, %cst {dimension_numbers = #tpu.dot_dimension_numbers<[1], [0], [0], [1], [0, 0, 1, 1], [], []>} : vector<768x4xbf16>, vector<4x256xbf16>, vector<768x256xf32> -> vector<768x256xf32>
    %c0_4 = arith.constant 0 : index
    %c0_5 = arith.constant 0 : index
    %5 = vector.load %arg3[%c0_4, %c0_5] : memref<768x1xf32, #tpu.memory_space<vmem>>, vector<768x1xf32>
    %6 = vector.broadcast %5 : vector<768x1xf32> to vector<768x256xf32>
    %7 = arith.addf %4, %6 : vector<768x256xf32>
    %8 = vector.extract_strided_slice %7 {offsets = [0, 0], sizes = [256, 256], strides = [1, 1]} : vector<768x256xf32> to vector<256x256xf32>
    %cst_6 = arith.constant 0.000000e+00 : f32
    %9 = vector.broadcast %cst_6 : f32 to vector<256x256xf32>
    %10 = arith.maximumf %8, %9 : vector<256x256xf32>
    %11 = vector.extract_strided_slice %7 {offsets = [256, 0], sizes = [512, 256], strides = [1, 1]} : vector<768x256xf32> to vector<512x256xf32>
    %12 = tpu.iota {dimensions = array<i32: 0>} : vector<512x1xi32>
    %c256_i32 = arith.constant 256 : i32
    %13 = vector.broadcast %c256_i32 : i32 to vector<512x1xi32>
    %14 = arith.cmpi slt, %12, %13 : vector<512x1xi32>
    %cst_7 = arith.constant 0.000000e+00 : f32
    %15 = vector.broadcast %cst_7 : f32 to vector<512x256xf32>
    %16 = arith.maximumf %11, %15 : vector<512x256xf32>
    %17 = vector.shape_cast %14 : vector<512x1xi1> to vector<512x1xi1>
    %18 = vector.broadcast %17 : vector<512x1xi1> to vector<512x256xi1>
    %19 = arith.select %18, %16, %11 : vector<512x256xi1>, vector<512x256xf32>
    %20 = arith.truncf %19 : vector<512x256xf32> to vector<512x256xbf16>
    %c0_8 = arith.constant 0 : index
    %c0_9 = arith.constant 0 : index
    %21 = vector.load %arg4[%c0_8, %c0_9] : memref<256x128xbf16, #tpu.memory_space<vmem>>, vector<256x128xbf16>
    %cst_10 = arith.constant dense<0.000000e+00> : vector<512x128xf32>
    %22 = tpu.matmul %20, %21, %cst_10 {dimension_numbers = #tpu.dot_dimension_numbers<[1], [0], [0], [1], [0, 0, 1, 1], [], []>} : vector<512x256xbf16>, vector<256x128xbf16>, vector<512x128xf32> -> vector<512x128xf32>
    %23 = vector.extract_strided_slice %22 {offsets = [0, 0], sizes = [256, 128], strides = [1, 1]} : vector<512x128xf32> to vector<256x128xf32>
    %cst_11 = arith.constant 2.500000e-01 : f32
    %24 = vector.broadcast %cst_11 : f32 to vector<256x128xf32>
    %25 = arith.mulf %23, %24 : vector<256x128xf32>
    %26 = vector.extract_strided_slice %22 {offsets = [256, 0], sizes = [256, 128], strides = [1, 1]} : vector<512x128xf32> to vector<256x128xf32>
    %27 = arith.truncf %10 : vector<256x256xf32> to vector<256x256xbf16>
    %28 = arith.truncf %25 : vector<256x128xf32> to vector<256x128xbf16>
    %cst_12 = arith.constant dense<0.000000e+00> : vector<256x128xf32>
    %29 = tpu.matmul %27, %28, %cst_12 {dimension_numbers = #tpu.dot_dimension_numbers<[1], [0], [0], [1], [0, 0, 1, 1], [], []>} : vector<256x256xbf16>, vector<256x128xbf16>, vector<256x128xf32> -> vector<256x128xf32>
    %30 = tpu.iota {dimensions = array<i32: 1>} : vector<1x128xi32>
    %c110_i32 = arith.constant 110 : i32
    %31 = vector.broadcast %c110_i32 : i32 to vector<1x128xi32>
    %32 = arith.cmpi slt, %30, %31 : vector<1x128xi32>
    %cst_13 = arith.constant -1.000000e+30 : f32
    %33 = vector.shape_cast %32 : vector<1x128xi1> to vector<1x128xi1>
    %34 = vector.broadcast %33 : vector<1x128xi1> to vector<256x128xi1>
    %35 = vector.broadcast %cst_13 : f32 to vector<256x128xf32>
    %36 = arith.select %34, %29, %35 : vector<256x128xi1>, vector<256x128xf32>
    %cst_14 = arith.constant dense<0xFF800000> : vector<256xf32>
    %37 = vector.multi_reduction <maximumf>, %36, %cst_14 [1] : vector<256x128xf32> to vector<256xf32>
    %38 = vector.shape_cast %37 : vector<256xf32> to vector<256x1xf32>
    %39 = vector.broadcast %38 : vector<256x1xf32> to vector<256x128xf32>
    %40 = arith.subf %36, %39 : vector<256x128xf32>
    %41 = math.exp %40 : vector<256x128xf32>
    %cst_15 = arith.constant dense<0.000000e+00> : vector<256xf32>
    %42 = vector.multi_reduction <add>, %41, %cst_15 [1] : vector<256x128xf32> to vector<256xf32>
    %43 = vector.shape_cast %42 : vector<256xf32> to vector<256x1xf32>
    %44 = tpu.reciprocal %43 {approx = true} : vector<256x1xf32> -> vector<256x1xf32>
    %45 = vector.broadcast %44 : vector<256x1xf32> to vector<256x128xf32>
    %46 = arith.mulf %41, %45 : vector<256x128xf32>
    %47 = arith.truncf %46 : vector<256x128xf32> to vector<256x128xbf16>
    %48 = arith.truncf %26 : vector<256x128xf32> to vector<256x128xbf16>
    %cst_16 = arith.constant dense<0.000000e+00> : vector<256x256xf32>
    %49 = tpu.matmul %47, %48, %cst_16 {dimension_numbers = #tpu.dot_dimension_numbers<[1], [1], [0], [0], [0, 0, 1, 0], [], []>} : vector<256x128xbf16>, vector<256x128xbf16>, vector<256x256xf32> -> vector<256x256xf32>
    %c0_17 = arith.constant 0 : index
    %c0_18 = arith.constant 0 : index
    %50 = vector.load %arg5[%c0_17, %c0_18] : memref<4x256xbf16, #tpu.memory_space<vmem>>, vector<4x256xbf16>
    %51 = arith.truncf %49 : vector<256x256xf32> to vector<256x256xbf16>
    %cst_19 = arith.constant dense<0.000000e+00> : vector<4x256xf32>
    %52 = tpu.matmul %50, %51, %cst_19 {dimension_numbers = #tpu.dot_dimension_numbers<[1], [0], [0], [1], [0, 0, 1, 1], [], []>} : vector<4x256xbf16>, vector<256x256xbf16>, vector<4x256xf32> -> vector<4x256xf32>
    %c0_20 = arith.constant 0 : index
    %c0_21 = arith.constant 0 : index
    %53 = vector.load %arg6[%c0_20, %c0_21] : memref<4x1xf32, #tpu.memory_space<vmem>>, vector<4x1xf32>
    %54 = vector.broadcast %53 : vector<4x1xf32> to vector<4x256xf32>
    %55 = arith.addf %52, %54 : vector<4x256xf32>
    %56 = arith.addf %1, %55 : vector<4x256xf32>
    %c0_22 = arith.constant 0 : index
    %c0_23 = arith.constant 0 : index
    %c0_24 = arith.constant 0 : index
    %57 = vector.load %arg7[%c0_22, %c0_23, %c0_24] : memref<1x4x256xf32, #tpu.memory_space<vmem>>, vector<1x4x256xf32>
    %58 = vector.shape_cast %57 : vector<1x4x256xf32> to vector<4x256xf32>
    %59 = vector.shape_cast %56 : vector<4x256xf32> to vector<1x4x256xf32>
    tpu.vector_store %arg7[%c0_22, %c0_23, %c0_24], %59 {strides = array<i32>} : memref<1x4x256xf32, #tpu.memory_space<vmem>>, vector<1x4x256xf32>,
    return
  }
  func.func @transform_0(%arg0: i32) -> (i32, i32, i32) {
    %c0_i32 = arith.constant 0 : i32
    %c0_i32_0 = arith.constant 0 : i32
    %c0_i32_1 = arith.constant 0 : i32
    return %arg0, %c0_i32, %c0_i32_0 : i32, i32, i32
  }
  func.func @transform_1(%arg0: i32) -> (i32, i32) {
    %c0_i32 = arith.constant 0 : i32
    %c0_i32_0 = arith.constant 0 : i32
    %c0_i32_1 = arith.constant 0 : i32
    return %c0_i32, %c0_i32_0 : i32, i32
  }
  func.func @transform_2(%arg0: i32) -> (i32, i32) {
    %c0_i32 = arith.constant 0 : i32
    %c0_i32_0 = arith.constant 0 : i32
    %c0_i32_1 = arith.constant 0 : i32
    return %c0_i32, %c0_i32_0 : i32, i32
  }
  func.func @transform_3(%arg0: i32) -> (i32, i32) {
    %c0_i32 = arith.constant 0 : i32
    %c0_i32_0 = arith.constant 0 : i32
    %c0_i32_1 = arith.constant 0 : i32
    return %c0_i32, %c0_i32_0 : i32, i32
  }
  func.func @transform_4(%arg0: i32) -> (i32, i32) {
    %c0_i32 = arith.constant 0 : i32
    %c0_i32_0 = arith.constant 0 : i32
    %c0_i32_1 = arith.constant 0 : i32
    return %c0_i32, %c0_i32_0 : i32, i32
  }
  func.func @transform_5(%arg0: i32) -> (i32, i32) {
    %c0_i32 = arith.constant 0 : i32
    %c0_i32_0 = arith.constant 0 : i32
    %c0_i32_1 = arith.constant 0 : i32
    return %c0_i32, %c0_i32_0 : i32, i32
  }
  func.func @transform_6(%arg0: i32) -> (i32, i32, i32) {
    %c0_i32 = arith.constant 0 : i32
    %c0_i32_0 = arith.constant 0 : i32
    %c0_i32_1 = arith.constant 0 : i32
    return %arg0, %c0_i32, %c0_i32_0 : i32, i32, i32
  }
}

</mosaic_0001>

<llo_original>
// kernel: tpu_custom_call.1
$region0: #{tpu_custom_call.1}
  #allocation0 [shape = 'u32[]', space=smem, size = 0x4, offset = 0x4, fixed_abs, tag = 'smem constant byte address 0x4 - core index']
  #allocation1 [shape = 'u32[144,128]{1,0:T(1,128)}', space=vmem, size = 0x12000, scoped, tag = 'internal scratch']
  %s0 = inlined_call_operand.hbm [shape: f32[2,4,256], index: 0, kind: input, shape index: {}]
  %s1 = inlined_call_operand.hbm [shape: bf16[768,4], index: 1, kind: input, shape index: {}]
  %s2 = inlined_call_operand.hbm [shape: f32[768,1], index: 2, kind: input, shape index: {}]
  %s3 = inlined_call_operand.hbm [shape: bf16[256,128], index: 3, kind: input, shape index: {}]
  %s4 = inlined_call_operand.hbm [shape: bf16[4,256], index: 4, kind: input, shape index: {}]
  %s5 = inlined_call_operand.hbm [shape: f32[4,1], index: 5, kind: input, shape index: {}]
  %s6 = inlined_call_operand.hbm [shape: f32[2,4,256], index: 6, kind: output, shape index: {}]
  %s7 = sld [smem:[#allocation0]]
  $region81: #{tpu_custom_call.1} parent=0
    _
  %s9 = ssub.s32 1, %s7
  %s10 = scalar_select 0, %s9, %s7
  $region1: #{tpu_custom_call.1} parent=0
    #allocation2 [shape = 'u8[8192]{0}', space=vmem, size = 0x2000, scoped, tag = 'input window, operand 0']
    #allocation3 [shape = 's32[2]{0}', space=sflag, size = 0x8, scoped, tag = 'scoped memory for tpu_custom_call.1']
    #allocation4 [shape = 's32[2]{0}', space=sflag, size = 0x8, scoped, tag = 'scoped memory for tpu_custom_call.1']
    #allocation5 [shape = 'u8[196608]{0}', space=vmem, size = 0x30000, scoped, tag = 'input window, operand 1, single buffered']
    #allocation6 [shape = 's32[1]{0}', space=sflag, size = 0x4, scoped, tag = 'scoped memory for tpu_custom_call.1']
    #allocation7 [shape = 'u8[393216]{0}', space=vmem, size = 0x60000, scoped, tag = 'input window, operand 2, single buffered']
    #allocation8 [shape = 'u8[65536]{0}', space=vmem, size = 0x10000, scoped, tag = 'input window, operand 3, single buffered']
    #allocation9 [shape = 's32[1]{0}', space=sflag, size = 0x4, scoped, tag = 'scoped memory for tpu_custom_call.1']
    #allocation10 [shape = 'u8[2048]{0}', space=vmem, size = 0x800, scoped, tag = 'input window, operand 4, single buffered']
    #allocation11 [shape = 'u8[2048]{0}', space=vmem, size = 0x800, scoped, tag = 'input window, operand 5, single buffered']
    #allocation12 [shape = 's32[1]{0}', space=sflag, size = 0x4, scoped, tag = 'scoped memory for tpu_custom_call.1']
    #allocation13 [shape = 'u8[8192]{0}', space=vmem, size = 0x2000, scoped, tag = 'output window, operand 0']
    %11 = vsyncpa [#allocation3], 0
    %s12 = scalar_lea.sflag [#allocation3], 1
    %13 = vsyncpa %s12, 0
    %14 = vsyncpa [#allocation6], 0
    %15 = vsyncpa [#allocation9], 0
    %16 = vsyncpa [#allocation12], 0
    %17 = vsyncpa [#allocation4], 0
    %s18 = scalar_lea.sflag [#allocation4], 1
    %19 = vsyncpa %s18, 0
    loop: start=0, step=1, limit=4
    $region2: #{tpu_custom_call.1} parent=1 // loop_pre_header
      _
    $region3: #{tpu_custom_call.1} parent=1 // loop_header
      %s21 = sphi 0, %s25
      %p22 = scmp.ge.s32.totalorder %s21, 4
      %s31 = sphi 0, %s33
      %s34 = sphi 0, %s31
      %s35 = sphi 0, %s34
      %s51 = sphi 0, %s35
      %s55 = sphi 0, %s55
      %s57 = sphi 0, %s55
      %s58 = sphi 0, %s57
      %s72 = sphi 0, %s58
      %s76 = sphi 0, %s76
      %s78 = sphi 0, %s76
      %s79 = sphi 0, %s78
      %s93 = sphi 0, %s79
      %s97 = sphi 0, %s97
      %s99 = sphi 0, %s97
      %s100 = sphi 0, %s99
      %s114 = sphi 0, %s100
      %s118 = sphi 0, %s118
      %s120 = sphi 0, %s118
      %s121 = sphi 0, %s120
      %s135 = sphi 0, %s121
      %s139 = sphi 0, %s139
      %s141 = sphi 0, %s139
      %s142 = sphi 0, %s141
      %s156 = sphi 0, %s142
      %s162 = sphi 0, %s164
      %s165 = sphi 0, %s162
      %s166 = sphi 0, %s165
      %s182 = sphi 0, %s166
    $region4: #{tpu_custom_call.1} parent=1 // loop_header_branch
      %24 = sbr.rel (%p22) target = $region8
    $region5: #{tpu_custom_call.1} parent=1 // loop_body
      %s26 = ssub.s32 %s21, 1
      %s27 = ssub.s32 %s21, 2
      %s28 = sadd.s32 %s21, 1
      %s29 = ssub.s32 %s21, %s28
      %p30 = scmp.eq.s32.totalorder %s29, 0
      %s32 = sadd.s32 %s31, 1
      %s33 = scalar_select %p30, %s31, %s32
      %p36 = pneg %p30
      %p37 = scmp.eq.s32.totalorder %s21, 1
      %p38 = por %p36, %p37
      %p39 = scmp.ne.s32.totalorder %s31, %s34
      %p40 = scmp.eq.s32.totalorder %s21, 0
      %p41 = por %p39, %p40
      %p42 = scmp.ne.s32.totalorder %s31, %s34
      %p43 = scmp.eq.s32.totalorder %s26, 1
      %p44 = por %p42, %p43
      %p45 = scmp.ne.s32.totalorder %s34, %s35
      %p46 = scmp.eq.s32.totalorder %s26, 0
      %p47 = por %p45, %p46
      %p48 = scmp.ne.s32.totalorder %s34, %s35
      %p49 = scmp.eq.s32.totalorder %s27, 1
      %p50 = por %p48, %p49
      %p52 = scmp.ne.s32.totalorder %s35, %s51
      %p53 = scmp.eq.s32.totalorder %s27, 0
      %p54 = por %p52, %p53
      %s56 = sadd.s32 %s55, 1
      %p59 = scmp.eq.s32.totalorder %s21, 1
      %p60 = scmp.ne.s32.totalorder %s55, %s57
      %p61 = scmp.eq.s32.totalorder %s21, 0
      %p62 = por %p60, %p61
      %p63 = scmp.ne.s32.totalorder %s55, %s57
      %p64 = scmp.eq.s32.totalorder %s26, 1
      %p65 = por %p63, %p64
      %p66 = scmp.ne.s32.totalorder %s57, %s58
      %p67 = scmp.eq.s32.totalorder %s26, 0
      %p68 = por %p66, %p67
      %p69 = scmp.ne.s32.totalorder %s57, %s58
      %p70 = scmp.eq.s32.totalorder %s27, 1
      %p71 = por %p69, %p70
      %p73 = scmp.ne.s32.totalorder %s58, %s72
      %p74 = scmp.eq.s32.totalorder %s27, 0
      %p75 = por %p73, %p74
      %s77 = sadd.s32 %s76, 1
      %p80 = scmp.eq.s32.totalorder %s21, 1
      %p81 = scmp.ne.s32.totalorder %s76, %s78
      %p82 = scmp.eq.s32.totalorder %s21, 0
      %p83 = por %p81, %p82
      %p84 = scmp.ne.s32.totalorder %s76, %s78
      %p85 = scmp.eq.s32.totalorder %s26, 1
      %p86 = por %p84, %p85
      %p87 = scmp.ne.s32.totalorder %s78, %s79
      %p88 = scmp.eq.s32.totalorder %s26, 0
      %p89 = por %p87, %p88
      %p90 = scmp.ne.s32.totalorder %s78, %s79
      %p91 = scmp.eq.s32.totalorder %s27, 1
      %p92 = por %p90, %p91
      %p94 = scmp.ne.s32.totalorder %s79, %s93
      %p95 = scmp.eq.s32.totalorder %s27, 0
      %p96 = por %p94, %p95
      %s98 = sadd.s32 %s97, 1
      %p101 = scmp.eq.s32.totalorder %s21, 1
      %p102 = scmp.ne.s32.totalorder %s97, %s99
      %p103 = scmp.eq.s32.totalorder %s21, 0
      %p104 = por %p102, %p103
      %p105 = scmp.ne.s32.totalorder %s97, %s99
      %p106 = scmp.eq.s32.totalorder %s26, 1
      %p107 = por %p105, %p106
      %p108 = scmp.ne.s32.totalorder %s99, %s100
      %p109 = scmp.eq.s32.totalorder %s26, 0
      %p110 = por %p108, %p109
      %p111 = scmp.ne.s32.totalorder %s99, %s100
      %p112 = scmp.eq.s32.totalorder %s27, 1
      %p113 = por %p111, %p112
      %p115 = scmp.ne.s32.totalorder %s100, %s114
      %p116 = scmp.eq.s32.totalorder %s27, 0
      %p117 = por %p115, %p116
      %s119 = sadd.s32 %s118, 1
      %p122 = scmp.eq.s32.totalorder %s21, 1
      %p123 = scmp.ne.s32.totalorder %s118, %s120
      %p124 = scmp.eq.s32.totalorder %s21, 0
      %p125 = por %p123, %p124
      %p126 = scmp.ne.s32.totalorder %s118, %s120
      %p127 = scmp.eq.s32.totalorder %s26, 1
      %p128 = por %p126, %p127
      %p129 = scmp.ne.s32.totalorder %s120, %s121
      %p130 = scmp.eq.s32.totalorder %s26, 0
      %p131 = por %p129, %p130
      %p132 = scmp.ne.s32.totalorder %s120, %s121
      %p133 = scmp.eq.s32.totalorder %s27, 1
      %p134 = por %p132, %p133
      %p136 = scmp.ne.s32.totalorder %s121, %s135
      %p137 = scmp.eq.s32.totalorder %s27, 0
      %p138 = por %p136, %p137
      %s140 = sadd.s32 %s139, 1
      %p143 = scmp.eq.s32.totalorder %s21, 1
      %p144 = scmp.ne.s32.totalorder %s139, %s141
      %p145 = scmp.eq.s32.totalorder %s21, 0
      %p146 = por %p144, %p145
      %p147 = scmp.ne.s32.totalorder %s139, %s141
      %p148 = scmp.eq.s32.totalorder %s26, 1
      %p149 = por %p147, %p148
      %p150 = scmp.ne.s32.totalorder %s141, %s142
      %p151 = scmp.eq.s32.totalorder %s26, 0
      %p152 = por %p150, %p151
      %p153 = scmp.ne.s32.totalorder %s141, %s142
      %p154 = scmp.eq.s32.totalorder %s27, 1
      %p155 = por %p153, %p154
      %p157 = scmp.ne.s32.totalorder %s142, %s156
      %p158 = scmp.eq.s32.totalorder %s27, 0
      %p159 = por %p157, %p158
      %s160 = ssub.s32 %s21, %s28
      %p161 = scmp.eq.s32.totalorder %s160, 0
      %s163 = sadd.s32 %s162, 1
      %s164 = scalar_select %p161, %s162, %s163
      %p167 = pneg %p161
      %p168 = scmp.eq.s32.totalorder %s21, 1
      %p169 = por %p167, %p168
      %p170 = scmp.ne.s32.totalorder %s162, %s165
      %p171 = scmp.eq.s32.totalorder %s21, 0
      %p172 = por %p170, %p171
      %p173 = scmp.ne.s32.totalorder %s162, %s165
      %p174 = scmp.eq.s32.totalorder %s26, 1
      %p175 = por %p173, %p174
      %p176 = scmp.ne.s32.totalorder %s165, %s166
      %p177 = scmp.eq.s32.totalorder %s26, 0
      %p178 = por %p176, %p177
      %p179 = scmp.ne.s32.totalorder %s165, %s166
      %p180 = scmp.eq.s32.totalorder %s27, 1
      %p181 = por %p179, %p180
      %p183 = scmp.ne.s32.totalorder %s166, %s182
      %p184 = scmp.eq.s32.totalorder %s27, 0
      %p185 = por %p183, %p184
      %p186 = scmp.le.s32.totalorder 1, %s21
      %p187 = scmp.lt.s32.totalorder %s21, 3
      %p188 = pnand %p186, %p187
      %p189 = pneg %p188
      // Predicated region
      $region9: #{tpu_custom_call.1} parent=5 // pred_check
        _
      $region10: #{tpu_custom_call.1} parent=5 // pred_check_branch
        %191 = sbr.rel (%p188) target = $region12
      $region11: #{tpu_custom_call.1} parent=5 // pred_region
        %s192 = ssub.s32 %s21, 1
        // Predicated region
        $region13: #{tpu_custom_call.1} parent=11 // pred_check
          %p193 = pneg %p68
        $region14: #{tpu_custom_call.1} parent=11 // pred_check_branch
          %195 = sbr.rel (%p193) target = $region16
        $region15: #{tpu_custom_call.1} parent=11 // pred_region
          %s197 = ssub.s32 6144, 6144
          %198 = vsyncadd [#allocation6], %s197
          %s199 = sshll.u32 [#allocation5], 4
          %s200 = int_to_ptr.vmem [resolvable:$true] %s199
          %205 = dma.hbm_to_vmem [thread:$0]  %s1, 6144, %s200, [#allocation6], 64, 64, 4
        $region16: #{tpu_custom_call.1} parent=11 // pred_fallthru
          _
        // Predicated region
        $region17: #{tpu_custom_call.1} parent=11 // pred_check
          %p206 = pneg %p89
        $region18: #{tpu_custom_call.1} parent=11 // pred_check_branch
          %208 = sbr.rel (%p206) target = $region20
        $region19: #{tpu_custom_call.1} parent=11 // pred_region
          %s210 = ssub.s32 12288, 12288
          %211 = vsyncadd [#allocation6], %s210
          %s212 = sshll.u32 [#allocation7], 4
          %s213 = int_to_ptr.vmem [resolvable:$true] %s212
          %218 = dma.hbm_to_vmem [thread:$0]  %s2, 12288, %s213, [#allocation6], 128, 128, 8
        $region20: #{tpu_custom_call.1} parent=11 // pred_fallthru
          _
        // Predicated region
        $region21: #{tpu_custom_call.1} parent=11 // pred_check
          %p219 = pneg %p110
        $region22: #{tpu_custom_call.1} parent=11 // pred_check_branch
          %221 = sbr.rel (%p219) target = $region24
        $region23: #{tpu_custom_call.1} parent=11 // pred_region
          %s223 = ssub.s32 2048, 2048
          %224 = vsyncadd [#allocation9], %s223
          %s225 = sshll.u32 [#allocation8], 4
          %s226 = int_to_ptr.vmem [resolvable:$true] %s225
          %231 = dma.hbm_to_vmem [thread:$0]  %s3, 2048, %s226, [#allocation9], 64, 64, 4
        $region24: #{tpu_custom_call.1} parent=11 // pred_fallthru
          _
        // Predicated region
        $region25: #{tpu_custom_call.1} parent=11 // pred_check
          %p232 = pneg %p131
        $region26: #{tpu_custom_call.1} parent=11 // pred_check_branch
          %234 = sbr.rel (%p232) target = $region28
        $region27: #{tpu_custom_call.1} parent=11 // pred_region
          %s236 = ssub.s32 64, 64
          %237 = vsyncadd [#allocation9], %s236
          %s239 = sshll.u32 [#allocation10], 4
          %s240 = int_to_ptr.vmem [resolvable:$true] %s239
          %242 = dma.hbm_to_vmem [thread:$0]  %s4, 64, %s240, [#allocation9]
        $region28: #{tpu_custom_call.1} parent=11 // pred_fallthru
          _
        // Predicated region
        $region29: #{tpu_custom_call.1} parent=11 // pred_check
          %p243 = pneg %p152
        $region30: #{tpu_custom_call.1} parent=11 // pred_check_branch
          %245 = sbr.rel (%p243) target = $region32
        $region31: #{tpu_custom_call.1} parent=11 // pred_region
          %s247 = ssub.s32 64, 64
          %248 = vsyncadd [#allocation12], %s247
          %s250 = sshll.u32 [#allocation11], 4
          %s251 = int_to_ptr.vmem [resolvable:$true] %s250
          %253 = dma.hbm_to_vmem [thread:$0]  %s5, 64, %s251, [#allocation12]
        $region32: #{tpu_custom_call.1} parent=11 // pred_fallthru
          _
      $region12: #{tpu_custom_call.1} parent=5 // pred_fallthru
        _
      %p254 = scmp.lt.s32.totalorder %s21, 2
      // Predicated region
      $region33: #{tpu_custom_call.1} parent=5 // pred_check
        %p255 = pneg %p254
      $region34: #{tpu_custom_call.1} parent=5 // pred_check_branch
        %257 = sbr.rel (%p255) target = $region36
      $region35: #{tpu_custom_call.1} parent=5 // pred_region
        // Predicated region
        $region37: #{tpu_custom_call.1} parent=35 // pred_check
          %p258 = pneg %p41
        $region38: #{tpu_custom_call.1} parent=35 // pred_check_branch
          %260 = sbr.rel (%p258) target = $region40
        $region39: #{tpu_custom_call.1} parent=35 // pred_region
          %s261 = sand.u32 %s31, 1
          %s262 = scalar_lea.sflag [#allocation3], %s261
          %s263 = sand.u32 %s31, 1
          %s264 = smul.addr %s263, 8
          %s265 = scalar_lea.vmem [#allocation2], %s264
          %s267 = ssub.s32 128, 128
          %268 = vsyncadd %s262, %s267
          %s269 = smul.addr %s21, 2
          %s270 = smul.addr %s269, 64
          %s271 = scalar_lea.hbm %s0, %s270
          %s273 = sshll.u32 %s265, 4
          %s274 = int_to_ptr.vmem [resolvable:$true] %s273
          %276 = dma.hbm_to_vmem [thread:$0]  %s271, 128, %s274, %s262
        $region40: #{tpu_custom_call.1} parent=35 // pred_fallthru
          _
      $region36: #{tpu_custom_call.1} parent=5 // pred_fallthru
        _
      %p277 = scmp.le.s32.totalorder 1, %s21
      %p278 = scmp.lt.s32.totalorder %s21, 3
      %p279 = pnand %p277, %p278
      %p280 = pneg %p279
      // Predicated region
      $region41: #{tpu_custom_call.1} parent=5 // pred_check
        _
      $region42: #{tpu_custom_call.1} parent=5 // pred_check_branch
        %282 = sbr.rel (%p279) target = $region44
      $region43: #{tpu_custom_call.1} parent=5 // pred_region
        %s283 = ssub.s32 %s21, 1
        %s284 = sand.u32 %s34, 1
        %s285 = scalar_lea.sflag [#allocation3], %s284
        %s286 = sand.u32 %s34, 1
        %s287 = smul.addr %s286, 8
        %s288 = scalar_lea.vmem [#allocation2], %s287
        // Predicated region
        $region45: #{tpu_custom_call.1} parent=43 // pred_check
          %p289 = pneg %p47
        $region46: #{tpu_custom_call.1} parent=43 // pred_check_branch
          %291 = sbr.rel (%p289) target = $region48
        $region47: #{tpu_custom_call.1} parent=43 // pred_region
          %292 = dma.done %s285, 128
        $region48: #{tpu_custom_call.1} parent=43 // pred_fallthru
          _
        // Predicated region
        $region49: #{tpu_custom_call.1} parent=43 // pred_check
          %p293 = pneg %p68
        $region50: #{tpu_custom_call.1} parent=43 // pred_check_branch
          %295 = sbr.rel (%p293) target = $region52
        $region51: #{tpu_custom_call.1} parent=43 // pred_region
          %296 = dma.done [#allocation6], 6144
        $region52: #{tpu_custom_call.1} parent=43 // pred_fallthru
          _
        // Predicated region
        $region53: #{tpu_custom_call.1} parent=43 // pred_check
          %p297 = pneg %p89
        $region54: #{tpu_custom_call.1} parent=43 // pred_check_branch
          %299 = sbr.rel (%p297) target = $region56
        $region55: #{tpu_custom_call.1} parent=43 // pred_region
          %300 = dma.done [#allocation6], 12288
        $region56: #{tpu_custom_call.1} parent=43 // pred_fallthru
          _
        // Predicated region
        $region57: #{tpu_custom_call.1} parent=43 // pred_check
          %p301 = pneg %p110
        $region58: #{tpu_custom_call.1} parent=43 // pred_check_branch
          %303 = sbr.rel (%p301) target = $region60
        $region59: #{tpu_custom_call.1} parent=43 // pred_region
          %304 = dma.done [#allocation9], 2048
        $region60: #{tpu_custom_call.1} parent=43 // pred_fallthru
          _
        // Predicated region
        $region61: #{tpu_custom_call.1} parent=43 // pred_check
          %p305 = pneg %p131
        $region62: #{tpu_custom_call.1} parent=43 // pred_check_branch
          %307 = sbr.rel (%p305) target = $region64
        $region63: #{tpu_custom_call.1} parent=43 // pred_region
          %308 = dma.done [#allocation9], 64
        $region64: #{tpu_custom_call.1} parent=43 // pred_fallthru
          _
        // Predicated region
        $region65: #{tpu_custom_call.1} parent=43 // pred_check
          %p309 = pneg %p152
        $region66: #{tpu_custom_call.1} parent=43 // pred_check_branch
          %311 = sbr.rel (%p309) target = $region68
        $region67: #{tpu_custom_call.1} parent=43 // pred_region
          %312 = dma.done [#allocation12], 64
        $region68: #{tpu_custom_call.1} parent=43 // pred_fallthru
          _
        %s313 = sand.u32 %s34, 1
        %s314 = scalar_lea.sflag [#allocation3], %s313
        %s315 = sand.u32 %s34, 1
        %s316 = smul.addr %s315, 8
        %s317 = scalar_lea.vmem [#allocation2], %s316
        %p318 = pneg %p47
        %p319 = pneg %p44
        %p320 = pneg %p68
        %p321 = pneg %p65
        %p322 = pneg %p89
        %p323 = pneg %p86
        %p324 = pneg %p110
        %p325 = pneg %p107
        %p326 = pneg %p131
        %p327 = pneg %p128
        %p328 = pneg %p152
        %p329 = pneg %p149
        %p330 = pneg %p178
        %p331 = pneg %p175
        %s332 = sand.u32 %s165, 1
        %s333 = scalar_lea.sflag [#allocation4], %s332
        %s334 = sand.u32 %s165, 1
        %s335 = smul.addr %s334, 8
        %s336 = scalar_lea.vmem [#allocation13], %s335
        %v338 = vld [vmem:[%s288] sm:$0xff]
        %v340 = vcombine.high %v338, %v338
        %v342 = vpack.c.bf16 %v338, %v338
        %v343 = vpack.c.bf16 %v340, %v340
        %v344 = vld [vmem:[#allocation5] sm:$0xf]
        %v345 = vld [vmem:[#allocation5 + $0x4] sm:$0xf]
        %v346 = vld [vmem:[#allocation5 + $0x8] sm:$0xf]
        %v347 = vld [vmem:[#allocation5 + $0xc] sm:$0xf]
        %v348 = vld [vmem:[#allocation5 + $0x10] sm:$0xf]
        %v349 = vld [vmem:[#allocation5 + $0x14] sm:$0xf]
        %v350 = vld [vmem:[#allocation5 + $0x18] sm:$0xf]
        %v351 = vld [vmem:[#allocation5 + $0x1c] sm:$0xf]
        %v352 = vld [vmem:[#allocation5 + $0x20] sm:$0xf]
        %v353 = vld [vmem:[#allocation5 + $0x24] sm:$0xf]
        %v354 = vld [vmem:[#allocation5 + $0x28] sm:$0xf]
        %v355 = vld [vmem:[#allocation5 + $0x2c] sm:$0xf]
        %v356 = vld [vmem:[#allocation5 + $0x30] sm:$0xf]
        %v357 = vld [vmem:[#allocation5 + $0x34] sm:$0xf]
        %v358 = vld [vmem:[#allocation5 + $0x38] sm:$0xf]
        %v359 = vld [vmem:[#allocation5 + $0x3c] sm:$0xf]
        %v360 = vld [vmem:[#allocation5 + $0x40] sm:$0xf]
        %v361 = vld [vmem:[#allocation5 + $0x44] sm:$0xf]
        %v362 = vld [vmem:[#allocation5 + $0x48] sm:$0xf]
        %v363 = vld [vmem:[#allocation5 + $0x4c] sm:$0xf]
        %v364 = vld [vmem:[#allocation5 + $0x50] sm:$0xf]
        %v365 = vld [vmem:[#allocation5 + $0x54] sm:$0xf]
        %v366 = vld [vmem:[#allocation5 + $0x58] sm:$0xf]
        %v367 = vld [vmem:[#allocation5 + $0x5c] sm:$0xf]
        %v368 = vld [vmem:[#allocation5 + $0x60] sm:$0xf]
        %v369 = vld [vmem:[#allocation5 + $0x64] sm:$0xf]
        %v370 = vld [vmem:[#allocation5 + $0x68] sm:$0xf]
        %v371 = vld [vmem:[#allocation5 + $0x6c] sm:$0xf]
        %v372 = vld [vmem:[#allocation5 + $0x70] sm:$0xf]
        %v373 = vld [vmem:[#allocation5 + $0x74] sm:$0xf]
        %v374 = vld [vmem:[#allocation5 + $0x78] sm:$0xf]
        %v375 = vld [vmem:[#allocation5 + $0x7c] sm:$0xf]
        %v376 = vld [vmem:[#allocation5 + $0x80] sm:$0xf]
        %v377 = vld [vmem:[#allocation5 + $0x84] sm:$0xf]
        %v378 = vld [vmem:[#allocation5 + $0x88] sm:$0xf]
        %v379 = vld [vmem:[#allocation5 + $0x8c] sm:$0xf]
        %v380 = vld [vmem:[#allocation5 + $0x90] sm:$0xf]
        %v381 = vld [vmem:[#allocation5 + $0x94] sm:$0xf]
        %v382 = vld [vmem:[#allocation5 + $0x98] sm:$0xf]
        %v383 = vld [vmem:[#allocation5 + $0x9c] sm:$0xf]
        %v384 = vld [vmem:[#allocation5 + $0xa0] sm:$0xf]
        %v385 = vld [vmem:[#allocation5 + $0xa4] sm:$0xf]
        %v386 = vld [vmem:[#allocation5 + $0xa8] sm:$0xf]
        %v387 = vld [vmem:[#allocation5 + $0xac] sm:$0xf]
        %v388 = vld [vmem:[#allocation5 + $0xb0] sm:$0xf]
        %v389 = vld [vmem:[#allocation5 + $0xb4] sm:$0xf]
        %v390 = vld [vmem:[#allocation5 + $0xb8] sm:$0xf]
        %v391 = vld [vmem:[#allocation5 + $0xbc] sm:$0xf]
        %v392 = vld [vmem:[#allocation5 + $0xc0] sm:$0xf]
        %v393 = vld [vmem:[#allocation5 + $0xc4] sm:$0xf]
        %v394 = vld [vmem:[#allocation5 + $0xc8] sm:$0xf]
        %v395 = vld [vmem:[#allocation5 + $0xcc] sm:$0xf]
        %v396 = vld [vmem:[#allocation5 + $0xd0] sm:$0xf]
        %v397 = vld [vmem:[#allocation5 + $0xd4] sm:$0xf]
        %v398 = vld [vmem:[#allocation5 + $0xd8] sm:$0xf]
        %v399 = vld [vmem:[#allocation5 + $0xdc] sm:$0xf]
        %v400 = vld [vmem:[#allocation5 + $0xe0] sm:$0xf]
        %v401 = vld [vmem:[#allocation5 + $0xe4] sm:$0xf]
        %v402 = vld [vmem:[#allocation5 + $0xe8] sm:$0xf]
        %v403 = vld [vmem:[#allocation5 + $0xec] sm:$0xf]
        %v404 = vld [vmem:[#allocation5 + $0xf0] sm:$0xf]
        %v405 = vld [vmem:[#allocation5 + $0xf4] sm:$0xf]
        %v406 = vld [vmem:[#allocation5 + $0xf8] sm:$0xf]
        %v407 = vld [vmem:[#allocation5 + $0xfc] sm:$0xf]
        %v408 = vld [vmem:[#allocation5 + $0x100] sm:$0xf]
        %v409 = vld [vmem:[#allocation5 + $0x104] sm:$0xf]
        %v410 = vld [vmem:[#allocation5 + $0x108] sm:$0xf]
        %v411 = vld [vmem:[#allocation5 + $0x10c] sm:$0xf]
        %v412 = vld [vmem:[#allocation5 + $0x110] sm:$0xf]
        %v413 = vld [vmem:[#allocation5 + $0x114] sm:$0xf]
        %v414 = vld [vmem:[#allocation5 + $0x118] sm:$0xf]
        %v415 = vld [vmem:[#allocation5 + $0x11c] sm:$0xf]
        %v416 = vld [vmem:[#allocation5 + $0x120] sm:$0xf]
        %v417 = vld [vmem:[#allocation5 + $0x124] sm:$0xf]
        %v418 = vld [vmem:[#allocation5 + $0x128] sm:$0xf]
        %v419 = vld [vmem:[#allocation5 + $0x12c] sm:$0xf]
        %v420 = vld [vmem:[#allocation5 + $0x130] sm:$0xf]
        %v421 = vld [vmem:[#allocation5 + $0x134] sm:$0xf]
        %v422 = vld [vmem:[#allocation5 + $0x138] sm:$0xf]
        %v423 = vld [vmem:[#allocation5 + $0x13c] sm:$0xf]
        %v424 = vld [vmem:[#allocation5 + $0x140] sm:$0xf]
        %v425 = vld [vmem:[#allocation5 + $0x144] sm:$0xf]
        %v426 = vld [vmem:[#allocation5 + $0x148] sm:$0xf]
        %v427 = vld [vmem:[#allocation5 + $0x14c] sm:$0xf]
        %v428 = vld [vmem:[#allocation5 + $0x150] sm:$0xf]
        %v429 = vld [vmem:[#allocation5 + $0x154] sm:$0xf]
        %v430 = vld [vmem:[#allocation5 + $0x158] sm:$0xf]
        %v431 = vld [vmem:[#allocation5 + $0x15c] sm:$0xf]
        %v432 = vld [vmem:[#allocation5 + $0x160] sm:$0xf]
        %v433 = vld [vmem:[#allocation5 + $0x164] sm:$0xf]
        %v434 = vld [vmem:[#allocation5 + $0x168] sm:$0xf]
        %v435 = vld [vmem:[#allocation5 + $0x16c] sm:$0xf]
        %v436 = vld [vmem:[#allocation5 + $0x170] sm:$0xf]
        %v437 = vld [vmem:[#allocation5 + $0x174] sm:$0xf]
        %v438 = vld [vmem:[#allocation5 + $0x178] sm:$0xf]
        %v439 = vld [vmem:[#allocation5 + $0x17c] sm:$0xf]
        %v440 = vld [vmem:[#allocation7] sm:$0xff]
        %v441 = vld [vmem:[#allocation7 + $0x8] sm:$0xff]
        %v442 = vld [vmem:[#allocation7 + $0x10] sm:$0xff]
        %v443 = vld [vmem:[#allocation7 + $0x18] sm:$0xff]
        %v444 = vld [vmem:[#allocation7 + $0x20] sm:$0xff]
        %v445 = vld [vmem:[#allocation7 + $0x28] sm:$0xff]
        %v446 = vld [vmem:[#allocation7 + $0x30] sm:$0xff]
        %v447 = vld [vmem:[#allocation7 + $0x38] sm:$0xff]
        %v448 = vld [vmem:[#allocation7 + $0x40] sm:$0xff]
        %v449 = vld [vmem:[#allocation7 + $0x48] sm:$0xff]
        %v450 = vld [vmem:[#allocation7 + $0x50] sm:$0xff]
        %v451 = vld [vmem:[#allocation7 + $0x58] sm:$0xff]
        %v452 = vld [vmem:[#allocation7 + $0x60] sm:$0xff]
        %v453 = vld [vmem:[#allocation7 + $0x68] sm:$0xff]
        %v454 = vld [vmem:[#allocation7 + $0x70] sm:$0xff]
        %v455 = vld [vmem:[#allocation7 + $0x78] sm:$0xff]
        %v456 = vld [vmem:[#allocation7 + $0x80] sm:$0xff]
        %v457 = vld [vmem:[#allocation7 + $0x88] sm:$0xff]
        %v458 = vld [vmem:[#allocation7 + $0x90] sm:$0xff]
        %v459 = vld [vmem:[#allocation7 + $0x98] sm:$0xff]
        %v460 = vld [vmem:[#allocation7 + $0xa0] sm:$0xff]
        %v461 = vld [vmem:[#allocation7 + $0xa8] sm:$0xff]
        %v462 = vld [vmem:[#allocation7 + $0xb0] sm:$0xff]
        %v463 = vld [vmem:[#allocation7 + $0xb8] sm:$0xff]
        %v464 = vld [vmem:[#allocation7 + $0xc0] sm:$0xff]
        %v465 = vld [vmem:[#allocation7 + $0xc8] sm:$0xff]
        %v466 = vld [vmem:[#allocation7 + $0xd0] sm:$0xff]
        %v467 = vld [vmem:[#allocation7 + $0xd8] sm:$0xff]
        %v468 = vld [vmem:[#allocation7 + $0xe0] sm:$0xff]
        %v469 = vld [vmem:[#allocation7 + $0xe8] sm:$0xff]
        %v470 = vld [vmem:[#allocation7 + $0xf0] sm:$0xff]
        %v471 = vld [vmem:[#allocation7 + $0xf8] sm:$0xff]
        %v472 = vld [vmem:[#allocation7 + $0x100] sm:$0xff]
        %v473 = vld [vmem:[#allocation7 + $0x108] sm:$0xff]
        %v474 = vld [vmem:[#allocation7 + $0x110] sm:$0xff]
        %v475 = vld [vmem:[#allocation7 + $0x118] sm:$0xff]
        %v476 = vld [vmem:[#allocation7 + $0x120] sm:$0xff]
        %v477 = vld [vmem:[#allocation7 + $0x128] sm:$0xff]
        %v478 = vld [vmem:[#allocation7 + $0x130] sm:$0xff]
        %v479 = vld [vmem:[#allocation7 + $0x138] sm:$0xff]
        %v480 = vld [vmem:[#allocation7 + $0x140] sm:$0xff]
        %v481 = vld [vmem:[#allocation7 + $0x148] sm:$0xff]
        %v482 = vld [vmem:[#allocation7 + $0x150] sm:$0xff]
        %v483 = vld [vmem:[#allocation7 + $0x158] sm:$0xff]
        %v484 = vld [vmem:[#allocation7 + $0x160] sm:$0xff]
        %v485 = vld [vmem:[#allocation7 + $0x168] sm:$0xff]
        %v486 = vld [vmem:[#allocation7 + $0x170] sm:$0xff]
        %v487 = vld [vmem:[#allocation7 + $0x178] sm:$0xff]
        %v488 = vld [vmem:[#allocation7 + $0x180] sm:$0xff]
        %v489 = vld [vmem:[#allocation7 + $0x188] sm:$0xff]
        %v490 = vld [vmem:[#allocation7 + $0x190] sm:$0xff]
        %v491 = vld [vmem:[#allocation7 + $0x198] sm:$0xff]
        %v492 = vld [vmem:[#allocation7 + $0x1a0] sm:$0xff]
        %v493 = vld [vmem:[#allocation7 + $0x1a8] sm:$0xff]
        %v494 = vld [vmem:[#allocation7 + $0x1b0] sm:$0xff]
        %v495 = vld [vmem:[#allocation7 + $0x1b8] sm:$0xff]
        %v496 = vld [vmem:[#allocation7 + $0x1c0] sm:$0xff]
        %v497 = vld [vmem:[#allocation7 + $0x1c8] sm:$0xff]
        %v498 = vld [vmem:[#allocation7 + $0x1d0] sm:$0xff]
        %v499 = vld [vmem:[#allocation7 + $0x1d8] sm:$0xff]
        %v500 = vld [vmem:[#allocation7 + $0x1e0] sm:$0xff]
        %v501 = vld [vmem:[#allocation7 + $0x1e8] sm:$0xff]
        %v502 = vld [vmem:[#allocation7 + $0x1f0] sm:$0xff]
        %v503 = vld [vmem:[#allocation7 + $0x1f8] sm:$0xff]
        %v504 = vld [vmem:[#allocation7 + $0x200] sm:$0xff]
        %v505 = vld [vmem:[#allocation7 + $0x208] sm:$0xff]
        %v506 = vld [vmem:[#allocation7 + $0x210] sm:$0xff]
        %v507 = vld [vmem:[#allocation7 + $0x218] sm:$0xff]
        %v508 = vld [vmem:[#allocation7 + $0x220] sm:$0xff]
        %v509 = vld [vmem:[#allocation7 + $0x228] sm:$0xff]
        %v510 = vld [vmem:[#allocation7 + $0x230] sm:$0xff]
        %v511 = vld [vmem:[#allocation7 + $0x238] sm:$0xff]
        %v512 = vld [vmem:[#allocation7 + $0x240] sm:$0xff]
        %v513 = vld [vmem:[#allocation7 + $0x248] sm:$0xff]
        %v514 = vld [vmem:[#allocation7 + $0x250] sm:$0xff]
        %v515 = vld [vmem:[#allocation7 + $0x258] sm:$0xff]
        %v516 = vld [vmem:[#allocation7 + $0x260] sm:$0xff]
        %v517 = vld [vmem:[#allocation7 + $0x268] sm:$0xff]
        %v518 = vld [vmem:[#allocation7 + $0x270] sm:$0xff]
        %v519 = vld [vmem:[#allocation7 + $0x278] sm:$0xff]
        %v520 = vld [vmem:[#allocation7 + $0x280] sm:$0xff]
        %v521 = vld [vmem:[#allocation7 + $0x288] sm:$0xff]
        %v522 = vld [vmem:[#allocation7 + $0x290] sm:$0xff]
        %v523 = vld [vmem:[#allocation7 + $0x298] sm:$0xff]
        %v524 = vld [vmem:[#allocation7 + $0x2a0] sm:$0xff]
        %v525 = vld [vmem:[#allocation7 + $0x2a8] sm:$0xff]
        %v526 = vld [vmem:[#allocation7 + $0x2b0] sm:$0xff]
        %v527 = vld [vmem:[#allocation7 + $0x2b8] sm:$0xff]
        %v528 = vld [vmem:[#allocation7 + $0x2c0] sm:$0xff]
        %v529 = vld [vmem:[#allocation7 + $0x2c8] sm:$0xff]
        %v530 = vld [vmem:[#allocation7 + $0x2d0] sm:$0xff]
        %v531 = vld [vmem:[#allocation7 + $0x2d8] sm:$0xff]
        %v532 = vld [vmem:[#allocation7 + $0x2e0] sm:$0xff]
        %v533 = vld [vmem:[#allocation7 + $0x2e8] sm:$0xff]
        %v534 = vld [vmem:[#allocation7 + $0x2f0] sm:$0xff]
        %v535 = vld [vmem:[#allocation7 + $0x2f8] sm:$0xff]
        %537 = vset.pattern.permute.xlu0 0
        %538 = vperm.xlu0 %537, %v440
        %v539 = vpop.permute.xlu0 %538
        %542 = vset.pattern.permute.xlu0 0
        %543 = vperm.xlu0 %542, %v441
        %v544 = vpop.permute.xlu0 %543
        %547 = vset.pattern.permute.xlu0 0
        %548 = vperm.xlu0 %547, %v442
        %v549 = vpop.permute.xlu0 %548
        %552 = vset.pattern.permute.xlu0 0
        %553 = vperm.xlu0 %552, %v443
        %v554 = vpop.permute.xlu0 %553
        %557 = vset.pattern.permute.xlu0 0
        %558 = vperm.xlu0 %557, %v444
        %v559 = vpop.permute.xlu0 %558
        %562 = vset.pattern.permute.xlu0 0
        %563 = vperm.xlu0 %562, %v445
        %v564 = vpop.permute.xlu0 %563
        %567 = vset.pattern.permute.xlu0 0
        %568 = vperm.xlu0 %567, %v446
        %v569 = vpop.permute.xlu0 %568
        %572 = vset.pattern.permute.xlu0 0
        %573 = vperm.xlu0 %572, %v447
        %v574 = vpop.permute.xlu0 %573
        %577 = vset.pattern.permute.xlu0 0
        %578 = vperm.xlu0 %577, %v448
        %v579 = vpop.permute.xlu0 %578
        %582 = vset.pattern.permute.xlu0 0
        %583 = vperm.xlu0 %582, %v449
        %v584 = vpop.permute.xlu0 %583
        %587 = vset.pattern.permute.xlu0 0
        %588 = vperm.xlu0 %587, %v450
        %v589 = vpop.permute.xlu0 %588
        %592 = vset.pattern.permute.xlu0 0
        %593 = vperm.xlu0 %592, %v451
        %v594 = vpop.permute.xlu0 %593
        %597 = vset.pattern.permute.xlu0 0
        %598 = vperm.xlu0 %597, %v452
        %v599 = vpop.permute.xlu0 %598
        %602 = vset.pattern.permute.xlu0 0
        %603 = vperm.xlu0 %602, %v453
        %v604 = vpop.permute.xlu0 %603
        %607 = vset.pattern.permute.xlu0 0
        %608 = vperm.xlu0 %607, %v454
        %v609 = vpop.permute.xlu0 %608
        %612 = vset.pattern.permute.xlu0 0
        %613 = vperm.xlu0 %612, %v455
        %v614 = vpop.permute.xlu0 %613
        %617 = vset.pattern.permute.xlu0 0
        %618 = vperm.xlu0 %617, %v456
        %v619 = vpop.permute.xlu0 %618
        %622 = vset.pattern.permute.xlu0 0
        %623 = vperm.xlu0 %622, %v457
        %v624 = vpop.permute.xlu0 %623
        %627 = vset.pattern.permute.xlu0 0
        %628 = vperm.xlu0 %627, %v458
        %v629 = vpop.permute.xlu0 %628
        %632 = vset.pattern.permute.xlu0 0
        %633 = vperm.xlu0 %632, %v459
        %v634 = vpop.permute.xlu0 %633
        %637 = vset.pattern.permute.xlu0 0
        %638 = vperm.xlu0 %637, %v460
        %v639 = vpop.permute.xlu0 %638
        %642 = vset.pattern.permute.xlu0 0
        %643 = vperm.xlu0 %642, %v461
        %v644 = vpop.permute.xlu0 %643
        %647 = vset.pattern.permute.xlu0 0
        %648 = vperm.xlu0 %647, %v462
        %v649 = vpop.permute.xlu0 %648
        %652 = vset.pattern.permute.xlu0 0
        %653 = vperm.xlu0 %652, %v463
        %v654 = vpop.permute.xlu0 %653
        %657 = vset.pattern.permute.xlu0 0
        %658 = vperm.xlu0 %657, %v464
        %v659 = vpop.permute.xlu0 %658
        %662 = vset.pattern.permute.xlu0 0
        %663 = vperm.xlu0 %662, %v465
        %v664 = vpop.permute.xlu0 %663
        %667 = vset.pattern.permute.xlu0 0
        %668 = vperm.xlu0 %667, %v466
        %v669 = vpop.permute.xlu0 %668
        %672 = vset.pattern.permute.xlu0 0
        %673 = vperm.xlu0 %672, %v467
        %v674 = vpop.permute.xlu0 %673
        %677 = vset.pattern.permute.xlu0 0
        %678 = vperm.xlu0 %677, %v468
        %v679 = vpop.permute.xlu0 %678
        %682 = vset.pattern.permute.xlu0 0
        %683 = vperm.xlu0 %682, %v469
        %v684 = vpop.permute.xlu0 %683
        %687 = vset.pattern.permute.xlu0 0
        %688 = vperm.xlu0 %687, %v470
        %v689 = vpop.permute.xlu0 %688
        %692 = vset.pattern.permute.xlu0 0
        %693 = vperm.xlu0 %692, %v471
        %v694 = vpop.permute.xlu0 %693
        %697 = vset.pattern.permute.xlu0 0
        %698 = vperm.xlu0 %697, %v472
        %v699 = vpop.permute.xlu0 %698
        %702 = vset.pattern.permute.xlu0 0
        %703 = vperm.xlu0 %702, %v473
        %v704 = vpop.permute.xlu0 %703
        %707 = vset.pattern.permute.xlu0 0
        %708 = vperm.xlu0 %707, %v474
        %v709 = vpop.permute.xlu0 %708
        %712 = vset.pattern.permute.xlu0 0
        %713 = vperm.xlu0 %712, %v475
        %v714 = vpop.permute.xlu0 %713
        %717 = vset.pattern.permute.xlu0 0
        %718 = vperm.xlu0 %717, %v476
        %v719 = vpop.permute.xlu0 %718
        %722 = vset.pattern.permute.xlu0 0
        %723 = vperm.xlu0 %722, %v477
        %v724 = vpop.permute.xlu0 %723
        %727 = vset.pattern.permute.xlu0 0
        %728 = vperm.xlu0 %727, %v478
        %v729 = vpop.permute.xlu0 %728
        %732 = vset.pattern.permute.xlu0 0
        %733 = vperm.xlu0 %732, %v479
        %v734 = vpop.permute.xlu0 %733
        %737 = vset.pattern.permute.xlu0 0
        %738 = vperm.xlu0 %737, %v480
        %v739 = vpop.permute.xlu0 %738
        %742 = vset.pattern.permute.xlu0 0
        %743 = vperm.xlu0 %742, %v481
        %v744 = vpop.permute.xlu0 %743
        %747 = vset.pattern.permute.xlu0 0
        %748 = vperm.xlu0 %747, %v482
        %v749 = vpop.permute.xlu0 %748
        %752 = vset.pattern.permute.xlu0 0
        %753 = vperm.xlu0 %752, %v483
        %v754 = vpop.permute.xlu0 %753
        %757 = vset.pattern.permute.xlu0 0
        %758 = vperm.xlu0 %757, %v484
        %v759 = vpop.permute.xlu0 %758
        %762 = vset.pattern.permute.xlu0 0
        %763 = vperm.xlu0 %762, %v485
        %v764 = vpop.permute.xlu0 %763
        %767 = vset.pattern.permute.xlu0 0
        %768 = vperm.xlu0 %767, %v486
        %v769 = vpop.permute.xlu0 %768
        %772 = vset.pattern.permute.xlu0 0
        %773 = vperm.xlu0 %772, %v487
        %v774 = vpop.permute.xlu0 %773
        %777 = vset.pattern.permute.xlu0 0
        %778 = vperm.xlu0 %777, %v488
        %v779 = vpop.permute.xlu0 %778
        %782 = vset.pattern.permute.xlu0 0
        %783 = vperm.xlu0 %782, %v489
        %v784 = vpop.permute.xlu0 %783
        %787 = vset.pattern.permute.xlu0 0
        %788 = vperm.xlu0 %787, %v490
        %v789 = vpop.permute.xlu0 %788
        %792 = vset.pattern.permute.xlu0 0
        %793 = vperm.xlu0 %792, %v491
        %v794 = vpop.permute.xlu0 %793
        %797 = vset.pattern.permute.xlu0 0
        %798 = vperm.xlu0 %797, %v492
        %v799 = vpop.permute.xlu0 %798
        %802 = vset.pattern.permute.xlu0 0
        %803 = vperm.xlu0 %802, %v493
        %v804 = vpop.permute.xlu0 %803
        %807 = vset.pattern.permute.xlu0 0
        %808 = vperm.xlu0 %807, %v494
        %v809 = vpop.permute.xlu0 %808
        %812 = vset.pattern.permute.xlu0 0
        %813 = vperm.xlu0 %812, %v495
        %v814 = vpop.permute.xlu0 %813
        %817 = vset.pattern.permute.xlu0 0
        %818 = vperm.xlu0 %817, %v496
        %v819 = vpop.permute.xlu0 %818
        %822 = vset.pattern.permute.xlu0 0
        %823 = vperm.xlu0 %822, %v497
        %v824 = vpop.permute.xlu0 %823
        %827 = vset.pattern.permute.xlu0 0
        %828 = vperm.xlu0 %827, %v498
        %v829 = vpop.permute.xlu0 %828
        %832 = vset.pattern.permute.xlu0 0
        %833 = vperm.xlu0 %832, %v499
        %v834 = vpop.permute.xlu0 %833
        %837 = vset.pattern.permute.xlu0 0
        %838 = vperm.xlu0 %837, %v500
        %v839 = vpop.permute.xlu0 %838
        %842 = vset.pattern.permute.xlu0 0
        %843 = vperm.xlu0 %842, %v501
        %v844 = vpop.permute.xlu0 %843
        %847 = vset.pattern.permute.xlu0 0
        %848 = vperm.xlu0 %847, %v502
        %v849 = vpop.permute.xlu0 %848
        %852 = vset.pattern.permute.xlu0 0
        %853 = vperm.xlu0 %852, %v503
        %v854 = vpop.permute.xlu0 %853
        %857 = vset.pattern.permute.xlu0 0
        %858 = vperm.xlu0 %857, %v504
        %v859 = vpop.permute.xlu0 %858
        %862 = vset.pattern.permute.xlu0 0
        %863 = vperm.xlu0 %862, %v505
        %v864 = vpop.permute.xlu0 %863
        %867 = vset.pattern.permute.xlu0 0
        %868 = vperm.xlu0 %867, %v506
        %v869 = vpop.permute.xlu0 %868
        %872 = vset.pattern.permute.xlu0 0
        %873 = vperm.xlu0 %872, %v507
        %v874 = vpop.permute.xlu0 %873
        %877 = vset.pattern.permute.xlu0 0
        %878 = vperm.xlu0 %877, %v508
        %v879 = vpop.permute.xlu0 %878
        %882 = vset.pattern.permute.xlu0 0
        %883 = vperm.xlu0 %882, %v509
        %v884 = vpop.permute.xlu0 %883
        %887 = vset.pattern.permute.xlu0 0
        %888 = vperm.xlu0 %887, %v510
        %v889 = vpop.permute.xlu0 %888
        %892 = vset.pattern.permute.xlu0 0
        %893 = vperm.xlu0 %892, %v511
        %v894 = vpop.permute.xlu0 %893
        %897 = vset.pattern.permute.xlu0 0
        %898 = vperm.xlu0 %897, %v512
        %v899 = vpop.permute.xlu0 %898
        %902 = vset.pattern.permute.xlu0 0
        %903 = vperm.xlu0 %902, %v513
        %v904 = vpop.permute.xlu0 %903
        %907 = vset.pattern.permute.xlu0 0
        %908 = vperm.xlu0 %907, %v514
        %v909 = vpop.permute.xlu0 %908
        %912 = vset.pattern.permute.xlu0 0
        %913 = vperm.xlu0 %912, %v515
        %v914 = vpop.permute.xlu0 %913
        %917 = vset.pattern.permute.xlu0 0
        %918 = vperm.xlu0 %917, %v516
        %v919 = vpop.permute.xlu0 %918
        %922 = vset.pattern.permute.xlu0 0
        %923 = vperm.xlu0 %922, %v517
        %v924 = vpop.permute.xlu0 %923
        %927 = vset.pattern.permute.xlu0 0
        %928 = vperm.xlu0 %927, %v518
        %v929 = vpop.permute.xlu0 %928
        %932 = vset.pattern.permute.xlu0 0
        %933 = vperm.xlu0 %932, %v519
        %v934 = vpop.permute.xlu0 %933
        %937 = vset.pattern.permute.xlu0 0
        %938 = vperm.xlu0 %937, %v520
        %v939 = vpop.permute.xlu0 %938
        %942 = vset.pattern.permute.xlu0 0
        %943 = vperm.xlu0 %942, %v521
        %v944 = vpop.permute.xlu0 %943
        %947 = vset.pattern.permute.xlu0 0
        %948 = vperm.xlu0 %947, %v522
        %v949 = vpop.permute.xlu0 %948
        %952 = vset.pattern.permute.xlu0 0
        %953 = vperm.xlu0 %952, %v523
        %v954 = vpop.permute.xlu0 %953
        %957 = vset.pattern.permute.xlu0 0
        %958 = vperm.xlu0 %957, %v524
        %v959 = vpop.permute.xlu0 %958
        %962 = vset.pattern.permute.xlu0 0
        %963 = vperm.xlu0 %962, %v525
        %v964 = vpop.permute.xlu0 %963
        %967 = vset.pattern.permute.xlu0 0
        %968 = vperm.xlu0 %967, %v526
        %v969 = vpop.permute.xlu0 %968
        %972 = vset.pattern.permute.xlu0 0
        %973 = vperm.xlu0 %972, %v527
        %v974 = vpop.permute.xlu0 %973
        %977 = vset.pattern.permute.xlu0 0
        %978 = vperm.xlu0 %977, %v528
        %v979 = vpop.permute.xlu0 %978
        %982 = vset.pattern.permute.xlu0 0
        %983 = vperm.xlu0 %982, %v529
        %v984 = vpop.permute.xlu0 %983
        %987 = vset.pattern.permute.xlu0 0
        %988 = vperm.xlu0 %987, %v530
        %v989 = vpop.permute.xlu0 %988
        %992 = vset.pattern.permute.xlu0 0
        %993 = vperm.xlu0 %992, %v531
        %v994 = vpop.permute.xlu0 %993
        %997 = vset.pattern.permute.xlu0 0
        %998 = vperm.xlu0 %997, %v532
        %v999 = vpop.permute.xlu0 %998
        %1002 = vset.pattern.permute.xlu0 0
        %1003 = vperm.xlu0 %1002, %v533
        %v1004 = vpop.permute.xlu0 %1003
        %1007 = vset.pattern.permute.xlu0 0
        %1008 = vperm.xlu0 %1007, %v534
        %v1009 = vpop.permute.xlu0 %1008
        %1012 = vset.pattern.permute.xlu0 0
        %1013 = vperm.xlu0 %1012, %v535
        %v1014 = vpop.permute.xlu0 %1013
        %v1112 = vunpack.c.l.b16 %v344
        %v1113 = vunpack.c.l.b16 %v345
        %v1114 = vunpack.c.l.b16 %v346
        %v1115 = vunpack.c.l.b16 %v347
        %v1116 = vunpack.c.l.b16 %v348
        %v1117 = vunpack.c.l.b16 %v349
        %v1118 = vunpack.c.l.b16 %v350
        %v1119 = vunpack.c.l.b16 %v351
        %v1120 = vunpack.c.l.b16 %v352
        %v1121 = vunpack.c.l.b16 %v353
        %v1122 = vunpack.c.l.b16 %v354
        %v1123 = vunpack.c.l.b16 %v355
        %v1124 = vunpack.c.l.b16 %v356
        %v1125 = vunpack.c.l.b16 %v357
        %v1126 = vunpack.c.l.b16 %v358
        %v1127 = vunpack.c.l.b16 %v359
        %v1128 = vunpack.c.l.b16 %v360
        %v1129 = vunpack.c.l.b16 %v361
        %v1130 = vunpack.c.l.b16 %v362
        %v1131 = vunpack.c.l.b16 %v363
        %v1132 = vunpack.c.l.b16 %v364
        %v1133 = vunpack.c.l.b16 %v365
        %v1134 = vunpack.c.l.b16 %v366
        %v1135 = vunpack.c.l.b16 %v367
        %v1136 = vunpack.c.l.b16 %v368
        %v1137 = vunpack.c.l.b16 %v369
        %v1138 = vunpack.c.l.b16 %v370
        %v1139 = vunpack.c.l.b16 %v371
        %v1140 = vunpack.c.l.b16 %v372
        %v1141 = vunpack.c.l.b16 %v373
        %v1142 = vunpack.c.l.b16 %v374
        %v1143 = vunpack.c.l.b16 %v375
        %v1144 = vunpack.c.l.b16 %v376
        %v1145 = vunpack.c.l.b16 %v377
        %v1146 = vunpack.c.l.b16 %v378
        %v1147 = vunpack.c.l.b16 %v379
        %v1148 = vunpack.c.l.b16 %v380
        %v1149 = vunpack.c.l.b16 %v381
        %v1150 = vunpack.c.l.b16 %v382
        %v1151 = vunpack.c.l.b16 %v383
        %v1152 = vunpack.c.l.b16 %v384
        %v1153 = vunpack.c.l.b16 %v385
        %v1154 = vunpack.c.l.b16 %v386
        %v1155 = vunpack.c.l.b16 %v387
        %v1156 = vunpack.c.l.b16 %v388
        %v1157 = vunpack.c.l.b16 %v389
        %v1158 = vunpack.c.l.b16 %v390
        %v1159 = vunpack.c.l.b16 %v391
        %v1160 = vunpack.c.l.b16 %v392
        %v1161 = vunpack.c.l.b16 %v393
        %v1162 = vunpack.c.l.b16 %v394
        %v1163 = vunpack.c.l.b16 %v395
        %v1164 = vunpack.c.l.b16 %v396
        %v1165 = vunpack.c.l.b16 %v397
        %v1166 = vunpack.c.l.b16 %v398
        %v1167 = vunpack.c.l.b16 %v399
        %v1168 = vunpack.c.l.b16 %v400
        %v1169 = vunpack.c.l.b16 %v401
        %v1170 = vunpack.c.l.b16 %v402
        %v1171 = vunpack.c.l.b16 %v403
        %v1172 = vunpack.c.l.b16 %v404
        %v1173 = vunpack.c.l.b16 %v405
        %v1174 = vunpack.c.l.b16 %v406
        %v1175 = vunpack.c.l.b16 %v407
        %v1176 = vunpack.c.l.b16 %v408
        %v1177 = vunpack.c.l.b16 %v409
        %v1178 = vunpack.c.l.b16 %v410
        %v1179 = vunpack.c.l.b16 %v411
        %v1180 = vunpack.c.l.b16 %v412
        %v1181 = vunpack.c.l.b16 %v413
        %v1182 = vunpack.c.l.b16 %v414
        %v1183 = vunpack.c.l.b16 %v415
        %v1184 = vunpack.c.l.b16 %v416
        %v1185 = vunpack.c.l.b16 %v417
        %v1186 = vunpack.c.l.b16 %v418
        %v1187 = vunpack.c.l.b16 %v419
        %v1188 = vunpack.c.l.b16 %v420
        %v1189 = vunpack.c.l.b16 %v421
        %v1190 = vunpack.c.l.b16 %v422
        %v1191 = vunpack.c.l.b16 %v423
        %v1192 = vunpack.c.l.b16 %v424
        %v1193 = vunpack.c.l.b16 %v425
        %v1194 = vunpack.c.l.b16 %v426
        %v1195 = vunpack.c.l.b16 %v427
        %v1196 = vunpack.c.l.b16 %v428
        %v1197 = vunpack.c.l.b16 %v429
        %v1198 = vunpack.c.l.b16 %v430
        %v1199 = vunpack.c.l.b16 %v431
        %v1200 = vunpack.c.l.b16 %v432
        %v1201 = vunpack.c.l.b16 %v433
        %v1202 = vunpack.c.l.b16 %v434
        %v1203 = vunpack.c.l.b16 %v435
        %v1204 = vunpack.c.l.b16 %v436
        %v1205 = vunpack.c.l.b16 %v437
        %v1206 = vunpack.c.l.b16 %v438
        %v1207 = vunpack.c.l.b16 %v439
        %v1208 = vpack.c.b16 %v1113, %v1112
        %v1209 = vpack.c.b16 %v1115, %v1114
        %v1210 = vpack.c.b16 %v1117, %v1116
        %v1211 = vpack.c.b16 %v1119, %v1118
        %v1212 = vpack.c.b16 %v1121, %v1120
        %v1213 = vpack.c.b16 %v1123, %v1122
        %v1214 = vpack.c.b16 %v1125, %v1124
        %v1215 = vpack.c.b16 %v1127, %v1126
        %v1216 = vpack.c.b16 %v1129, %v1128
        %v1217 = vpack.c.b16 %v1131, %v1130
        %v1218 = vpack.c.b16 %v1133, %v1132
        %v1219 = vpack.c.b16 %v1135, %v1134
        %v1220 = vpack.c.b16 %v1137, %v1136
        %v1221 = vpack.c.b16 %v1139, %v1138
        %v1222 = vpack.c.b16 %v1141, %v1140
        %v1223 = vpack.c.b16 %v1143, %v1142
        %v1224 = vpack.c.b16 %v1145, %v1144
        %v1225 = vpack.c.b16 %v1147, %v1146
        %v1226 = vpack.c.b16 %v1149, %v1148
        %v1227 = vpack.c.b16 %v1151, %v1150
        %v1228 = vpack.c.b16 %v1153, %v1152
        %v1229 = vpack.c.b16 %v1155, %v1154
        %v1230 = vpack.c.b16 %v1157, %v1156
        %v1231 = vpack.c.b16 %v1159, %v1158
        %v1232 = vpack.c.b16 %v1161, %v1160
        %v1233 = vpack.c.b16 %v1163, %v1162
        %v1234 = vpack.c.b16 %v1165, %v1164
        %v1235 = vpack.c.b16 %v1167, %v1166
        %v1236 = vpack.c.b16 %v1169, %v1168
        %v1237 = vpack.c.b16 %v1171, %v1170
        %v1238 = vpack.c.b16 %v1173, %v1172
        %v1239 = vpack.c.b16 %v1175, %v1174
        %v1240 = vpack.c.b16 %v1177, %v1176
        %v1241 = vpack.c.b16 %v1179, %v1178
        %v1242 = vpack.c.b16 %v1181, %v1180
        %v1243 = vpack.c.b16 %v1183, %v1182
        %v1244 = vpack.c.b16 %v1185, %v1184
        %v1245 = vpack.c.b16 %v1187, %v1186
        %v1246 = vpack.c.b16 %v1189, %v1188
        %v1247 = vpack.c.b16 %v1191, %v1190
        %v1248 = vpack.c.b16 %v1193, %v1192
        %v1249 = vpack.c.b16 %v1195, %v1194
        %v1250 = vpack.c.b16 %v1197, %v1196
        %v1251 = vpack.c.b16 %v1199, %v1198
        %v1252 = vpack.c.b16 %v1201, %v1200
        %v1253 = vpack.c.b16 %v1203, %v1202
        %v1254 = vpack.c.b16 %v1205, %v1204
        %v1255 = vpack.c.b16 %v1207, %v1206
        %vm1256 = vcmask 31744
        %v1258 = vsel %vm1256, %v1208, 0
        %v1261 = vsel %vm1256, %v1209, 0
        %v1264 = vsel %vm1256, %v1210, 0
        %v1267 = vsel %vm1256, %v1211, 0
        %v1270 = vsel %vm1256, %v1212, 0
        %v1273 = vsel %vm1256, %v1213, 0
        %v1276 = vsel %vm1256, %v1214, 0
        %v1279 = vsel %vm1256, %v1215, 0
        %v1282 = vsel %vm1256, %v1216, 0
        %v1285 = vsel %vm1256, %v1217, 0
        %v1288 = vsel %vm1256, %v1218, 0
        %v1291 = vsel %vm1256, %v1219, 0
        %v1294 = vsel %vm1256, %v1220, 0
        %v1297 = vsel %vm1256, %v1221, 0
        %v1300 = vsel %vm1256, %v1222, 0
        %v1303 = vsel %vm1256, %v1223, 0
        %v1306 = vsel %vm1256, %v1224, 0
        %v1309 = vsel %vm1256, %v1225, 0
        %v1312 = vsel %vm1256, %v1226, 0
        %v1315 = vsel %vm1256, %v1227, 0
        %v1318 = vsel %vm1256, %v1228, 0
        %v1321 = vsel %vm1256, %v1229, 0
        %v1324 = vsel %vm1256, %v1230, 0
        %v1327 = vsel %vm1256, %v1231, 0
        %v1330 = vsel %vm1256, %v1232, 0
        %v1333 = vsel %vm1256, %v1233, 0
        %v1336 = vsel %vm1256, %v1234, 0
        %v1339 = vsel %vm1256, %v1235, 0
        %v1342 = vsel %vm1256, %v1236, 0
        %v1345 = vsel %vm1256, %v1237, 0
        %v1348 = vsel %vm1256, %v1238, 0
        %v1351 = vsel %vm1256, %v1239, 0
        %v1354 = vsel %vm1256, %v1240, 0
        %v1357 = vsel %vm1256, %v1241, 0
        %v1360 = vsel %vm1256, %v1242, 0
        %v1363 = vsel %vm1256, %v1243, 0
        %v1366 = vsel %vm1256, %v1244, 0
        %v1369 = vsel %vm1256, %v1245, 0
        %v1372 = vsel %vm1256, %v1246, 0
        %v1375 = vsel %vm1256, %v1247, 0
        %v1378 = vsel %vm1256, %v1248, 0
        %v1381 = vsel %vm1256, %v1249, 0
        %v1384 = vsel %vm1256, %v1250, 0
        %v1387 = vsel %vm1256, %v1251, 0
        %v1390 = vsel %vm1256, %v1252, 0
        %v1393 = vsel %vm1256, %v1253, 0
        %v1396 = vsel %vm1256, %v1254, 0
        %v1399 = vsel %vm1256, %v1255, 0
        %vm1401 = vcmask 1041408
        %v1403 = vsel %vm1401, %v342, 0
        %v1406 = vsel %vm1401, %v343, 0
        %1408 = vmatprep.subr.bf16.mxu0 %v1406
        %1409 = vmatpush1.bf16.msra.mxu0 %v1403
        %1410 = vmatprep.subr.bf16.mxu0 0
        %1411 = vmatpush1.bf16.msra.mxu0 0
        %1412 = vmatprep.subr.bf16.mxu0 0
        %1413 = vmatpush1.bf16.msra.mxu0 0
        %1414 = vmatprep.subr.bf16.mxu0 0
        %1415 = vmatpush1.bf16.msra.mxu0 0
        %1416 = vmatprep.subr.bf16.mxu0 0
        %1417 = vmatpush1.bf16.msra.mxu0 0
        %1418 = vmatprep.subr.bf16.mxu0 0
        %1419 = vmatpush1.bf16.msra.mxu0 0
        %1420 = vmatprep.subr.bf16.mxu0 0
        %1421 = vmatpush1.bf16.msra.mxu0 0
        %1422 = vmatprep.subr.bf16.mxu0 0
        %1423 = vmatpush1.bf16.msra.mxu0 0
        %1424 = vmatprep.subr.bf16.mxu0 0
        %1425 = vmatpush1.bf16.msra.mxu0 0
        %1426 = vmatprep.subr.bf16.mxu0 0
        %1427 = vmatpush1.bf16.msra.mxu0 0
        %1428 = vmatprep.subr.bf16.mxu0 0
        %1429 = vmatpush1.bf16.msra.mxu0 0
        %1430 = vmatprep.subr.bf16.mxu0 0
        %1431 = vmatpush1.bf16.msra.mxu0 0
        %1432 = vmatprep.subr.bf16.mxu0 0
        %1433 = vmatpush1.bf16.msra.mxu0 0
        %1434 = vmatprep.subr.bf16.mxu0 0
        %1435 = vmatpush1.bf16.msra.mxu0 0
        %1436 = vmatprep.subr.bf16.mxu0 0
        %1437 = vmatpush1.bf16.msra.mxu0 0
        %1438 = vmatprep.subr.bf16.mxu0 0
        %1439 = vmatpush1.bf16.msra.mxu0 0
        %1440 = vmatprep.mubr.bf16.mxu0 0
        %1441 = vmatmul.mubr.bf16.gmra.mrb[0].mxu0 %v1258
        %v1442 = vpop.f32.mrb[0].mxu0
        %v1443 = vadd.f32 %v539, %v1442
        %v1444 = vpop.f32.mrb[0].mxu0
        %v1445 = vadd.f32 %v539, %v1444
        %v1446 = vpop.f32.mrb[0].mxu0
        %v1447 = vadd.f32 %v544, %v1446
        %v1448 = vpop.f32.mrb[0].mxu0
        %v1449 = vadd.f32 %v544, %v1448
        %1450 = vmatprep.mubr.bf16.mxu0 0
        %1451 = vmatmul.mubr.bf16.gmra.mrb[0].mxu0 %v1261
        %v1452 = vpop.f32.mrb[0].mxu0
        %v1453 = vadd.f32 %v549, %v1452
        %v1454 = vpop.f32.mrb[0].mxu0
        %v1455 = vadd.f32 %v549, %v1454
        %v1456 = vpop.f32.mrb[0].mxu0
        %v1457 = vadd.f32 %v554, %v1456
        %v1458 = vpop.f32.mrb[0].mxu0
        %v1459 = vadd.f32 %v554, %v1458
        %1460 = vmatprep.mubr.bf16.mxu0 0
        %1461 = vmatmul.mubr.bf16.gmra.mrb[0].mxu0 %v1264
        %v1462 = vpop.f32.mrb[0].mxu0
        %v1463 = vadd.f32 %v559, %v1462
        %v1464 = vpop.f32.mrb[0].mxu0
        %v1465 = vadd.f32 %v559, %v1464
        %v1466 = vpop.f32.mrb[0].mxu0
        %v1467 = vadd.f32 %v564, %v1466
        %v1468 = vpop.f32.mrb[0].mxu0
        %v1469 = vadd.f32 %v564, %v1468
        %1470 = vmatprep.mubr.bf16.mxu0 0
        %1471 = vmatmul.mubr.bf16.gmra.mrb[0].mxu0 %v1267
        %v1472 = vpop.f32.mrb[0].mxu0
        %v1473 = vadd.f32 %v569, %v1472
        %v1474 = vpop.f32.mrb[0].mxu0
        %v1475 = vadd.f32 %v569, %v1474
        %v1476 = vpop.f32.mrb[0].mxu0
        %v1477 = vadd.f32 %v574, %v1476
        %v1478 = vpop.f32.mrb[0].mxu0
        %v1479 = vadd.f32 %v574, %v1478
        %1480 = vmatprep.mubr.bf16.mxu0 0
        %1481 = vmatmul.mubr.bf16.gmra.mrb[0].mxu0 %v1270
        %v1482 = vpop.f32.mrb[0].mxu0
        %v1483 = vadd.f32 %v579, %v1482
        %v1484 = vpop.f32.mrb[0].mxu0
        %v1485 = vadd.f32 %v579, %v1484
        %v1486 = vpop.f32.mrb[0].mxu0
        %v1487 = vadd.f32 %v584, %v1486
        %v1488 = vpop.f32.mrb[0].mxu0
        %v1489 = vadd.f32 %v584, %v1488
        %1490 = vmatprep.mubr.bf16.mxu0 0
        %1491 = vmatmul.mubr.bf16.gmra.mrb[0].mxu0 %v1273
        %v1492 = vpop.f32.mrb[0].mxu0
        %v1493 = vadd.f32 %v589, %v1492
        %v1494 = vpop.f32.mrb[0].mxu0
        %v1495 = vadd.f32 %v589, %v1494
        %v1496 = vpop.f32.mrb[0].mxu0
        %v1497 = vadd.f32 %v594, %v1496
        %v1498 = vpop.f32.mrb[0].mxu0
        %v1499 = vadd.f32 %v594, %v1498
        %1500 = vmatprep.mubr.bf16.mxu0 0
        %1501 = vmatmul.mubr.bf16.gmra.mrb[0].mxu0 %v1276
        %v1502 = vpop.f32.mrb[0].mxu0
        %v1503 = vadd.f32 %v599, %v1502
        %v1504 = vpop.f32.mrb[0].mxu0
        %v1505 = vadd.f32 %v599, %v1504
        %v1506 = vpop.f32.mrb[0].mxu0
        %v1507 = vadd.f32 %v604, %v1506
        %v1508 = vpop.f32.mrb[0].mxu0
        %v1509 = vadd.f32 %v604, %v1508
        %1510 = vmatprep.mubr.bf16.mxu0 0
        %1511 = vmatmul.mubr.bf16.gmra.mrb[0].mxu0 %v1279
        %v1512 = vpop.f32.mrb[0].mxu0
        %v1513 = vadd.f32 %v609, %v1512
        %v1514 = vpop.f32.mrb[0].mxu0
        %v1515 = vadd.f32 %v609, %v1514
        %v1516 = vpop.f32.mrb[0].mxu0
        %v1517 = vadd.f32 %v614, %v1516
        %v1518 = vpop.f32.mrb[0].mxu0
        %v1519 = vadd.f32 %v614, %v1518
        %1520 = vmatprep.mubr.bf16.mxu0 0
        %1521 = vmatmul.mubr.bf16.gmra.mrb[0].mxu0 %v1282
        %v1522 = vpop.f32.mrb[0].mxu0
        %v1523 = vadd.f32 %v619, %v1522
        %v1524 = vpop.f32.mrb[0].mxu0
        %v1525 = vadd.f32 %v619, %v1524
        %v1526 = vpop.f32.mrb[0].mxu0
        %v1527 = vadd.f32 %v624, %v1526
        %v1528 = vpop.f32.mrb[0].mxu0
        %v1529 = vadd.f32 %v624, %v1528
        %1530 = vmatprep.mubr.bf16.mxu0 0
        %1531 = vmatmul.mubr.bf16.gmra.mrb[0].mxu0 %v1285
        %v1532 = vpop.f32.mrb[0].mxu0
        %v1533 = vadd.f32 %v629, %v1532
        %v1534 = vpop.f32.mrb[0].mxu0
        %v1535 = vadd.f32 %v629, %v1534
        %v1536 = vpop.f32.mrb[0].mxu0
        %v1537 = vadd.f32 %v634, %v1536
        %v1538 = vpop.f32.mrb[0].mxu0
        %v1539 = vadd.f32 %v634, %v1538
        %1540 = vmatprep.mubr.bf16.mxu0 0
        %1541 = vmatmul.mubr.bf16.gmra.mrb[0].mxu0 %v1288
        %v1542 = vpop.f32.mrb[0].mxu0
        %v1543 = vadd.f32 %v639, %v1542
        %v1544 = vpop.f32.mrb[0].mxu0
        %v1545 = vadd.f32 %v639, %v1544
        %v1546 = vpop.f32.mrb[0].mxu0
        %v1547 = vadd.f32 %v644, %v1546
        %v1548 = vpop.f32.mrb[0].mxu0
        %v1549 = vadd.f32 %v644, %v1548
        %1550 = vmatprep.mubr.bf16.mxu0 0
        %1551 = vmatmul.mubr.bf16.gmra.mrb[0].mxu0 %v1291
        %v1552 = vpop.f32.mrb[0].mxu0
        %v1553 = vadd.f32 %v649, %v1552
        %v1554 = vpop.f32.mrb[0].mxu0
        %v1555 = vadd.f32 %v649, %v1554
        %v1556 = vpop.f32.mrb[0].mxu0
        %v1557 = vadd.f32 %v654, %v1556
        %v1558 = vpop.f32.mrb[0].mxu0
        %v1559 = vadd.f32 %v654, %v1558
        %1560 = vmatprep.mubr.bf16.mxu0 0
        %1561 = vmatmul.mubr.bf16.gmra.mrb[0].mxu0 %v1294
        %v1562 = vpop.f32.mrb[0].mxu0
        %v1563 = vadd.f32 %v659, %v1562
        %v1564 = vpop.f32.mrb[0].mxu0
        %v1565 = vadd.f32 %v659, %v1564
        %v1566 = vpop.f32.mrb[0].mxu0
        %v1567 = vadd.f32 %v664, %v1566
        %v1568 = vpop.f32.mrb[0].mxu0
        %v1569 = vadd.f32 %v664, %v1568
        %1570 = vmatprep.mubr.bf16.mxu0 0
        %1571 = vmatmul.mubr.bf16.gmra.mrb[0].mxu0 %v1297
        %v1572 = vpop.f32.mrb[0].mxu0
        %v1573 = vadd.f32 %v669, %v1572
        %v1574 = vpop.f32.mrb[0].mxu0
        %v1575 = vadd.f32 %v669, %v1574
        %v1576 = vpop.f32.mrb[0].mxu0
        %v1577 = vadd.f32 %v674, %v1576
        %v1578 = vpop.f32.mrb[0].mxu0
        %v1579 = vadd.f32 %v674, %v1578
        %1580 = vmatprep.mubr.bf16.mxu0 0
        %1581 = vmatmul.mubr.bf16.gmra.mrb[0].mxu0 %v1300
        %v1582 = vpop.f32.mrb[0].mxu0
        %v1583 = vadd.f32 %v679, %v1582
        %v1584 = vpop.f32.mrb[0].mxu0
        %v1585 = vadd.f32 %v679, %v1584
        %v1586 = vpop.f32.mrb[0].mxu0
        %v1587 = vadd.f32 %v684, %v1586
        %v1588 = vpop.f32.mrb[0].mxu0
        %v1589 = vadd.f32 %v684, %v1588
        %1590 = vmatprep.mubr.bf16.mxu0 0
        %1591 = vmatmul.mubr.bf16.gmra.mrb[0].mxu0 %v1303
        %v1592 = vpop.f32.mrb[0].mxu0
        %v1593 = vadd.f32 %v689, %v1592
        %v1594 = vpop.f32.mrb[0].mxu0
        %v1595 = vadd.f32 %v689, %v1594
        %v1596 = vpop.f32.mrb[0].mxu0
        %v1597 = vadd.f32 %v694, %v1596
        %v1598 = vpop.f32.mrb[0].mxu0
        %v1599 = vadd.f32 %v694, %v1598
        %1600 = vmatprep.mubr.bf16.mxu0 0
        %1601 = vmatmul.mubr.bf16.gmra.mrb[0].mxu0 %v1306
        %v1602 = vpop.f32.mrb[0].mxu0
        %v1603 = vadd.f32 %v699, %v1602
        %v1604 = vpop.f32.mrb[0].mxu0
        %v1605 = vadd.f32 %v699, %v1604
        %v1606 = vpop.f32.mrb[0].mxu0
        %v1607 = vadd.f32 %v704, %v1606
        %v1608 = vpop.f32.mrb[0].mxu0
        %v1609 = vadd.f32 %v704, %v1608
        %1610 = vmatprep.mubr.bf16.mxu0 0
        %1611 = vmatmul.mubr.bf16.gmra.mrb[0].mxu0 %v1309
        %v1612 = vpop.f32.mrb[0].mxu0
        %v1613 = vadd.f32 %v709, %v1612
        %v1614 = vpop.f32.mrb[0].mxu0
        %v1615 = vadd.f32 %v709, %v1614
        %v1616 = vpop.f32.mrb[0].mxu0
        %v1617 = vadd.f32 %v714, %v1616
        %v1618 = vpop.f32.mrb[0].mxu0
        %v1619 = vadd.f32 %v714, %v1618
        %1620 = vmatprep.mubr.bf16.mxu0 0
        %1621 = vmatmul.mubr.bf16.gmra.mrb[0].mxu0 %v1312
        %v1622 = vpop.f32.mrb[0].mxu0
        %v1623 = vadd.f32 %v719, %v1622
        %v1624 = vpop.f32.mrb[0].mxu0
        %v1625 = vadd.f32 %v719, %v1624
        %v1626 = vpop.f32.mrb[0].mxu0
        %v1627 = vadd.f32 %v724, %v1626
        %v1628 = vpop.f32.mrb[0].mxu0
        %v1629 = vadd.f32 %v724, %v1628
        %1630 = vmatprep.mubr.bf16.mxu0 0
        %1631 = vmatmul.mubr.bf16.gmra.mrb[0].mxu0 %v1315
        %v1632 = vpop.f32.mrb[0].mxu0
        %v1633 = vadd.f32 %v729, %v1632
        %v1634 = vpop.f32.mrb[0].mxu0
        %v1635 = vadd.f32 %v729, %v1634
        %v1636 = vpop.f32.mrb[0].mxu0
        %v1637 = vadd.f32 %v734, %v1636
        %v1638 = vpop.f32.mrb[0].mxu0
        %v1639 = vadd.f32 %v734, %v1638
        %1640 = vmatprep.mubr.bf16.mxu0 0
        %1641 = vmatmul.mubr.bf16.gmra.mrb[0].mxu0 %v1318
        %v1642 = vpop.f32.mrb[0].mxu0
        %v1643 = vadd.f32 %v739, %v1642
        %v1644 = vpop.f32.mrb[0].mxu0
        %v1645 = vadd.f32 %v739, %v1644
        %v1646 = vpop.f32.mrb[0].mxu0
        %v1647 = vadd.f32 %v744, %v1646
        %v1648 = vpop.f32.mrb[0].mxu0
        %v1649 = vadd.f32 %v744, %v1648
        %1650 = vmatprep.mubr.bf16.mxu0 0
        %1651 = vmatmul.mubr.bf16.gmra.mrb[0].mxu0 %v1321
        %v1652 = vpop.f32.mrb[0].mxu0
        %v1653 = vadd.f32 %v749, %v1652
        %v1654 = vpop.f32.mrb[0].mxu0
        %v1655 = vadd.f32 %v749, %v1654
        %v1656 = vpop.f32.mrb[0].mxu0
        %v1657 = vadd.f32 %v754, %v1656
        %v1658 = vpop.f32.mrb[0].mxu0
        %v1659 = vadd.f32 %v754, %v1658
        %1660 = vmatprep.mubr.bf16.mxu0 0
        %1661 = vmatmul.mubr.bf16.gmra.mrb[0].mxu0 %v1324
        %v1662 = vpop.f32.mrb[0].mxu0
        %v1663 = vadd.f32 %v759, %v1662
        %v1664 = vpop.f32.mrb[0].mxu0
        %v1665 = vadd.f32 %v759, %v1664
        %v1666 = vpop.f32.mrb[0].mxu0
        %v1667 = vadd.f32 %v764, %v1666
        %v1668 = vpop.f32.mrb[0].mxu0
        %v1669 = vadd.f32 %v764, %v1668
        %1670 = vmatprep.mubr.bf16.mxu0 0
        %1671 = vmatmul.mubr.bf16.gmra.mrb[0].mxu0 %v1327
        %v1672 = vpop.f32.mrb[0].mxu0
        %v1673 = vadd.f32 %v769, %v1672
        %v1674 = vpop.f32.mrb[0].mxu0
        %v1675 = vadd.f32 %v769, %v1674
        %v1676 = vpop.f32.mrb[0].mxu0
        %v1677 = vadd.f32 %v774, %v1676
        %v1678 = vpop.f32.mrb[0].mxu0
        %v1679 = vadd.f32 %v774, %v1678
        %1680 = vmatprep.mubr.bf16.mxu0 0
        %1681 = vmatmul.mubr.bf16.gmra.mrb[0].mxu0 %v1330
        %v1682 = vpop.f32.mrb[0].mxu0
        %v1683 = vadd.f32 %v779, %v1682
        %v1684 = vpop.f32.mrb[0].mxu0
        %v1685 = vadd.f32 %v779, %v1684
        %v1686 = vpop.f32.mrb[0].mxu0
        %v1687 = vadd.f32 %v784, %v1686
        %v1688 = vpop.f32.mrb[0].mxu0
        %v1689 = vadd.f32 %v784, %v1688
        %1690 = vmatprep.mubr.bf16.mxu0 0
        %1691 = vmatmul.mubr.bf16.gmra.mrb[0].mxu0 %v1333
        %v1692 = vpop.f32.mrb[0].mxu0
        %v1693 = vadd.f32 %v789, %v1692
        %v1694 = vpop.f32.mrb[0].mxu0
        %v1695 = vadd.f32 %v789, %v1694
        %v1696 = vpop.f32.mrb[0].mxu0
        %v1697 = vadd.f32 %v794, %v1696
        %v1698 = vpop.f32.mrb[0].mxu0
        %v1699 = vadd.f32 %v794, %v1698
        %1700 = vmatprep.mubr.bf16.mxu0 0
        %1701 = vmatmul.mubr.bf16.gmra.mrb[0].mxu0 %v1336
        %v1702 = vpop.f32.mrb[0].mxu0
        %v1703 = vadd.f32 %v799, %v1702
        %v1704 = vpop.f32.mrb[0].mxu0
        %v1705 = vadd.f32 %v799, %v1704
        %v1706 = vpop.f32.mrb[0].mxu0
        %v1707 = vadd.f32 %v804, %v1706
        %v1708 = vpop.f32.mrb[0].mxu0
        %v1709 = vadd.f32 %v804, %v1708
        %1710 = vmatprep.mubr.bf16.mxu0 0
        %1711 = vmatmul.mubr.bf16.gmra.mrb[0].mxu0 %v1339
        %v1712 = vpop.f32.mrb[0].mxu0
        %v1713 = vadd.f32 %v809, %v1712
        %v1714 = vpop.f32.mrb[0].mxu0
        %v1715 = vadd.f32 %v809, %v1714
        %v1716 = vpop.f32.mrb[0].mxu0
        %v1717 = vadd.f32 %v814, %v1716
        %v1718 = vpop.f32.mrb[0].mxu0
        %v1719 = vadd.f32 %v814, %v1718
        %1720 = vmatprep.mubr.bf16.mxu0 0
        %1721 = vmatmul.mubr.bf16.gmra.mrb[0].mxu0 %v1342
        %v1722 = vpop.f32.mrb[0].mxu0
        %v1723 = vadd.f32 %v819, %v1722
        %v1724 = vpop.f32.mrb[0].mxu0
        %v1725 = vadd.f32 %v819, %v1724
        %v1726 = vpop.f32.mrb[0].mxu0
        %v1727 = vadd.f32 %v824, %v1726
        %v1728 = vpop.f32.mrb[0].mxu0
        %v1729 = vadd.f32 %v824, %v1728
        %1730 = vmatprep.mubr.bf16.mxu0 0
        %1731 = vmatmul.mubr.bf16.gmra.mrb[0].mxu0 %v1345
        %v1732 = vpop.f32.mrb[0].mxu0
        %v1733 = vadd.f32 %v829, %v1732
        %v1734 = vpop.f32.mrb[0].mxu0
        %v1735 = vadd.f32 %v829, %v1734
        %v1736 = vpop.f32.mrb[0].mxu0
        %v1737 = vadd.f32 %v834, %v1736
        %v1738 = vpop.f32.mrb[0].mxu0
        %v1739 = vadd.f32 %v834, %v1738
        %1740 = vmatprep.mubr.bf16.mxu0 0
        %1741 = vmatmul.mubr.bf16.gmra.mrb[0].mxu0 %v1348
        %v1742 = vpop.f32.mrb[0].mxu0
        %v1743 = vadd.f32 %v839, %v1742
        %v1744 = vpop.f32.mrb[0].mxu0
        %v1745 = vadd.f32 %v839, %v1744
        %v1746 = vpop.f32.mrb[0].mxu0
        %v1747 = vadd.f32 %v844, %v1746
        %v1748 = vpop.f32.mrb[0].mxu0
        %v1749 = vadd.f32 %v844, %v1748
        %1750 = vmatprep.mubr.bf16.mxu0 0
        %1751 = vmatmul.mubr.bf16.gmra.mrb[0].mxu0 %v1351
        %v1752 = vpop.f32.mrb[0].mxu0
        %v1753 = vadd.f32 %v849, %v1752
        %v1754 = vpop.f32.mrb[0].mxu0
        %v1755 = vadd.f32 %v849, %v1754
        %v1756 = vpop.f32.mrb[0].mxu0
        %v1757 = vadd.f32 %v854, %v1756
        %v1758 = vpop.f32.mrb[0].mxu0
        %v1759 = vadd.f32 %v854, %v1758
        %1760 = vmatprep.mubr.bf16.mxu0 0
        %1761 = vmatmul.mubr.bf16.gmra.mrb[0].mxu0 %v1354
        %v1762 = vpop.f32.mrb[0].mxu0
        %v1763 = vadd.f32 %v859, %v1762
        %v1764 = vpop.f32.mrb[0].mxu0
        %v1765 = vadd.f32 %v859, %v1764
        %v1766 = vpop.f32.mrb[0].mxu0
        %v1767 = vadd.f32 %v864, %v1766
        %v1768 = vpop.f32.mrb[0].mxu0
        %v1769 = vadd.f32 %v864, %v1768
        %1770 = vmatprep.mubr.bf16.mxu0 0
        %1771 = vmatmul.mubr.bf16.gmra.mrb[0].mxu0 %v1357
        %v1772 = vpop.f32.mrb[0].mxu0
        %v1773 = vadd.f32 %v869, %v1772
        %v1774 = vpop.f32.mrb[0].mxu0
        %v1775 = vadd.f32 %v869, %v1774
        %v1776 = vpop.f32.mrb[0].mxu0
        %v1777 = vadd.f32 %v874, %v1776
        %v1778 = vpop.f32.mrb[0].mxu0
        %v1779 = vadd.f32 %v874, %v1778
        %1780 = vmatprep.mubr.bf16.mxu0 0
        %1781 = vmatmul.mubr.bf16.gmra.mrb[0].mxu0 %v1360
        %v1782 = vpop.f32.mrb[0].mxu0
        %v1783 = vadd.f32 %v879, %v1782
        %v1784 = vpop.f32.mrb[0].mxu0
        %v1785 = vadd.f32 %v879, %v1784
        %v1786 = vpop.f32.mrb[0].mxu0
        %v1787 = vadd.f32 %v884, %v1786
        %v1788 = vpop.f32.mrb[0].mxu0
        %v1789 = vadd.f32 %v884, %v1788
        %1790 = vmatprep.mubr.bf16.mxu0 0
        %1791 = vmatmul.mubr.bf16.gmra.mrb[0].mxu0 %v1363
        %v1792 = vpop.f32.mrb[0].mxu0
        %v1793 = vadd.f32 %v889, %v1792
        %v1794 = vpop.f32.mrb[0].mxu0
        %v1795 = vadd.f32 %v889, %v1794
        %v1796 = vpop.f32.mrb[0].mxu0
        %v1797 = vadd.f32 %v894, %v1796
        %v1798 = vpop.f32.mrb[0].mxu0
        %v1799 = vadd.f32 %v894, %v1798
        %1800 = vmatprep.mubr.bf16.mxu0 0
        %1801 = vmatmul.mubr.bf16.gmra.mrb[0].mxu0 %v1366
        %v1802 = vpop.f32.mrb[0].mxu0
        %v1803 = vadd.f32 %v899, %v1802
        %v1804 = vpop.f32.mrb[0].mxu0
        %v1805 = vadd.f32 %v899, %v1804
        %v1806 = vpop.f32.mrb[0].mxu0
        %v1807 = vadd.f32 %v904, %v1806
        %v1808 = vpop.f32.mrb[0].mxu0
        %v1809 = vadd.f32 %v904, %v1808
        %1810 = vmatprep.mubr.bf16.mxu0 0
        %1811 = vmatmul.mubr.bf16.gmra.mrb[0].mxu0 %v1369
        %v1812 = vpop.f32.mrb[0].mxu0
        %v1813 = vadd.f32 %v909, %v1812
        %v1814 = vpop.f32.mrb[0].mxu0
        %v1815 = vadd.f32 %v909, %v1814
        %v1816 = vpop.f32.mrb[0].mxu0
        %v1817 = vadd.f32 %v914, %v1816
        %v1818 = vpop.f32.mrb[0].mxu0
        %v1819 = vadd.f32 %v914, %v1818
        %1820 = vmatprep.mubr.bf16.mxu0 0
        %1821 = vmatmul.mubr.bf16.gmra.mrb[0].mxu0 %v1372
        %v1822 = vpop.f32.mrb[0].mxu0
        %v1823 = vadd.f32 %v919, %v1822
        %v1824 = vpop.f32.mrb[0].mxu0
        %v1825 = vadd.f32 %v919, %v1824
        %v1826 = vpop.f32.mrb[0].mxu0
        %v1827 = vadd.f32 %v924, %v1826
        %v1828 = vpop.f32.mrb[0].mxu0
        %v1829 = vadd.f32 %v924, %v1828
        %1830 = vmatprep.mubr.bf16.mxu0 0
        %1831 = vmatmul.mubr.bf16.gmra.mrb[0].mxu0 %v1375
        %v1832 = vpop.f32.mrb[0].mxu0
        %v1833 = vadd.f32 %v929, %v1832
        %v1834 = vpop.f32.mrb[0].mxu0
        %v1835 = vadd.f32 %v929, %v1834
        %v1836 = vpop.f32.mrb[0].mxu0
        %v1837 = vadd.f32 %v934, %v1836
        %v1838 = vpop.f32.mrb[0].mxu0
        %v1839 = vadd.f32 %v934, %v1838
        %1840 = vmatprep.mubr.bf16.mxu0 0
        %1841 = vmatmul.mubr.bf16.gmra.mrb[0].mxu0 %v1378
        %v1842 = vpop.f32.mrb[0].mxu0
        %v1843 = vadd.f32 %v939, %v1842
        %v1844 = vpop.f32.mrb[0].mxu0
        %v1845 = vadd.f32 %v939, %v1844
        %v1846 = vpop.f32.mrb[0].mxu0
        %v1847 = vadd.f32 %v944, %v1846
        %v1848 = vpop.f32.mrb[0].mxu0
        %v1849 = vadd.f32 %v944, %v1848
        %1850 = vmatprep.mubr.bf16.mxu0 0
        %1851 = vmatmul.mubr.bf16.gmra.mrb[0].mxu0 %v1381
        %v1852 = vpop.f32.mrb[0].mxu0
        %v1853 = vadd.f32 %v949, %v1852
        %v1854 = vpop.f32.mrb[0].mxu0
        %v1855 = vadd.f32 %v949, %v1854
        %v1856 = vpop.f32.mrb[0].mxu0
        %v1857 = vadd.f32 %v954, %v1856
        %v1858 = vpop.f32.mrb[0].mxu0
        %v1859 = vadd.f32 %v954, %v1858
        %1860 = vmatprep.mubr.bf16.mxu0 0
        %1861 = vmatmul.mubr.bf16.gmra.mrb[0].mxu0 %v1384
        %v1862 = vpop.f32.mrb[0].mxu0
        %v1863 = vadd.f32 %v959, %v1862
        %v1864 = vpop.f32.mrb[0].mxu0
        %v1865 = vadd.f32 %v959, %v1864
        %v1866 = vpop.f32.mrb[0].mxu0
        %v1867 = vadd.f32 %v964, %v1866
        %v1868 = vpop.f32.mrb[0].mxu0
        %v1869 = vadd.f32 %v964, %v1868
        %1870 = vmatprep.mubr.bf16.mxu0 0
        %1871 = vmatmul.mubr.bf16.gmra.mrb[0].mxu0 %v1387
        %v1872 = vpop.f32.mrb[0].mxu0
        %v1873 = vadd.f32 %v969, %v1872
        %v1874 = vpop.f32.mrb[0].mxu0
        %v1875 = vadd.f32 %v969, %v1874
        %v1876 = vpop.f32.mrb[0].mxu0
        %v1877 = vadd.f32 %v974, %v1876
        %v1878 = vpop.f32.mrb[0].mxu0
        %v1879 = vadd.f32 %v974, %v1878
        %1880 = vmatprep.mubr.bf16.mxu0 0
        %1881 = vmatmul.mubr.bf16.gmra.mrb[0].mxu0 %v1390
        %v1882 = vpop.f32.mrb[0].mxu0
        %v1883 = vadd.f32 %v979, %v1882
        %v1884 = vpop.f32.mrb[0].mxu0
        %v1885 = vadd.f32 %v979, %v1884
        %v1886 = vpop.f32.mrb[0].mxu0
        %v1887 = vadd.f32 %v984, %v1886
        %v1888 = vpop.f32.mrb[0].mxu0
        %v1889 = vadd.f32 %v984, %v1888
        %1890 = vmatprep.mubr.bf16.mxu0 0
        %1891 = vmatmul.mubr.bf16.gmra.mrb[0].mxu0 %v1393
        %v1892 = vpop.f32.mrb[0].mxu0
        %v1893 = vadd.f32 %v989, %v1892
        %v1894 = vpop.f32.mrb[0].mxu0
        %v1895 = vadd.f32 %v989, %v1894
        %v1896 = vpop.f32.mrb[0].mxu0
        %v1897 = vadd.f32 %v994, %v1896
        %v1898 = vpop.f32.mrb[0].mxu0
        %v1899 = vadd.f32 %v994, %v1898
        %1900 = vmatprep.mubr.bf16.mxu0 0
        %1901 = vmatmul.mubr.bf16.gmra.mrb[0].mxu0 %v1396
        %v1902 = vpop.f32.mrb[0].mxu0
        %v1903 = vadd.f32 %v999, %v1902
        %v1904 = vpop.f32.mrb[0].mxu0
        %v1905 = vadd.f32 %v999, %v1904
        %v1906 = vpop.f32.mrb[0].mxu0
        %v1907 = vadd.f32 %v1004, %v1906
        %v1908 = vpop.f32.mrb[0].mxu0
        %v1909 = vadd.f32 %v1004, %v1908
        %1910 = vmatprep.mubr.bf16.mxu0 0
        %1911 = vmatmul.mubr.bf16.gmra.mrb[0].mxu0 %v1399
        %v1912 = vpop.f32.mrb[0].mxu0
        %v1913 = vadd.f32 %v1009, %v1912
        %v1914 = vpop.f32.mrb[0].mxu0
        %v1915 = vadd.f32 %v1009, %v1914
        %v1916 = vpop.f32.mrb[0].mxu0
        %v1917 = vadd.f32 %v1014, %v1916
        %v1918 = vpop.f32.mrb[0].mxu0
        %v1919 = vadd.f32 %v1014, %v1918
        %1920 = vdwg.mxu0
        %v1921 = vmax.f32 %v1443, 0.0
        %v1922 = vmax.f32 %v1445, 0.0
        %v1923 = vmax.f32 %v1447, 0.0
        %v1924 = vmax.f32 %v1449, 0.0
        %v1925 = vmax.f32 %v1453, 0.0
        %v1926 = vmax.f32 %v1455, 0.0
        %v1927 = vmax.f32 %v1457, 0.0
        %v1928 = vmax.f32 %v1459, 0.0
        %v1929 = vmax.f32 %v1463, 0.0
        %v1930 = vmax.f32 %v1465, 0.0
        %v1931 = vmax.f32 %v1467, 0.0
        %v1932 = vmax.f32 %v1469, 0.0
        %v1933 = vmax.f32 %v1473, 0.0
        %v1934 = vmax.f32 %v1475, 0.0
        %v1935 = vmax.f32 %v1477, 0.0
        %v1936 = vmax.f32 %v1479, 0.0
        %v1937 = vmax.f32 %v1483, 0.0
        %v1938 = vmax.f32 %v1485, 0.0
        %v1939 = vmax.f32 %v1487, 0.0
        %v1940 = vmax.f32 %v1489, 0.0
        %v1941 = vmax.f32 %v1493, 0.0
        %v1942 = vmax.f32 %v1495, 0.0
        %v1943 = vmax.f32 %v1497, 0.0
        %v1944 = vmax.f32 %v1499, 0.0
        %v1945 = vmax.f32 %v1503, 0.0
        %v1946 = vmax.f32 %v1505, 0.0
        %v1947 = vmax.f32 %v1507, 0.0
        %v1948 = vmax.f32 %v1509, 0.0
        %v1949 = vmax.f32 %v1513, 0.0
        %v1950 = vmax.f32 %v1515, 0.0
        %v1951 = vmax.f32 %v1517, 0.0
        %v1952 = vmax.f32 %v1519, 0.0
        %v1953 = vmax.f32 %v1523, 0.0
        %v1954 = vmax.f32 %v1525, 0.0
        %v1955 = vmax.f32 %v1527, 0.0
        %v1956 = vmax.f32 %v1529, 0.0
        %v1957 = vmax.f32 %v1533, 0.0
        %v1958 = vmax.f32 %v1535, 0.0
        %v1959 = vmax.f32 %v1537, 0.0
        %v1960 = vmax.f32 %v1539, 0.0
        %v1961 = vmax.f32 %v1543, 0.0
        %v1962 = vmax.f32 %v1545, 0.0
        %v1963 = vmax.f32 %v1547, 0.0
        %v1964 = vmax.f32 %v1549, 0.0
        %v1965 = vmax.f32 %v1553, 0.0
        %v1966 = vmax.f32 %v1555, 0.0
        %v1967 = vmax.f32 %v1557, 0.0
        %v1968 = vmax.f32 %v1559, 0.0
        %v1969 = vmax.f32 %v1563, 0.0
        %v1970 = vmax.f32 %v1565, 0.0
        %v1971 = vmax.f32 %v1567, 0.0
        %v1972 = vmax.f32 %v1569, 0.0
        %v1973 = vmax.f32 %v1573, 0.0
        %v1974 = vmax.f32 %v1575, 0.0
        %v1975 = vmax.f32 %v1577, 0.0
        %v1976 = vmax.f32 %v1579, 0.0
        %v1977 = vmax.f32 %v1583, 0.0
        %v1978 = vmax.f32 %v1585, 0.0
        %v1979 = vmax.f32 %v1587, 0.0
        %v1980 = vmax.f32 %v1589, 0.0
        %v1981 = vmax.f32 %v1593, 0.0
        %v1982 = vmax.f32 %v1595, 0.0
        %v1983 = vmax.f32 %v1597, 0.0
        %v1984 = vmax.f32 %v1599, 0.0
        %v1985 = vlaneseq
        %v1986 = vshrl.u32 %v1985, 7
        %v1987 = vadd.s32 %v1986, 8
        %v1988 = vadd.s32 %v1986, 16
        %v1989 = vadd.s32 %v1986, 24
        %v1990 = vadd.s32 %v1986, 32
        %v1991 = vadd.s32 %v1986, 40
        %v1992 = vadd.s32 %v1986, 48
        %v1993 = vadd.s32 %v1986, 56
        %v1994 = vadd.s32 %v1986, 64
        %v1995 = vadd.s32 %v1986, 72
        %v1996 = vadd.s32 %v1986, 80
        %v1997 = vadd.s32 %v1986, 88
        %v1998 = vadd.s32 %v1986, 96
        %v1999 = vadd.s32 %v1986, 104
        %v2000 = vadd.s32 %v1986, 112
        %v2001 = vadd.s32 %v1986, 120
        %v2002 = vadd.s32 %v1986, 128
        %v2003 = vadd.s32 %v1986, 136
        %v2004 = vadd.s32 %v1986, 144
        %v2005 = vadd.s32 %v1986, 152
        %v2006 = vadd.s32 %v1986, 160
        %v2007 = vadd.s32 %v1986, 168
        %v2008 = vadd.s32 %v1986, 176
        %v2009 = vadd.s32 %v1986, 184
        %v2010 = vadd.s32 %v1986, 192
        %v2011 = vadd.s32 %v1986, 200
        %v2012 = vadd.s32 %v1986, 208
        %v2013 = vadd.s32 %v1986, 216
        %v2014 = vadd.s32 %v1986, 224
        %v2015 = vadd.s32 %v1986, 232
        %v2016 = vadd.s32 %v1986, 240
        %v2017 = vadd.s32 %v1986, 248
        %v2018 = vadd.s32 %v1986, 256
        %v2019 = vadd.s32 %v1986, 264
        %v2020 = vadd.s32 %v1986, 272
        %v2021 = vadd.s32 %v1986, 280
        %v2022 = vadd.s32 %v1986, 288
        %v2023 = vadd.s32 %v1986, 296
        %v2024 = vadd.s32 %v1986, 304
        %v2025 = vadd.s32 %v1986, 312
        %v2026 = vadd.s32 %v1986, 320
        %v2027 = vadd.s32 %v1986, 328
        %v2028 = vadd.s32 %v1986, 336
        %v2029 = vadd.s32 %v1986, 344
        %v2030 = vadd.s32 %v1986, 352
        %v2031 = vadd.s32 %v1986, 360
        %v2032 = vadd.s32 %v1986, 368
        %v2033 = vadd.s32 %v1986, 376
        %v2034 = vadd.s32 %v1986, 384
        %v2035 = vadd.s32 %v1986, 392
        %v2036 = vadd.s32 %v1986, 400
        %v2037 = vadd.s32 %v1986, 408
        %v2038 = vadd.s32 %v1986, 416
        %v2039 = vadd.s32 %v1986, 424
        %v2040 = vadd.s32 %v1986, 432
        %v2041 = vadd.s32 %v1986, 440
        %v2042 = vadd.s32 %v1986, 448
        %v2043 = vadd.s32 %v1986, 456
        %v2044 = vadd.s32 %v1986, 464
        %v2045 = vadd.s32 %v1986, 472
        %v2046 = vadd.s32 %v1986, 480
        %v2047 = vadd.s32 %v1986, 488
        %v2048 = vadd.s32 %v1986, 496
        %v2049 = vadd.s32 %v1986, 504
        %vm2050 = vcmp.lt.s32.totalorder %v1986, 256
        %vm2051 = vcmp.lt.s32.totalorder %v1987, 256
        %vm2052 = vcmp.lt.s32.totalorder %v1988, 256
        %vm2053 = vcmp.lt.s32.totalorder %v1989, 256
        %vm2054 = vcmp.lt.s32.totalorder %v1990, 256
        %vm2055 = vcmp.lt.s32.totalorder %v1991, 256
        %vm2056 = vcmp.lt.s32.totalorder %v1992, 256
        %vm2057 = vcmp.lt.s32.totalorder %v1993, 256
        %vm2058 = vcmp.lt.s32.totalorder %v1994, 256
        %vm2059 = vcmp.lt.s32.totalorder %v1995, 256
        %vm2060 = vcmp.lt.s32.totalorder %v1996, 256
        %vm2061 = vcmp.lt.s32.totalorder %v1997, 256
        %vm2062 = vcmp.lt.s32.totalorder %v1998, 256
        %vm2063 = vcmp.lt.s32.totalorder %v1999, 256
        %vm2064 = vcmp.lt.s32.totalorder %v2000, 256
        %vm2065 = vcmp.lt.s32.totalorder %v2001, 256
        %vm2066 = vcmp.lt.s32.totalorder %v2002, 256
        %vm2067 = vcmp.lt.s32.totalorder %v2003, 256
        %vm2068 = vcmp.lt.s32.totalorder %v2004, 256
        %vm2069 = vcmp.lt.s32.totalorder %v2005, 256
        %vm2070 = vcmp.lt.s32.totalorder %v2006, 256
        %vm2071 = vcmp.lt.s32.totalorder %v2007, 256
        %vm2072 = vcmp.lt.s32.totalorder %v2008, 256
        %vm2073 = vcmp.lt.s32.totalorder %v2009, 256
        %vm2074 = vcmp.lt.s32.totalorder %v2010, 256
        %vm2075 = vcmp.lt.s32.totalorder %v2011, 256
        %vm2076 = vcmp.lt.s32.totalorder %v2012, 256
        %vm2077 = vcmp.lt.s32.totalorder %v2013, 256
        %vm2078 = vcmp.lt.s32.totalorder %v2014, 256
        %vm2079 = vcmp.lt.s32.totalorder %v2015, 256
        %vm2080 = vcmp.lt.s32.totalorder %v2016, 256
        %vm2081 = vcmp.lt.s32.totalorder %v2017, 256
        %vm2082 = vcmp.lt.s32.totalorder %v2018, 256
        %vm2083 = vcmp.lt.s32.totalorder %v2019, 256
        %vm2084 = vcmp.lt.s32.totalorder %v2020, 256
        %vm2085 = vcmp.lt.s32.totalorder %v2021, 256
        %vm2086 = vcmp.lt.s32.totalorder %v2022, 256
        %vm2087 = vcmp.lt.s32.totalorder %v2023, 256
        %vm2088 = vcmp.lt.s32.totalorder %v2024, 256
        %vm2089 = vcmp.lt.s32.totalorder %v2025, 256
        %vm2090 = vcmp.lt.s32.totalorder %v2026, 256
        %vm2091 = vcmp.lt.s32.totalorder %v2027, 256
        %vm2092 = vcmp.lt.s32.totalorder %v2028, 256
        %vm2093 = vcmp.lt.s32.totalorder %v2029, 256
        %vm2094 = vcmp.lt.s32.totalorder %v2030, 256
        %vm2095 = vcmp.lt.s32.totalorder %v2031, 256
        %vm2096 = vcmp.lt.s32.totalorder %v2032, 256
        %vm2097 = vcmp.lt.s32.totalorder %v2033, 256
        %vm2098 = vcmp.lt.s32.totalorder %v2034, 256
        %vm2099 = vcmp.lt.s32.totalorder %v2035, 256
        %vm2100 = vcmp.lt.s32.totalorder %v2036, 256
        %vm2101 = vcmp.lt.s32.totalorder %v2037, 256
        %vm2102 = vcmp.lt.s32.totalorder %v2038, 256
        %vm2103 = vcmp.lt.s32.totalorder %v2039, 256
        %vm2104 = vcmp.lt.s32.totalorder %v2040, 256
        %vm2105 = vcmp.lt.s32.totalorder %v2041, 256
        %vm2106 = vcmp.lt.s32.totalorder %v2042, 256
        %vm2107 = vcmp.lt.s32.totalorder %v2043, 256
        %vm2108 = vcmp.lt.s32.totalorder %v2044, 256
        %vm2109 = vcmp.lt.s32.totalorder %v2045, 256
        %vm2110 = vcmp.lt.s32.totalorder %v2046, 256
        %vm2111 = vcmp.lt.s32.totalorder %v2047, 256
        %vm2112 = vcmp.lt.s32.totalorder %v2048, 256
        %vm2113 = vcmp.lt.s32.totalorder %v2049, 256
        %v2114 = vmax.f32 %v1603, 0.0
        %v2115 = vmax.f32 %v1605, 0.0
        %v2116 = vmax.f32 %v1607, 0.0
        %v2117 = vmax.f32 %v1609, 0.0
        %v2118 = vmax.f32 %v1613, 0.0
        %v2119 = vmax.f32 %v1615, 0.0
        %v2120 = vmax.f32 %v1617, 0.0
        %v2121 = vmax.f32 %v1619, 0.0
        %v2122 = vmax.f32 %v1623, 0.0
        %v2123 = vmax.f32 %v1625, 0.0
        %v2124 = vmax.f32 %v1627, 0.0
        %v2125 = vmax.f32 %v1629, 0.0
        %v2126 = vmax.f32 %v1633, 0.0
        %v2127 = vmax.f32 %v1635, 0.0
        %v2128 = vmax.f32 %v1637, 0.0
        %v2129 = vmax.f32 %v1639, 0.0
        %v2130 = vmax.f32 %v1643, 0.0
        %v2131 = vmax.f32 %v1645, 0.0
        %v2132 = vmax.f32 %v1647, 0.0
        %v2133 = vmax.f32 %v1649, 0.0
        %v2134 = vmax.f32 %v1653, 0.0
        %v2135 = vmax.f32 %v1655, 0.0
        %v2136 = vmax.f32 %v1657, 0.0
        %v2137 = vmax.f32 %v1659, 0.0
        %v2138 = vmax.f32 %v1663, 0.0
        %v2139 = vmax.f32 %v1665, 0.0
        %v2140 = vmax.f32 %v1667, 0.0
        %v2141 = vmax.f32 %v1669, 0.0
        %v2142 = vmax.f32 %v1673, 0.0
        %v2143 = vmax.f32 %v1675, 0.0
        %v2144 = vmax.f32 %v1677, 0.0
        %v2145 = vmax.f32 %v1679, 0.0
        %v2146 = vmax.f32 %v1683, 0.0
        %v2147 = vmax.f32 %v1685, 0.0
        %v2148 = vmax.f32 %v1687, 0.0
        %v2149 = vmax.f32 %v1689, 0.0
        %v2150 = vmax.f32 %v1693, 0.0
        %v2151 = vmax.f32 %v1695, 0.0
        %v2152 = vmax.f32 %v1697, 0.0
        %v2153 = vmax.f32 %v1699, 0.0
        %v2154 = vmax.f32 %v1703, 0.0
        %v2155 = vmax.f32 %v1705, 0.0
        %v2156 = vmax.f32 %v1707, 0.0
        %v2157 = vmax.f32 %v1709, 0.0
        %v2158 = vmax.f32 %v1713, 0.0
        %v2159 = vmax.f32 %v1715, 0.0
        %v2160 = vmax.f32 %v1717, 0.0
        %v2161 = vmax.f32 %v1719, 0.0
        %v2162 = vmax.f32 %v1723, 0.0
        %v2163 = vmax.f32 %v1725, 0.0
        %v2164 = vmax.f32 %v1727, 0.0
        %v2165 = vmax.f32 %v1729, 0.0
        %v2166 = vmax.f32 %v1733, 0.0
        %v2167 = vmax.f32 %v1735, 0.0
        %v2168 = vmax.f32 %v1737, 0.0
        %v2169 = vmax.f32 %v1739, 0.0
        %v2170 = vmax.f32 %v1743, 0.0
        %v2171 = vmax.f32 %v1745, 0.0
        %v2172 = vmax.f32 %v1747, 0.0
        %v2173 = vmax.f32 %v1749, 0.0
        %v2174 = vmax.f32 %v1753, 0.0
        %v2175 = vmax.f32 %v1755, 0.0
        %v2176 = vmax.f32 %v1757, 0.0
        %v2177 = vmax.f32 %v1759, 0.0
        %v2178 = vmax.f32 %v1763, 0.0
        %v2179 = vmax.f32 %v1765, 0.0
        %v2180 = vmax.f32 %v1767, 0.0
        %v2181 = vmax.f32 %v1769, 0.0
        %v2182 = vmax.f32 %v1773, 0.0
        %v2183 = vmax.f32 %v1775, 0.0
        %v2184 = vmax.f32 %v1777, 0.0
        %v2185 = vmax.f32 %v1779, 0.0
        %v2186 = vmax.f32 %v1783, 0.0
        %v2187 = vmax.f32 %v1785, 0.0
        %v2188 = vmax.f32 %v1787, 0.0
        %v2189 = vmax.f32 %v1789, 0.0
        %v2190 = vmax.f32 %v1793, 0.0
        %v2191 = vmax.f32 %v1795, 0.0
        %v2192 = vmax.f32 %v1797, 0.0
        %v2193 = vmax.f32 %v1799, 0.0
        %v2194 = vmax.f32 %v1803, 0.0
        %v2195 = vmax.f32 %v1805, 0.0
        %v2196 = vmax.f32 %v1807, 0.0
        %v2197 = vmax.f32 %v1809, 0.0
        %v2198 = vmax.f32 %v1813, 0.0
        %v2199 = vmax.f32 %v1815, 0.0
        %v2200 = vmax.f32 %v1817, 0.0
        %v2201 = vmax.f32 %v1819, 0.0
        %v2202 = vmax.f32 %v1823, 0.0
        %v2203 = vmax.f32 %v1825, 0.0
        %v2204 = vmax.f32 %v1827, 0.0
        %v2205 = vmax.f32 %v1829, 0.0
        %v2206 = vmax.f32 %v1833, 0.0
        %v2207 = vmax.f32 %v1835, 0.0
        %v2208 = vmax.f32 %v1837, 0.0
        %v2209 = vmax.f32 %v1839, 0.0
        %v2210 = vmax.f32 %v1843, 0.0
        %v2211 = vmax.f32 %v1845, 0.0
        %v2212 = vmax.f32 %v1847, 0.0
        %v2213 = vmax.f32 %v1849, 0.0
        %v2214 = vmax.f32 %v1853, 0.0
        %v2215 = vmax.f32 %v1855, 0.0
        %v2216 = vmax.f32 %v1857, 0.0
        %v2217 = vmax.f32 %v1859, 0.0
        %v2218 = vmax.f32 %v1863, 0.0
        %v2219 = vmax.f32 %v1865, 0.0
        %v2220 = vmax.f32 %v1867, 0.0
        %v2221 = vmax.f32 %v1869, 0.0
        %v2222 = vmax.f32 %v1873, 0.0
        %v2223 = vmax.f32 %v1875, 0.0
        %v2224 = vmax.f32 %v1877, 0.0
        %v2225 = vmax.f32 %v1879, 0.0
        %v2226 = vmax.f32 %v1883, 0.0
        %v2227 = vmax.f32 %v1885, 0.0
        %v2228 = vmax.f32 %v1887, 0.0
        %v2229 = vmax.f32 %v1889, 0.0
        %v2230 = vmax.f32 %v1893, 0.0
        %v2231 = vmax.f32 %v1895, 0.0
        %v2232 = vmax.f32 %v1897, 0.0
        %v2233 = vmax.f32 %v1899, 0.0
        %v2234 = vmax.f32 %v1903, 0.0
        %v2235 = vmax.f32 %v1905, 0.0
        %v2236 = vmax.f32 %v1907, 0.0
        %v2237 = vmax.f32 %v1909, 0.0
        %v2238 = vmax.f32 %v1913, 0.0
        %v2239 = vmax.f32 %v1915, 0.0
        %v2240 = vmax.f32 %v1917, 0.0
        %v2241 = vmax.f32 %v1919, 0.0
        %v2242 = vsel %vm2050, 1, 0
        %v2243 = vsel %vm2051, 1, 0
        %v2244 = vsel %vm2052, 1, 0
        %v2245 = vsel %vm2053, 1, 0
        %v2246 = vsel %vm2054, 1, 0
        %v2247 = vsel %vm2055, 1, 0
        %v2248 = vsel %vm2056, 1, 0
        %v2249 = vsel %vm2057, 1, 0
        %v2250 = vsel %vm2058, 1, 0
        %v2251 = vsel %vm2059, 1, 0
        %v2252 = vsel %vm2060, 1, 0
        %v2253 = vsel %vm2061, 1, 0
        %v2254 = vsel %vm2062, 1, 0
        %v2255 = vsel %vm2063, 1, 0
        %v2256 = vsel %vm2064, 1, 0
        %v2257 = vsel %vm2065, 1, 0
        %v2258 = vsel %vm2066, 1, 0
        %v2259 = vsel %vm2067, 1, 0
        %v2260 = vsel %vm2068, 1, 0
        %v2261 = vsel %vm2069, 1, 0
        %v2262 = vsel %vm2070, 1, 0
        %v2263 = vsel %vm2071, 1, 0
        %v2264 = vsel %vm2072, 1, 0
        %v2265 = vsel %vm2073, 1, 0
        %v2266 = vsel %vm2074, 1, 0
        %v2267 = vsel %vm2075, 1, 0
        %v2268 = vsel %vm2076, 1, 0
        %v2269 = vsel %vm2077, 1, 0
        %v2270 = vsel %vm2078, 1, 0
        %v2271 = vsel %vm2079, 1, 0
        %v2272 = vsel %vm2080, 1, 0
        %v2273 = vsel %vm2081, 1, 0
        %v2274 = vsel %vm2082, 1, 0
        %v2275 = vsel %vm2083, 1, 0
        %v2276 = vsel %vm2084, 1, 0
        %v2277 = vsel %vm2085, 1, 0
        %v2278 = vsel %vm2086, 1, 0
        %v2279 = vsel %vm2087, 1, 0
        %v2280 = vsel %vm2088, 1, 0
        %v2281 = vsel %vm2089, 1, 0
        %v2282 = vsel %vm2090, 1, 0
        %v2283 = vsel %vm2091, 1, 0
        %v2284 = vsel %vm2092, 1, 0
        %v2285 = vsel %vm2093, 1, 0
        %v2286 = vsel %vm2094, 1, 0
        %v2287 = vsel %vm2095, 1, 0
        %v2288 = vsel %vm2096, 1, 0
        %v2289 = vsel %vm2097, 1, 0
        %v2290 = vsel %vm2098, 1, 0
        %v2291 = vsel %vm2099, 1, 0
        %v2292 = vsel %vm2100, 1, 0
        %v2293 = vsel %vm2101, 1, 0
        %v2294 = vsel %vm2102, 1, 0
        %v2295 = vsel %vm2103, 1, 0
        %v2296 = vsel %vm2104, 1, 0
        %v2297 = vsel %vm2105, 1, 0
        %v2298 = vsel %vm2106, 1, 0
        %v2299 = vsel %vm2107, 1, 0
        %v2300 = vsel %vm2108, 1, 0
        %v2301 = vsel %vm2109, 1, 0
        %v2302 = vsel %vm2110, 1, 0
        %v2303 = vsel %vm2111, 1, 0
        %v2304 = vsel %vm2112, 1, 0
        %v2305 = vsel %vm2113, 1, 0
        %vm2306 = vcmp.eq.s32.totalorder %v2242, 1
        %vm2307 = vcmp.eq.s32.totalorder %v2243, 1
        %vm2308 = vcmp.eq.s32.totalorder %v2244, 1
        %vm2309 = vcmp.eq.s32.totalorder %v2245, 1
        %vm2310 = vcmp.eq.s32.totalorder %v2246, 1
        %vm2311 = vcmp.eq.s32.totalorder %v2247, 1
        %vm2312 = vcmp.eq.s32.totalorder %v2248, 1
        %vm2313 = vcmp.eq.s32.totalorder %v2249, 1
        %vm2314 = vcmp.eq.s32.totalorder %v2250, 1
        %vm2315 = vcmp.eq.s32.totalorder %v2251, 1
        %vm2316 = vcmp.eq.s32.totalorder %v2252, 1
        %vm2317 = vcmp.eq.s32.totalorder %v2253, 1
        %vm2318 = vcmp.eq.s32.totalorder %v2254, 1
        %vm2319 = vcmp.eq.s32.totalorder %v2255, 1
        %vm2320 = vcmp.eq.s32.totalorder %v2256, 1
        %vm2321 = vcmp.eq.s32.totalorder %v2257, 1
        %vm2322 = vcmp.eq.s32.totalorder %v2258, 1
        %vm2323 = vcmp.eq.s32.totalorder %v2259, 1
        %vm2324 = vcmp.eq.s32.totalorder %v2260, 1
        %vm2325 = vcmp.eq.s32.totalorder %v2261, 1
        %vm2326 = vcmp.eq.s32.totalorder %v2262, 1
        %vm2327 = vcmp.eq.s32.totalorder %v2263, 1
        %vm2328 = vcmp.eq.s32.totalorder %v2264, 1
        %vm2329 = vcmp.eq.s32.totalorder %v2265, 1
        %vm2330 = vcmp.eq.s32.totalorder %v2266, 1
        %vm2331 = vcmp.eq.s32.totalorder %v2267, 1
        %vm2332 = vcmp.eq.s32.totalorder %v2268, 1
        %vm2333 = vcmp.eq.s32.totalorder %v2269, 1
        %vm2334 = vcmp.eq.s32.totalorder %v2270, 1
        %vm2335 = vcmp.eq.s32.totalorder %v2271, 1
        %vm2336 = vcmp.eq.s32.totalorder %v2272, 1
        %vm2337 = vcmp.eq.s32.totalorder %v2273, 1
        %vm2338 = vcmp.eq.s32.totalorder %v2274, 1
        %vm2339 = vcmp.eq.s32.totalorder %v2275, 1
        %vm2340 = vcmp.eq.s32.totalorder %v2276, 1
        %vm2341 = vcmp.eq.s32.totalorder %v2277, 1
        %vm2342 = vcmp.eq.s32.totalorder %v2278, 1
        %vm2343 = vcmp.eq.s32.totalorder %v2279, 1
        %vm2344 = vcmp.eq.s32.totalorder %v2280, 1
        %vm2345 = vcmp.eq.s32.totalorder %v2281, 1
        %vm2346 = vcmp.eq.s32.totalorder %v2282, 1
        %vm2347 = vcmp.eq.s32.totalorder %v2283, 1
        %vm2348 = vcmp.eq.s32.totalorder %v2284, 1
        %vm2349 = vcmp.eq.s32.totalorder %v2285, 1
        %vm2350 = vcmp.eq.s32.totalorder %v2286, 1
        %vm2351 = vcmp.eq.s32.totalorder %v2287, 1
        %vm2352 = vcmp.eq.s32.totalorder %v2288, 1
        %vm2353 = vcmp.eq.s32.totalorder %v2289, 1
        %vm2354 = vcmp.eq.s32.totalorder %v2290, 1
        %vm2355 = vcmp.eq.s32.totalorder %v2291, 1
        %vm2356 = vcmp.eq.s32.totalorder %v2292, 1
        %vm2357 = vcmp.eq.s32.totalorder %v2293, 1
        %vm2358 = vcmp.eq.s32.totalorder %v2294, 1
        %vm2359 = vcmp.eq.s32.totalorder %v2295, 1
        %vm2360 = vcmp.eq.s32.totalorder %v2296, 1
        %vm2361 = vcmp.eq.s32.totalorder %v2297, 1
        %vm2362 = vcmp.eq.s32.totalorder %v2298, 1
        %vm2363 = vcmp.eq.s32.totalorder %v2299, 1
        %vm2364 = vcmp.eq.s32.totalorder %v2300, 1
        %vm2365 = vcmp.eq.s32.totalorder %v2301, 1
        %vm2366 = vcmp.eq.s32.totalorder %v2302, 1
        %vm2367 = vcmp.eq.s32.totalorder %v2303, 1
        %vm2368 = vcmp.eq.s32.totalorder %v2304, 1
        %vm2369 = vcmp.eq.s32.totalorder %v2305, 1
        %v2370 = vsel %vm2306, %v2114, %v1603
        %v2371 = vsel %vm2306, %v2115, %v1605
        %v2372 = vsel %vm2307, %v2116, %v1607
        %v2373 = vsel %vm2307, %v2117, %v1609
        %v2374 = vsel %vm2308, %v2118, %v1613
        %v2375 = vsel %vm2308, %v2119, %v1615
        %v2376 = vsel %vm2309, %v2120, %v1617
        %v2377 = vsel %vm2309, %v2121, %v1619
        %v2378 = vsel %vm2310, %v2122, %v1623
        %v2379 = vsel %vm2310, %v2123, %v1625
        %v2380 = vsel %vm2311, %v2124, %v1627
        %v2381 = vsel %vm2311, %v2125, %v1629
        %v2382 = vsel %vm2312, %v2126, %v1633
        %v2383 = vsel %vm2312, %v2127, %v1635
        %v2384 = vsel %vm2313, %v2128, %v1637
        %v2385 = vsel %vm2313, %v2129, %v1639
        %v2386 = vsel %vm2314, %v2130, %v1643
        %v2387 = vsel %vm2314, %v2131, %v1645
        %v2388 = vsel %vm2315, %v2132, %v1647
        %v2389 = vsel %vm2315, %v2133, %v1649
        %v2390 = vsel %vm2316, %v2134, %v1653
        %v2391 = vsel %vm2316, %v2135, %v1655
        %v2392 = vsel %vm2317, %v2136, %v1657
        %v2393 = vsel %vm2317, %v2137, %v1659
        %v2394 = vsel %vm2318, %v2138, %v1663
        %v2395 = vsel %vm2318, %v2139, %v1665
        %v2396 = vsel %vm2319, %v2140, %v1667
        %v2397 = vsel %vm2319, %v2141, %v1669
        %v2398 = vsel %vm2320, %v2142, %v1673
        %v2399 = vsel %vm2320, %v2143, %v1675
        %v2400 = vsel %vm2321, %v2144, %v1677
        %v2401 = vsel %vm2321, %v2145, %v1679
        %v2402 = vsel %vm2322, %v2146, %v1683
        %v2403 = vsel %vm2322, %v2147, %v1685
        %v2404 = vsel %vm2323, %v2148, %v1687
        %v2405 = vsel %vm2323, %v2149, %v1689
        %v2406 = vsel %vm2324, %v2150, %v1693
        %v2407 = vsel %vm2324, %v2151, %v1695
        %v2408 = vsel %vm2325, %v2152, %v1697
        %v2409 = vsel %vm2325, %v2153, %v1699
        %v2410 = vsel %vm2326, %v2154, %v1703
        %v2411 = vsel %vm2326, %v2155, %v1705
        %v2412 = vsel %vm2327, %v2156, %v1707
        %v2413 = vsel %vm2327, %v2157, %v1709
        %v2414 = vsel %vm2328, %v2158, %v1713
        %v2415 = vsel %vm2328, %v2159, %v1715
        %v2416 = vsel %vm2329, %v2160, %v1717
        %v2417 = vsel %vm2329, %v2161, %v1719
        %v2418 = vsel %vm2330, %v2162, %v1723
        %v2419 = vsel %vm2330, %v2163, %v1725
        %v2420 = vsel %vm2331, %v2164, %v1727
        %v2421 = vsel %vm2331, %v2165, %v1729
        %v2422 = vsel %vm2332, %v2166, %v1733
        %v2423 = vsel %vm2332, %v2167, %v1735
        %v2424 = vsel %vm2333, %v2168, %v1737
        %v2425 = vsel %vm2333, %v2169, %v1739
        %v2426 = vsel %vm2334, %v2170, %v1743
        %v2427 = vsel %vm2334, %v2171, %v1745
        %v2428 = vsel %vm2335, %v2172, %v1747
        %v2429 = vsel %vm2335, %v2173, %v1749
        %v2430 = vsel %vm2336, %v2174, %v1753
        %v2431 = vsel %vm2336, %v2175, %v1755
        %v2432 = vsel %vm2337, %v2176, %v1757
        %v2433 = vsel %vm2337, %v2177, %v1759
        %v2434 = vsel %vm2338, %v2178, %v1763
        %v2435 = vsel %vm2338, %v2179, %v1765
        %v2436 = vsel %vm2339, %v2180, %v1767
        %v2437 = vsel %vm2339, %v2181, %v1769
        %v2438 = vsel %vm2340, %v2182, %v1773
        %v2439 = vsel %vm2340, %v2183, %v1775
        %v2440 = vsel %vm2341, %v2184, %v1777
        %v2441 = vsel %vm2341, %v2185, %v1779
        %v2442 = vsel %vm2342, %v2186, %v1783
        %v2443 = vsel %vm2342, %v2187, %v1785
        %v2444 = vsel %vm2343, %v2188, %v1787
        %v2445 = vsel %vm2343, %v2189, %v1789
        %v2446 = vsel %vm2344, %v2190, %v1793
        %v2447 = vsel %vm2344, %v2191, %v1795
        %v2448 = vsel %vm2345, %v2192, %v1797
        %v2449 = vsel %vm2345, %v2193, %v1799
        %v2450 = vsel %vm2346, %v2194, %v1803
        %v2451 = vsel %vm2346, %v2195, %v1805
        %v2452 = vsel %vm2347, %v2196, %v1807
        %v2453 = vsel %vm2347, %v2197, %v1809
        %v2454 = vsel %vm2348, %v2198, %v1813
        %v2455 = vsel %vm2348, %v2199, %v1815
        %v2456 = vsel %vm2349, %v2200, %v1817
        %v2457 = vsel %vm2349, %v2201, %v1819
        %v2458 = vsel %vm2350, %v2202, %v1823
        %v2459 = vsel %vm2350, %v2203, %v1825
        %v2460 = vsel %vm2351, %v2204, %v1827
        %v2461 = vsel %vm2351, %v2205, %v1829
        %v2462 = vsel %vm2352, %v2206, %v1833
        %v2463 = vsel %vm2352, %v2207, %v1835
        %v2464 = vsel %vm2353, %v2208, %v1837
        %v2465 = vsel %vm2353, %v2209, %v1839
        %v2466 = vsel %vm2354, %v2210, %v1843
        %v2467 = vsel %vm2354, %v2211, %v1845
        %v2468 = vsel %vm2355, %v2212, %v1847
        %v2469 = vsel %vm2355, %v2213, %v1849
        %v2470 = vsel %vm2356, %v2214, %v1853
        %v2471 = vsel %vm2356, %v2215, %v1855
        %v2472 = vsel %vm2357, %v2216, %v1857
        %v2473 = vsel %vm2357, %v2217, %v1859
        %v2474 = vsel %vm2358, %v2218, %v1863
        %v2475 = vsel %vm2358, %v2219, %v1865
        %v2476 = vsel %vm2359, %v2220, %v1867
        %v2477 = vsel %vm2359, %v2221, %v1869
        %v2478 = vsel %vm2360, %v2222, %v1873
        %v2479 = vsel %vm2360, %v2223, %v1875
        %v2480 = vsel %vm2361, %v2224, %v1877
        %v2481 = vsel %vm2361, %v2225, %v1879
        %v2482 = vsel %vm2362, %v2226, %v1883
        %v2483 = vsel %vm2362, %v2227, %v1885
        %v2484 = vsel %vm2363, %v2228, %v1887
        %v2485 = vsel %vm2363, %v2229, %v1889
        %v2486 = vsel %vm2364, %v2230, %v1893
        %v2487 = vsel %vm2364, %v2231, %v1895
        %v2488 = vsel %vm2365, %v2232, %v1897
        %v2489 = vsel %vm2365, %v2233, %v1899
        %v2490 = vsel %vm2366, %v2234, %v1903
        %v2491 = vsel %vm2366, %v2235, %v1905
        %v2492 = vsel %vm2367, %v2236, %v1907
        %v2493 = vsel %vm2367, %v2237, %v1909
        %v2494 = vsel %vm2368, %v2238, %v1913
        %v2495 = vsel %vm2368, %v2239, %v1915
        %v2496 = vsel %vm2369, %v2240, %v1917
        %v2497 = vsel %vm2369, %v2241, %v1919
        %v2498 = vpack.c.bf16 %v2372, %v2370
        %v2499 = vpack.c.bf16 %v2373, %v2371
        %v2500 = vpack.c.bf16 %v2376, %v2374
        %v2501 = vpack.c.bf16 %v2377, %v2375
        %v2502 = vpack.c.bf16 %v2380, %v2378
        %v2503 = vpack.c.bf16 %v2381, %v2379
        %v2504 = vpack.c.bf16 %v2384, %v2382
        %v2505 = vpack.c.bf16 %v2385, %v2383
        %v2506 = vpack.c.bf16 %v2388, %v2386
        %v2507 = vpack.c.bf16 %v2389, %v2387
        %v2508 = vpack.c.bf16 %v2392, %v2390
        %v2509 = vpack.c.bf16 %v2393, %v2391
        %v2510 = vpack.c.bf16 %v2396, %v2394
        %v2511 = vpack.c.bf16 %v2397, %v2395
        %v2512 = vpack.c.bf16 %v2400, %v2398
        %v2513 = vpack.c.bf16 %v2401, %v2399
        %v2514 = vpack.c.bf16 %v2404, %v2402
        %v2515 = vpack.c.bf16 %v2405, %v2403
        %v2516 = vpack.c.bf16 %v2408, %v2406
        %v2517 = vpack.c.bf16 %v2409, %v2407
        %v2518 = vpack.c.bf16 %v2412, %v2410
        %v2519 = vpack.c.bf16 %v2413, %v2411
        %v2520 = vpack.c.bf16 %v2416, %v2414
        %v2521 = vpack.c.bf16 %v2417, %v2415
        %v2522 = vpack.c.bf16 %v2420, %v2418
        %v2523 = vpack.c.bf16 %v2421, %v2419
        %v2524 = vpack.c.bf16 %v2424, %v2422
        %v2525 = vpack.c.bf16 %v2425, %v2423
        %v2526 = vpack.c.bf16 %v2428, %v2426
        %v2527 = vpack.c.bf16 %v2429, %v2427
        %v2528 = vpack.c.bf16 %v2432, %v2430
        %v2529 = vpack.c.bf16 %v2433, %v2431
        %v2530 = vpack.c.bf16 %v2436, %v2434
        %v2531 = vpack.c.bf16 %v2437, %v2435
        %v2532 = vpack.c.bf16 %v2440, %v2438
        %v2533 = vpack.c.bf16 %v2441, %v2439
        %v2534 = vpack.c.bf16 %v2444, %v2442
        %v2535 = vpack.c.bf16 %v2445, %v2443
        %v2536 = vpack.c.bf16 %v2448, %v2446
        %v2537 = vpack.c.bf16 %v2449, %v2447
        %v2538 = vpack.c.bf16 %v2452, %v2450
        %v2539 = vpack.c.bf16 %v2453, %v2451
        %v2540 = vpack.c.bf16 %v2456, %v2454
        %v2541 = vpack.c.bf16 %v2457, %v2455
        %v2542 = vpack.c.bf16 %v2460, %v2458
        %v2543 = vpack.c.bf16 %v2461, %v2459
        %v2544 = vpack.c.bf16 %v2464, %v2462
        %v2545 = vpack.c.bf16 %v2465, %v2463
        %v2546 = vpack.c.bf16 %v2468, %v2466
        %v2547 = vpack.c.bf16 %v2469, %v2467
        %v2548 = vpack.c.bf16 %v2472, %v2470
        %v2549 = vpack.c.bf16 %v2473, %v2471
        %v2550 = vpack.c.bf16 %v2476, %v2474
        %v2551 = vpack.c.bf16 %v2477, %v2475
        %v2552 = vpack.c.bf16 %v2480, %v2478
        %v2553 = vpack.c.bf16 %v2481, %v2479
        %v2554 = vpack.c.bf16 %v2484, %v2482
        %v2555 = vpack.c.bf16 %v2485, %v2483
        %v2556 = vpack.c.bf16 %v2488, %v2486
        %v2557 = vpack.c.bf16 %v2489, %v2487
        %v2558 = vpack.c.bf16 %v2492, %v2490
        %v2559 = vpack.c.bf16 %v2493, %v2491
        %v2560 = vpack.c.bf16 %v2496, %v2494
        %v2561 = vpack.c.bf16 %v2497, %v2495
        %v2562 = vld [vmem:[#allocation8] sm:$0xf]
        %v2563 = vld [vmem:[#allocation8 + $0x4] sm:$0xf]
        %v2564 = vld [vmem:[#allocation8 + $0x8] sm:$0xf]
        %v2565 = vld [vmem:[#allocation8 + $0xc] sm:$0xf]
        %v2566 = vld [vmem:[#allocation8 + $0x10] sm:$0xf]
        %v2567 = vld [vmem:[#allocation8 + $0x14] sm:$0xf]
        %v2568 = vld [vmem:[#allocation8 + $0x18] sm:$0xf]
        %v2569 = vld [vmem:[#allocation8 + $0x1c] sm:$0xf]
        %v2570 = vld [vmem:[#allocation8 + $0x20] sm:$0xf]
        %v2571 = vld [vmem:[#allocation8 + $0x24] sm:$0xf]
        %v2572 = vld [vmem:[#allocation8 + $0x28] sm:$0xf]
        %v2573 = vld [vmem:[#allocation8 + $0x2c] sm:$0xf]
        %v2574 = vld [vmem:[#allocation8 + $0x30] sm:$0xf]
        %v2575 = vld [vmem:[#allocation8 + $0x34] sm:$0xf]
        %v2576 = vld [vmem:[#allocation8 + $0x38] sm:$0xf]
        %v2577 = vld [vmem:[#allocation8 + $0x3c] sm:$0xf]
        %v2578 = vld [vmem:[#allocation8 + $0x40] sm:$0xf]
        %v2579 = vld [vmem:[#allocation8 + $0x44] sm:$0xf]
        %v2580 = vld [vmem:[#allocation8 + $0x48] sm:$0xf]
        %v2581 = vld [vmem:[#allocation8 + $0x4c] sm:$0xf]
        %v2582 = vld [vmem:[#allocation8 + $0x50] sm:$0xf]
        %v2583 = vld [vmem:[#allocation8 + $0x54] sm:$0xf]
        %v2584 = vld [vmem:[#allocation8 + $0x58] sm:$0xf]
        %v2585 = vld [vmem:[#allocation8 + $0x5c] sm:$0xf]
        %v2586 = vld [vmem:[#allocation8 + $0x60] sm:$0xf]
        %v2587 = vld [vmem:[#allocation8 + $0x64] sm:$0xf]
        %v2588 = vld [vmem:[#allocation8 + $0x68] sm:$0xf]
        %v2589 = vld [vmem:[#allocation8 + $0x6c] sm:$0xf]
        %v2590 = vld [vmem:[#allocation8 + $0x70] sm:$0xf]
        %v2591 = vld [vmem:[#allocation8 + $0x74] sm:$0xf]
        %v2592 = vld [vmem:[#allocation8 + $0x78] sm:$0xf]
        %v2593 = vld [vmem:[#allocation8 + $0x7c] sm:$0xf]
        %v2626 = vunpack.c.l.b16 %v2562
        %v2627 = vunpack.c.l.b16 %v2563
        %v2628 = vunpack.c.l.b16 %v2564
        %v2629 = vunpack.c.l.b16 %v2565
        %v2630 = vunpack.c.l.b16 %v2566
        %v2631 = vunpack.c.l.b16 %v2567
        %v2632 = vunpack.c.l.b16 %v2568
        %v2633 = vunpack.c.l.b16 %v2569
        %v2634 = vunpack.c.l.b16 %v2570
        %v2635 = vunpack.c.l.b16 %v2571
        %v2636 = vunpack.c.l.b16 %v2572
        %v2637 = vunpack.c.l.b16 %v2573
        %v2638 = vunpack.c.l.b16 %v2574
        %v2639 = vunpack.c.l.b16 %v2575
        %v2640 = vunpack.c.l.b16 %v2576
        %v2641 = vunpack.c.l.b16 %v2577
        %v2642 = vunpack.c.l.b16 %v2578
        %v2643 = vunpack.c.l.b16 %v2579
        %v2644 = vunpack.c.l.b16 %v2580
        %v2645 = vunpack.c.l.b16 %v2581
        %v2646 = vunpack.c.l.b16 %v2582
        %v2647 = vunpack.c.l.b16 %v2583
        %v2648 = vunpack.c.l.b16 %v2584
        %v2649 = vunpack.c.l.b16 %v2585
        %v2650 = vunpack.c.l.b16 %v2586
        %v2651 = vunpack.c.l.b16 %v2587
        %v2652 = vunpack.c.l.b16 %v2588
        %v2653 = vunpack.c.l.b16 %v2589
        %v2654 = vunpack.c.l.b16 %v2590
        %v2655 = vunpack.c.l.b16 %v2591
        %v2656 = vunpack.c.l.b16 %v2592
        %v2657 = vunpack.c.l.b16 %v2593
        %v2658 = vpack.c.b16 %v2627, %v2626
        %v2659 = vpack.c.b16 %v2629, %v2628
        %v2660 = vpack.c.b16 %v2631, %v2630
        %v2661 = vpack.c.b16 %v2633, %v2632
        %v2662 = vpack.c.b16 %v2635, %v2634
        %v2663 = vpack.c.b16 %v2637, %v2636
        %v2664 = vpack.c.b16 %v2639, %v2638
        %v2665 = vpack.c.b16 %v2641, %v2640
        %v2666 = vpack.c.b16 %v2643, %v2642
        %v2667 = vpack.c.b16 %v2645, %v2644
        %v2668 = vpack.c.b16 %v2647, %v2646
        %v2669 = vpack.c.b16 %v2649, %v2648
        %v2670 = vpack.c.b16 %v2651, %v2650
        %v2671 = vpack.c.b16 %v2653, %v2652
        %v2672 = vpack.c.b16 %v2655, %v2654
        %v2673 = vpack.c.b16 %v2657, %v2656
        %2690 = vmatprep.subr.bf16.mxu0 0
        %2691 = vmatpush1.bf16.msra.mxu0 %v2658
        %2692 = vmatprep.subr.bf16.mxu0 0
        %2693 = vmatpush1.bf16.msra.mxu0 %v2659
        %2694 = vmatprep.subr.bf16.mxu0 0
        %2695 = vmatpush1.bf16.msra.mxu0 %v2660
        %2696 = vmatprep.subr.bf16.mxu0 0
        %2697 = vmatpush1.bf16.msra.mxu0 %v2661
        %2698 = vmatprep.subr.bf16.mxu0 0
        %2699 = vmatpush1.bf16.msra.mxu0 %v2662
        %2700 = vmatprep.subr.bf16.mxu0 0
        %2701 = vmatpush1.bf16.msra.mxu0 %v2663
        %2702 = vmatprep.subr.bf16.mxu0 0
        %2703 = vmatpush1.bf16.msra.mxu0 %v2664
        %2704 = vmatprep.subr.bf16.mxu0 0
        %2705 = vmatpush1.bf16.msra.mxu0 %v2665
        %2706 = vmatprep.subr.bf16.mxu0 0
        %2707 = vmatpush1.bf16.msra.mxu0 %v2666
        %2708 = vmatprep.subr.bf16.mxu0 0
        %2709 = vmatpush1.bf16.msra.mxu0 %v2667
        %2710 = vmatprep.subr.bf16.mxu0 0
        %2711 = vmatpush1.bf16.msra.mxu0 %v2668
        %2712 = vmatprep.subr.bf16.mxu0 0
        %2713 = vmatpush1.bf16.msra.mxu0 %v2669
        %2714 = vmatprep.subr.bf16.mxu0 0
        %2715 = vmatpush1.bf16.msra.mxu0 %v2670
        %2716 = vmatprep.subr.bf16.mxu0 0
        %2717 = vmatpush1.bf16.msra.mxu0 %v2671
        %2718 = vmatprep.subr.bf16.mxu0 0
        %2719 = vmatpush1.bf16.msra.mxu0 %v2672
        %2720 = vmatprep.subr.bf16.mxu0 0
        %2721 = vmatpush1.bf16.msra.mxu0 %v2673
        %2722 = vmatprep.mubr.bf16.mxu0 %v2499
        %2723 = vmatmul.mubr.bf16.gmra.mrb[0].mxu0 %v2498
        %v2724 = vpop.f32.mrb[0].mxu0
        %v2725 = vadd.f32 0.0, %v2724
        %v2726 = vpop.f32.mrb[0].mxu0
        %v2727 = vpop.f32.mrb[0].mxu0
        %v2728 = vadd.f32 0.0, %v2727
        %v2729 = vpop.f32.mrb[0].mxu0
        %2730 = vmatprep.mubr.bf16.mxu0 %v2501
        %2731 = vmatmul.mubr.bf16.gmra.mrb[0].mxu0 %v2500
        %v2732 = vpop.f32.mrb[0].mxu0
        %v2733 = vadd.f32 0.0, %v2732
        %v2734 = vpop.f32.mrb[0].mxu0
        %v2735 = vpop.f32.mrb[0].mxu0
        %v2736 = vadd.f32 0.0, %v2735
        %v2737 = vpop.f32.mrb[0].mxu0
        %2738 = vmatprep.mubr.bf16.mxu0 %v2503
        %2739 = vmatmul.mubr.bf16.gmra.mrb[0].mxu0 %v2502
        %v2740 = vpop.f32.mrb[0].mxu0
        %v2741 = vadd.f32 0.0, %v2740
        %v2742 = vpop.f32.mrb[0].mxu0
        %v2743 = vpop.f32.mrb[0].mxu0
        %v2744 = vadd.f32 0.0, %v2743
        %v2745 = vpop.f32.mrb[0].mxu0
        %2746 = vmatprep.mubr.bf16.mxu0 %v2505
        %2747 = vmatmul.mubr.bf16.gmra.mrb[0].mxu0 %v2504
        %v2748 = vpop.f32.mrb[0].mxu0
        %v2749 = vadd.f32 0.0, %v2748
        %v2750 = vpop.f32.mrb[0].mxu0
        %v2751 = vpop.f32.mrb[0].mxu0
        %v2752 = vadd.f32 0.0, %v2751
        %v2753 = vpop.f32.mrb[0].mxu0
        %2754 = vmatprep.mubr.bf16.mxu0 %v2507
        %2755 = vmatmul.mubr.bf16.gmra.mrb[0].mxu0 %v2506
        %v2756 = vpop.f32.mrb[0].mxu0
        %v2757 = vadd.f32 0.0, %v2756
        %v2758 = vpop.f32.mrb[0].mxu0
        %v2759 = vpop.f32.mrb[0].mxu0
        %v2760 = vadd.f32 0.0, %v2759
        %v2761 = vpop.f32.mrb[0].mxu0
        %2762 = vmatprep.mubr.bf16.mxu0 %v2509
        %2763 = vmatmul.mubr.bf16.gmra.mrb[0].mxu0 %v2508
        %v2764 = vpop.f32.mrb[0].mxu0
        %v2765 = vadd.f32 0.0, %v2764
        %v2766 = vpop.f32.mrb[0].mxu0
        %v2767 = vpop.f32.mrb[0].mxu0
        %v2768 = vadd.f32 0.0, %v2767
        %v2769 = vpop.f32.mrb[0].mxu0
        %2770 = vmatprep.mubr.bf16.mxu0 %v2511
        %2771 = vmatmul.mubr.bf16.gmra.mrb[0].mxu0 %v2510
        %v2772 = vpop.f32.mrb[0].mxu0
        %v2773 = vadd.f32 0.0, %v2772
        %v2774 = vpop.f32.mrb[0].mxu0
        %v2775 = vpop.f32.mrb[0].mxu0
        %v2776 = vadd.f32 0.0, %v2775
        %v2777 = vpop.f32.mrb[0].mxu0
        %2778 = vmatprep.mubr.bf16.mxu0 %v2513
        %2779 = vmatmul.mubr.bf16.gmra.mrb[0].mxu0 %v2512
        %v2780 = vpop.f32.mrb[0].mxu0
        %v2781 = vadd.f32 0.0, %v2780
        %v2782 = vpop.f32.mrb[0].mxu0
        %v2783 = vpop.f32.mrb[0].mxu0
        %v2784 = vadd.f32 0.0, %v2783
        %v2785 = vpop.f32.mrb[0].mxu0
        %2786 = vmatprep.mubr.bf16.mxu0 %v2515
        %2787 = vmatmul.mubr.bf16.gmra.mrb[0].mxu0 %v2514
        %v2788 = vpop.f32.mrb[0].mxu0
        %v2789 = vadd.f32 0.0, %v2788
        %v2790 = vpop.f32.mrb[0].mxu0
        %v2791 = vpop.f32.mrb[0].mxu0
        %v2792 = vadd.f32 0.0, %v2791
        %v2793 = vpop.f32.mrb[0].mxu0
        %2794 = vmatprep.mubr.bf16.mxu0 %v2517
        %2795 = vmatmul.mubr.bf16.gmra.mrb[0].mxu0 %v2516
        %v2796 = vpop.f32.mrb[0].mxu0
        %v2797 = vadd.f32 0.0, %v2796
        %v2798 = vpop.f32.mrb[0].mxu0
        %v2799 = vpop.f32.mrb[0].mxu0
        %v2800 = vadd.f32 0.0, %v2799
        %v2801 = vpop.f32.mrb[0].mxu0
        %2802 = vmatprep.mubr.bf16.mxu0 %v2519
        %2803 = vmatmul.mubr.bf16.gmra.mrb[0].mxu0 %v2518
        %v2804 = vpop.f32.mrb[0].mxu0
        %v2805 = vadd.f32 0.0, %v2804
        %v2806 = vpop.f32.mrb[0].mxu0
        %v2807 = vpop.f32.mrb[0].mxu0
        %v2808 = vadd.f32 0.0, %v2807
        %v2809 = vpop.f32.mrb[0].mxu0
        %2810 = vmatprep.mubr.bf16.mxu0 %v2521
        %2811 = vmatmul.mubr.bf16.gmra.mrb[0].mxu0 %v2520
        %v2812 = vpop.f32.mrb[0].mxu0
        %v2813 = vadd.f32 0.0, %v2812
        %v2814 = vpop.f32.mrb[0].mxu0
        %v2815 = vpop.f32.mrb[0].mxu0
        %v2816 = vadd.f32 0.0, %v2815
        %v2817 = vpop.f32.mrb[0].mxu0
        %2818 = vmatprep.mubr.bf16.mxu0 %v2523
        %2819 = vmatmul.mubr.bf16.gmra.mrb[0].mxu0 %v2522
        %v2820 = vpop.f32.mrb[0].mxu0
        %v2821 = vadd.f32 0.0, %v2820
        %v2822 = vpop.f32.mrb[0].mxu0
        %v2823 = vpop.f32.mrb[0].mxu0
        %v2824 = vadd.f32 0.0, %v2823
        %v2825 = vpop.f32.mrb[0].mxu0
        %2826 = vmatprep.mubr.bf16.mxu0 %v2525
        %2827 = vmatmul.mubr.bf16.gmra.mrb[0].mxu0 %v2524
        %v2828 = vpop.f32.mrb[0].mxu0
        %v2829 = vadd.f32 0.0, %v2828
        %v2830 = vpop.f32.mrb[0].mxu0
        %v2831 = vpop.f32.mrb[0].mxu0
        %v2832 = vadd.f32 0.0, %v2831
        %v2833 = vpop.f32.mrb[0].mxu0
        %2834 = vmatprep.mubr.bf16.mxu0 %v2527
        %2835 = vmatmul.mubr.bf16.gmra.mrb[0].mxu0 %v2526
        %v2836 = vpop.f32.mrb[0].mxu0
        %v2837 = vadd.f32 0.0, %v2836
        %v2838 = vpop.f32.mrb[0].mxu0
        %v2839 = vpop.f32.mrb[0].mxu0
        %v2840 = vadd.f32 0.0, %v2839
        %v2841 = vpop.f32.mrb[0].mxu0
        %2842 = vmatprep.mubr.bf16.mxu0 %v2529
        %2843 = vmatmul.mubr.bf16.gmra.mrb[0].mxu0 %v2528
        %v2844 = vpop.f32.mrb[0].mxu0
        %v2845 = vadd.f32 0.0, %v2844
        %v2846 = vpop.f32.mrb[0].mxu0
        %v2847 = vpop.f32.mrb[0].mxu0
        %v2848 = vadd.f32 0.0, %v2847
        %v2849 = vpop.f32.mrb[0].mxu0
        %2850 = vmatprep.mubr.bf16.mxu0 %v2531
        %2851 = vmatmul.mubr.bf16.gmra.mrb[0].mxu0 %v2530
        %v2852 = vpop.f32.mrb[0].mxu0
        %v2853 = vadd.f32 0.0, %v2852
        %v2854 = vpop.f32.mrb[0].mxu0
        %v2855 = vpop.f32.mrb[0].mxu0
        %v2856 = vadd.f32 0.0, %v2855
        %v2857 = vpop.f32.mrb[0].mxu0
        %2858 = vmatprep.mubr.bf16.mxu0 %v2533
        %2859 = vmatmul.mubr.bf16.gmra.mrb[0].mxu0 %v2532
        %v2860 = vpop.f32.mrb[0].mxu0
        %v2861 = vadd.f32 0.0, %v2860
        %v2862 = vpop.f32.mrb[0].mxu0
        %v2863 = vpop.f32.mrb[0].mxu0
        %v2864 = vadd.f32 0.0, %v2863
        %v2865 = vpop.f32.mrb[0].mxu0
        %2866 = vmatprep.mubr.bf16.mxu0 %v2535
        %2867 = vmatmul.mubr.bf16.gmra.mrb[0].mxu0 %v2534
        %v2868 = vpop.f32.mrb[0].mxu0
        %v2869 = vadd.f32 0.0, %v2868
        %v2870 = vpop.f32.mrb[0].mxu0
        %v2871 = vpop.f32.mrb[0].mxu0
        %v2872 = vadd.f32 0.0, %v2871
        %v2873 = vpop.f32.mrb[0].mxu0
        %2874 = vmatprep.mubr.bf16.mxu0 %v2537
        %2875 = vmatmul.mubr.bf16.gmra.mrb[0].mxu0 %v2536
        %v2876 = vpop.f32.mrb[0].mxu0
        %v2877 = vadd.f32 0.0, %v2876
        %v2878 = vpop.f32.mrb[0].mxu0
        %v2879 = vpop.f32.mrb[0].mxu0
        %v2880 = vadd.f32 0.0, %v2879
        %v2881 = vpop.f32.mrb[0].mxu0
        %2882 = vmatprep.mubr.bf16.mxu0 %v2539
        %2883 = vmatmul.mubr.bf16.gmra.mrb[0].mxu0 %v2538
        %v2884 = vpop.f32.mrb[0].mxu0
        %v2885 = vadd.f32 0.0, %v2884
        %v2886 = vpop.f32.mrb[0].mxu0
        %v2887 = vpop.f32.mrb[0].mxu0
        %v2888 = vadd.f32 0.0, %v2887
        %v2889 = vpop.f32.mrb[0].mxu0
        %2890 = vmatprep.mubr.bf16.mxu0 %v2541
        %2891 = vmatmul.mubr.bf16.gmra.mrb[0].mxu0 %v2540
        %v2892 = vpop.f32.mrb[0].mxu0
        %v2893 = vadd.f32 0.0, %v2892
        %v2894 = vpop.f32.mrb[0].mxu0
        %v2895 = vpop.f32.mrb[0].mxu0
        %v2896 = vadd.f32 0.0, %v2895
        %v2897 = vpop.f32.mrb[0].mxu0
        %2898 = vmatprep.mubr.bf16.mxu0 %v2543
        %2899 = vmatmul.mubr.bf16.gmra.mrb[0].mxu0 %v2542
        %v2900 = vpop.f32.mrb[0].mxu0
        %v2901 = vadd.f32 0.0, %v2900
        %v2902 = vpop.f32.mrb[0].mxu0
        %v2903 = vpop.f32.mrb[0].mxu0
        %v2904 = vadd.f32 0.0, %v2903
        %v2905 = vpop.f32.mrb[0].mxu0
        %2906 = vmatprep.mubr.bf16.mxu0 %v2545
        %2907 = vmatmul.mubr.bf16.gmra.mrb[0].mxu0 %v2544
        %v2908 = vpop.f32.mrb[0].mxu0
        %v2909 = vadd.f32 0.0, %v2908
        %v2910 = vpop.f32.mrb[0].mxu0
        %v2911 = vpop.f32.mrb[0].mxu0
        %v2912 = vadd.f32 0.0, %v2911
        %v2913 = vpop.f32.mrb[0].mxu0
        %2914 = vmatprep.mubr.bf16.mxu0 %v2547
        %2915 = vmatmul.mubr.bf16.gmra.mrb[0].mxu0 %v2546
        %v2916 = vpop.f32.mrb[0].mxu0
        %v2917 = vadd.f32 0.0, %v2916
        %v2918 = vpop.f32.mrb[0].mxu0
        %v2919 = vpop.f32.mrb[0].mxu0
        %v2920 = vadd.f32 0.0, %v2919
        %v2921 = vpop.f32.mrb[0].mxu0
        %2922 = vmatprep.mubr.bf16.mxu0 %v2549
        %2923 = vmatmul.mubr.bf16.gmra.mrb[0].mxu0 %v2548
        %v2924 = vpop.f32.mrb[0].mxu0
        %v2925 = vadd.f32 0.0, %v2924
        %v2926 = vpop.f32.mrb[0].mxu0
        %v2927 = vpop.f32.mrb[0].mxu0
        %v2928 = vadd.f32 0.0, %v2927
        %v2929 = vpop.f32.mrb[0].mxu0
        %2930 = vmatprep.mubr.bf16.mxu0 %v2551
        %2931 = vmatmul.mubr.bf16.gmra.mrb[0].mxu0 %v2550
        %v2932 = vpop.f32.mrb[0].mxu0
        %v2933 = vadd.f32 0.0, %v2932
        %v2934 = vpop.f32.mrb[0].mxu0
        %v2935 = vpop.f32.mrb[0].mxu0
        %v2936 = vadd.f32 0.0, %v2935
        %v2937 = vpop.f32.mrb[0].mxu0
        %2938 = vmatprep.mubr.bf16.mxu0 %v2553
        %2939 = vmatmul.mubr.bf16.gmra.mrb[0].mxu0 %v2552
        %v2940 = vpop.f32.mrb[0].mxu0
        %v2941 = vadd.f32 0.0, %v2940
        %v2942 = vpop.f32.mrb[0].mxu0
        %v2943 = vpop.f32.mrb[0].mxu0
        %v2944 = vadd.f32 0.0, %v2943
        %v2945 = vpop.f32.mrb[0].mxu0
        %2946 = vmatprep.mubr.bf16.mxu0 %v2555
        %2947 = vmatmul.mubr.bf16.gmra.mrb[0].mxu0 %v2554
        %v2948 = vpop.f32.mrb[0].mxu0
        %v2949 = vadd.f32 0.0, %v2948
        %v2950 = vpop.f32.mrb[0].mxu0
        %v2951 = vpop.f32.mrb[0].mxu0
        %v2952 = vadd.f32 0.0, %v2951
        %v2953 = vpop.f32.mrb[0].mxu0
        %2954 = vmatprep.mubr.bf16.mxu0 %v2557
        %2955 = vmatmul.mubr.bf16.gmra.mrb[0].mxu0 %v2556
        %v2956 = vpop.f32.mrb[0].mxu0
        %v2957 = vadd.f32 0.0, %v2956
        %v2958 = vpop.f32.mrb[0].mxu0
        %v2959 = vpop.f32.mrb[0].mxu0
        %v2960 = vadd.f32 0.0, %v2959
        %v2961 = vpop.f32.mrb[0].mxu0
        %2962 = vmatprep.mubr.bf16.mxu0 %v2559
        %2963 = vmatmul.mubr.bf16.gmra.mrb[0].mxu0 %v2558
        %v2964 = vpop.f32.mrb[0].mxu0
        %v2965 = vadd.f32 0.0, %v2964
        %v2966 = vpop.f32.mrb[0].mxu0
        %v2967 = vpop.f32.mrb[0].mxu0
        %v2968 = vadd.f32 0.0, %v2967
        %v2969 = vpop.f32.mrb[0].mxu0
        %2970 = vmatprep.mubr.bf16.mxu0 %v2561
        %2971 = vmatmul.mubr.bf16.gmra.mrb[0].mxu0 %v2560
        %v2972 = vpop.f32.mrb[0].mxu0
        %v2973 = vadd.f32 0.0, %v2972
        %v2974 = vpop.f32.mrb[0].mxu0
        %v2975 = vpop.f32.mrb[0].mxu0
        %v2976 = vadd.f32 0.0, %v2975
        %v2977 = vpop.f32.mrb[0].mxu0
        %2978 = vdwg.mxu0
        %v2979 = vmul.f32 %v2725, 0.25
        %v2980 = vmul.f32 %v2728, 0.25
        %v2981 = vmul.f32 %v2733, 0.25
        %v2982 = vmul.f32 %v2736, 0.25
        %v2983 = vmul.f32 %v2741, 0.25
        %v2984 = vmul.f32 %v2744, 0.25
        %v2985 = vmul.f32 %v2749, 0.25
        %v2986 = vmul.f32 %v2752, 0.25
        %v2987 = vmul.f32 %v2757, 0.25
        %v2988 = vmul.f32 %v2760, 0.25
        %v2989 = vmul.f32 %v2765, 0.25
        %v2990 = vmul.f32 %v2768, 0.25
        %v2991 = vmul.f32 %v2773, 0.25
        %v2992 = vmul.f32 %v2776, 0.25
        %v2993 = vmul.f32 %v2781, 0.25
        %v2994 = vmul.f32 %v2784, 0.25
        %v2995 = vmul.f32 %v2789, 0.25
        %v2996 = vmul.f32 %v2792, 0.25
        %v2997 = vmul.f32 %v2797, 0.25
        %v2998 = vmul.f32 %v2800, 0.25
        %v2999 = vmul.f32 %v2805, 0.25
        %v3000 = vmul.f32 %v2808, 0.25
        %v3001 = vmul.f32 %v2813, 0.25
        %v3002 = vmul.f32 %v2816, 0.25
        %v3003 = vmul.f32 %v2821, 0.25
        %v3004 = vmul.f32 %v2824, 0.25
        %v3005 = vmul.f32 %v2829, 0.25
        %v3006 = vmul.f32 %v2832, 0.25
        %v3007 = vmul.f32 %v2837, 0.25
        %v3008 = vmul.f32 %v2840, 0.25
        %v3009 = vmul.f32 %v2845, 0.25
        %v3010 = vmul.f32 %v2848, 0.25
        %v3011 = vpack.c.bf16 %v1923, %v1921
        %v3012 = vpack.c.bf16 %v1924, %v1922
        %v3013 = vpack.c.bf16 %v1927, %v1925
        %v3014 = vpack.c.bf16 %v1928, %v1926
        %v3015 = vpack.c.bf16 %v1931, %v1929
        %v3016 = vpack.c.bf16 %v1932, %v1930
        %v3017 = vpack.c.bf16 %v1935, %v1933
        %v3018 = vpack.c.bf16 %v1936, %v1934
        %v3019 = vpack.c.bf16 %v1939, %v1937
        %v3020 = vpack.c.bf16 %v1940, %v1938
        %v3021 = vpack.c.bf16 %v1943, %v1941
        %v3022 = vpack.c.bf16 %v1944, %v1942
        %v3023 = vpack.c.bf16 %v1947, %v1945
        %v3024 = vpack.c.bf16 %v1948, %v1946
        %v3025 = vpack.c.bf16 %v1951, %v1949
        %v3026 = vpack.c.bf16 %v1952, %v1950
        %v3027 = vpack.c.bf16 %v1955, %v1953
        %v3028 = vpack.c.bf16 %v1956, %v1954
        %v3029 = vpack.c.bf16 %v1959, %v1957
        %v3030 = vpack.c.bf16 %v1960, %v1958
        %v3031 = vpack.c.bf16 %v1963, %v1961
        %v3032 = vpack.c.bf16 %v1964, %v1962
        %v3033 = vpack.c.bf16 %v1967, %v1965
        %v3034 = vpack.c.bf16 %v1968, %v1966
        %v3035 = vpack.c.bf16 %v1971, %v1969
        %v3036 = vpack.c.bf16 %v1972, %v1970
        %v3037 = vpack.c.bf16 %v1975, %v1973
        %v3038 = vpack.c.bf16 %v1976, %v1974
        %v3039 = vpack.c.bf16 %v1979, %v1977
        %v3040 = vpack.c.bf16 %v1980, %v1978
        %v3041 = vpack.c.bf16 %v1983, %v1981
        %v3042 = vpack.c.bf16 %v1984, %v1982
        %v3043 = vpack.c.bf16 %v2980, %v2979
        %v3044 = vpack.c.bf16 %v2982, %v2981
        %v3045 = vpack.c.bf16 %v2984, %v2983
        %v3046 = vpack.c.bf16 %v2986, %v2985
        %v3047 = vpack.c.bf16 %v2988, %v2987
        %v3048 = vpack.c.bf16 %v2990, %v2989
        %v3049 = vpack.c.bf16 %v2992, %v2991
        %v3050 = vpack.c.bf16 %v2994, %v2993
        %v3051 = vpack.c.bf16 %v2996, %v2995
        %v3052 = vpack.c.bf16 %v2998, %v2997
        %v3053 = vpack.c.bf16 %v3000, %v2999
        %v3054 = vpack.c.bf16 %v3002, %v3001
        %v3055 = vpack.c.bf16 %v3004, %v3003
        %v3056 = vpack.c.bf16 %v3006, %v3005
        %v3057 = vpack.c.bf16 %v3008, %v3007
        %v3058 = vpack.c.bf16 %v3010, %v3009
        %3059 = vmatprep.subr.bf16.mxu0 0
        %3060 = vmatpush1.bf16.msra.mxu0 %v3043
        %3061 = vmatprep.subr.bf16.mxu0 0
        %3062 = vmatpush1.bf16.msra.mxu0 %v3044
        %3063 = vmatprep.subr.bf16.mxu0 0
        %3064 = vmatpush1.bf16.msra.mxu0 %v3045
        %3065 = vmatprep.subr.bf16.mxu0 0
        %3066 = vmatpush1.bf16.msra.mxu0 %v3046
        %3067 = vmatprep.subr.bf16.mxu0 0
        %3068 = vmatpush1.bf16.msra.mxu0 %v3047
        %3069 = vmatprep.subr.bf16.mxu0 0
        %3070 = vmatpush1.bf16.msra.mxu0 %v3048
        %3071 = vmatprep.subr.bf16.mxu0 0
        %3072 = vmatpush1.bf16.msra.mxu0 %v3049
        %3073 = vmatprep.subr.bf16.mxu0 0
        %3074 = vmatpush1.bf16.msra.mxu0 %v3050
        %3075 = vmatprep.subr.bf16.mxu0 0
        %3076 = vmatpush1.bf16.msra.mxu0 %v3051
        %3077 = vmatprep.subr.bf16.mxu0 0
        %3078 = vmatpush1.bf16.msra.mxu0 %v3052
        %3079 = vmatprep.subr.bf16.mxu0 0
        %3080 = vmatpush1.bf16.msra.mxu0 %v3053
        %3081 = vmatprep.subr.bf16.mxu0 0
        %3082 = vmatpush1.bf16.msra.mxu0 %v3054
        %3083 = vmatprep.subr.bf16.mxu0 0
        %3084 = vmatpush1.bf16.msra.mxu0 %v3055
        %3085 = vmatprep.subr.bf16.mxu0 0
        %3086 = vmatpush1.bf16.msra.mxu0 %v3056
        %3087 = vmatprep.subr.bf16.mxu0 0
        %3088 = vmatpush1.bf16.msra.mxu0 %v3057
        %3089 = vmatprep.subr.bf16.mxu0 0
        %3090 = vmatpush1.bf16.msra.mxu0 %v3058
        %3091 = vmatprep.mubr.bf16.mxu0 %v3012
        %3092 = vmatmul.mubr.bf16.gmra.mrb[0].mxu0 %v3011
        %v3093 = vpop.f32.mrb[0].mxu0
        %v3094 = vadd.f32 0.0, %v3093
        %v3095 = vpop.f32.mrb[0].mxu0
        %v3096 = vpop.f32.mrb[0].mxu0
        %v3097 = vadd.f32 0.0, %v3096
        %v3098 = vpop.f32.mrb[0].mxu0
        %3099 = vmatprep.mubr.bf16.mxu0 %v3014
        %3100 = vmatmul.mubr.bf16.gmra.mrb[0].mxu0 %v3013
        %v3101 = vpop.f32.mrb[0].mxu0
        %v3102 = vadd.f32 0.0, %v3101
        %v3103 = vpop.f32.mrb[0].mxu0
        %v3104 = vpop.f32.mrb[0].mxu0
        %v3105 = vadd.f32 0.0, %v3104
        %v3106 = vpop.f32.mrb[0].mxu0
        %3107 = vmatprep.mubr.bf16.mxu0 %v3016
        %3108 = vmatmul.mubr.bf16.gmra.mrb[0].mxu0 %v3015
        %v3109 = vpop.f32.mrb[0].mxu0
        %v3110 = vadd.f32 0.0, %v3109
        %v3111 = vpop.f32.mrb[0].mxu0
        %v3112 = vpop.f32.mrb[0].mxu0
        %v3113 = vadd.f32 0.0, %v3112
        %v3114 = vpop.f32.mrb[0].mxu0
        %3115 = vmatprep.mubr.bf16.mxu0 %v3018
        %3116 = vmatmul.mubr.bf16.gmra.mrb[0].mxu0 %v3017
        %v3117 = vpop.f32.mrb[0].mxu0
        %v3118 = vadd.f32 0.0, %v3117
        %v3119 = vpop.f32.mrb[0].mxu0
        %v3120 = vpop.f32.mrb[0].mxu0
        %v3121 = vadd.f32 0.0, %v3120
        %v3122 = vpop.f32.mrb[0].mxu0
        %3123 = vmatprep.mubr.bf16.mxu0 %v3020
        %3124 = vmatmul.mubr.bf16.gmra.mrb[0].mxu0 %v3019
        %v3125 = vpop.f32.mrb[0].mxu0
        %v3126 = vadd.f32 0.0, %v3125
        %v3127 = vpop.f32.mrb[0].mxu0
        %v3128 = vpop.f32.mrb[0].mxu0
        %v3129 = vadd.f32 0.0, %v3128
        %v3130 = vpop.f32.mrb[0].mxu0
        %3131 = vmatprep.mubr.bf16.mxu0 %v3022
        %3132 = vmatmul.mubr.bf16.gmra.mrb[0].mxu0 %v3021
        %v3133 = vpop.f32.mrb[0].mxu0
        %v3134 = vadd.f32 0.0, %v3133
        %v3135 = vpop.f32.mrb[0].mxu0
        %v3136 = vpop.f32.mrb[0].mxu0
        %v3137 = vadd.f32 0.0, %v3136
        %v3138 = vpop.f32.mrb[0].mxu0
        %3139 = vmatprep.mubr.bf16.mxu0 %v3024
        %3140 = vmatmul.mubr.bf16.gmra.mrb[0].mxu0 %v3023
        %v3141 = vpop.f32.mrb[0].mxu0
        %v3142 = vadd.f32 0.0, %v3141
        %v3143 = vpop.f32.mrb[0].mxu0
        %v3144 = vpop.f32.mrb[0].mxu0
        %v3145 = vadd.f32 0.0, %v3144
        %v3146 = vpop.f32.mrb[0].mxu0
        %3147 = vmatprep.mubr.bf16.mxu0 %v3026
        %3148 = vmatmul.mubr.bf16.gmra.mrb[0].mxu0 %v3025
        %v3149 = vpop.f32.mrb[0].mxu0
        %v3150 = vadd.f32 0.0, %v3149
        %v3151 = vpop.f32.mrb[0].mxu0
        %v3152 = vpop.f32.mrb[0].mxu0
        %v3153 = vadd.f32 0.0, %v3152
        %v3154 = vpop.f32.mrb[0].mxu0
        %3155 = vmatprep.mubr.bf16.mxu0 %v3028
        %3156 = vmatmul.mubr.bf16.gmra.mrb[0].mxu0 %v3027
        %v3157 = vpop.f32.mrb[0].mxu0
        %v3158 = vadd.f32 0.0, %v3157
        %v3159 = vpop.f32.mrb[0].mxu0
        %v3160 = vpop.f32.mrb[0].mxu0
        %v3161 = vadd.f32 0.0, %v3160
        %v3162 = vpop.f32.mrb[0].mxu0
        %3163 = vmatprep.mubr.bf16.mxu0 %v3030
        %3164 = vmatmul.mubr.bf16.gmra.mrb[0].mxu0 %v3029
        %v3165 = vpop.f32.mrb[0].mxu0
        %v3166 = vadd.f32 0.0, %v3165
        %v3167 = vpop.f32.mrb[0].mxu0
        %v3168 = vpop.f32.mrb[0].mxu0
        %v3169 = vadd.f32 0.0, %v3168
        %v3170 = vpop.f32.mrb[0].mxu0
        %3171 = vmatprep.mubr.bf16.mxu0 %v3032
        %3172 = vmatmul.mubr.bf16.gmra.mrb[0].mxu0 %v3031
        %v3173 = vpop.f32.mrb[0].mxu0
        %v3174 = vadd.f32 0.0, %v3173
        %v3175 = vpop.f32.mrb[0].mxu0
        %v3176 = vpop.f32.mrb[0].mxu0
        %v3177 = vadd.f32 0.0, %v3176
        %v3178 = vpop.f32.mrb[0].mxu0
        %3179 = vmatprep.mubr.bf16.mxu0 %v3034
        %3180 = vmatmul.mubr.bf16.gmra.mrb[0].mxu0 %v3033
        %v3181 = vpop.f32.mrb[0].mxu0
        %v3182 = vadd.f32 0.0, %v3181
        %v3183 = vpop.f32.mrb[0].mxu0
        %v3184 = vpop.f32.mrb[0].mxu0
        %v3185 = vadd.f32 0.0, %v3184
        %v3186 = vpop.f32.mrb[0].mxu0
        %3187 = vmatprep.mubr.bf16.mxu0 %v3036
        %3188 = vmatmul.mubr.bf16.gmra.mrb[0].mxu0 %v3035
        %v3189 = vpop.f32.mrb[0].mxu0
        %v3190 = vadd.f32 0.0, %v3189
        %v3191 = vpop.f32.mrb[0].mxu0
        %v3192 = vpop.f32.mrb[0].mxu0
        %v3193 = vadd.f32 0.0, %v3192
        %v3194 = vpop.f32.mrb[0].mxu0
        %3195 = vmatprep.mubr.bf16.mxu0 %v3038
        %3196 = vmatmul.mubr.bf16.gmra.mrb[0].mxu0 %v3037
        %v3197 = vpop.f32.mrb[0].mxu0
        %v3198 = vadd.f32 0.0, %v3197
        %v3199 = vpop.f32.mrb[0].mxu0
        %v3200 = vpop.f32.mrb[0].mxu0
        %v3201 = vadd.f32 0.0, %v3200
        %v3202 = vpop.f32.mrb[0].mxu0
        %3203 = vmatprep.mubr.bf16.mxu0 %v3040
        %3204 = vmatmul.mubr.bf16.gmra.mrb[0].mxu0 %v3039
        %v3205 = vpop.f32.mrb[0].mxu0
        %v3206 = vadd.f32 0.0, %v3205
        %v3207 = vpop.f32.mrb[0].mxu0
        %v3208 = vpop.f32.mrb[0].mxu0
        %v3209 = vadd.f32 0.0, %v3208
        %v3210 = vpop.f32.mrb[0].mxu0
        %3211 = vmatprep.mubr.bf16.mxu0 %v3042
        %3212 = vmatmul.mubr.bf16.gmra.mrb[0].mxu0 %v3041
        %v3213 = vpop.f32.mrb[0].mxu0
        %v3214 = vadd.f32 0.0, %v3213
        %v3215 = vpop.f32.mrb[0].mxu0
        %v3216 = vpop.f32.mrb[0].mxu0
        %v3217 = vadd.f32 0.0, %v3216
        %v3218 = vpop.f32.mrb[0].mxu0
        %3219 = vdwg.mxu0
        %v3220 = vlaneseq
        %v3221 = vand.u32 %v3220, 127
        %vm3222 = vcmp.lt.s32.totalorder %v3221, 110
        %v3223 = vsel %vm3222, 1, 0
        %vm3224 = vcmp.eq.s32.totalorder %v3223, 1
        %v3225 = vsel %vm3224, %v3094, -1e+30
        %v3226 = vsel %vm3224, %v3097, -1e+30
        %v3227 = vsel %vm3224, %v3102, -1e+30
        %v3228 = vsel %vm3224, %v3105, -1e+30
        %v3229 = vsel %vm3224, %v3110, -1e+30
        %v3230 = vsel %vm3224, %v3113, -1e+30
        %v3231 = vsel %vm3224, %v3118, -1e+30
        %v3232 = vsel %vm3224, %v3121, -1e+30
        %v3233 = vsel %vm3224, %v3126, -1e+30
        %v3234 = vsel %vm3224, %v3129, -1e+30
        %v3235 = vsel %vm3224, %v3134, -1e+30
        %v3236 = vsel %vm3224, %v3137, -1e+30
        %v3237 = vsel %vm3224, %v3142, -1e+30
        %v3238 = vsel %vm3224, %v3145, -1e+30
        %v3239 = vsel %vm3224, %v3150, -1e+30
        %v3240 = vsel %vm3224, %v3153, -1e+30
        %v3241 = vsel %vm3224, %v3158, -1e+30
        %v3242 = vsel %vm3224, %v3161, -1e+30
        %v3243 = vsel %vm3224, %v3166, -1e+30
        %v3244 = vsel %vm3224, %v3169, -1e+30
        %v3245 = vsel %vm3224, %v3174, -1e+30
        %v3246 = vsel %vm3224, %v3177, -1e+30
        %v3247 = vsel %vm3224, %v3182, -1e+30
        %v3248 = vsel %vm3224, %v3185, -1e+30
        %v3249 = vsel %vm3224, %v3190, -1e+30
        %v3250 = vsel %vm3224, %v3193, -1e+30
        %v3251 = vsel %vm3224, %v3198, -1e+30
        %v3252 = vsel %vm3224, %v3201, -1e+30
        %v3253 = vsel %vm3224, %v3206, -1e+30
        %v3254 = vsel %vm3224, %v3209, -1e+30
        %v3255 = vsel %vm3224, %v3214, -1e+30
        %v3256 = vsel %vm3224, %v3217, -1e+30
        %3257 = vmax.xlane.f32.xlu0 %v3225
        %v3258 = vpop.xlane.xlu0 %3257
        %3259 = vmax.xlane.f32.xlu0 %v3226
        %v3260 = vpop.xlane.xlu0 %3259
        %3261 = vmax.xlane.f32.xlu0 %v3227
        %v3262 = vpop.xlane.xlu0 %3261
        %3263 = vmax.xlane.f32.xlu0 %v3228
        %v3264 = vpop.xlane.xlu0 %3263
        %3265 = vmax.xlane.f32.xlu0 %v3229
        %v3266 = vpop.xlane.xlu0 %3265
        %3267 = vmax.xlane.f32.xlu0 %v3230
        %v3268 = vpop.xlane.xlu0 %3267
        %3269 = vmax.xlane.f32.xlu0 %v3231
        %v3270 = vpop.xlane.xlu0 %3269
        %3271 = vmax.xlane.f32.xlu0 %v3232
        %v3272 = vpop.xlane.xlu0 %3271
        %3273 = vmax.xlane.f32.xlu0 %v3233
        %v3274 = vpop.xlane.xlu0 %3273
        %3275 = vmax.xlane.f32.xlu0 %v3234
        %v3276 = vpop.xlane.xlu0 %3275
        %3277 = vmax.xlane.f32.xlu0 %v3235
        %v3278 = vpop.xlane.xlu0 %3277
        %3279 = vmax.xlane.f32.xlu0 %v3236
        %v3280 = vpop.xlane.xlu0 %3279
        %3281 = vmax.xlane.f32.xlu0 %v3237
        %v3282 = vpop.xlane.xlu0 %3281
        %3283 = vmax.xlane.f32.xlu0 %v3238
        %v3284 = vpop.xlane.xlu0 %3283
        %3285 = vmax.xlane.f32.xlu0 %v3239
        %v3286 = vpop.xlane.xlu0 %3285
        %3287 = vmax.xlane.f32.xlu0 %v3240
        %v3288 = vpop.xlane.xlu0 %3287
        %3289 = vmax.xlane.f32.xlu0 %v3241
        %v3290 = vpop.xlane.xlu0 %3289
        %3291 = vmax.xlane.f32.xlu0 %v3242
        %v3292 = vpop.xlane.xlu0 %3291
        %3293 = vmax.xlane.f32.xlu0 %v3243
        %v3294 = vpop.xlane.xlu0 %3293
        %3295 = vmax.xlane.f32.xlu0 %v3244
        %v3296 = vpop.xlane.xlu0 %3295
        %3297 = vmax.xlane.f32.xlu0 %v3245
        %v3298 = vpop.xlane.xlu0 %3297
        %3299 = vmax.xlane.f32.xlu0 %v3246
        %v3300 = vpop.xlane.xlu0 %3299
        %3301 = vmax.xlane.f32.xlu0 %v3247
        %v3302 = vpop.xlane.xlu0 %3301
        %3303 = vmax.xlane.f32.xlu0 %v3248
        %v3304 = vpop.xlane.xlu0 %3303
        %3305 = vmax.xlane.f32.xlu0 %v3249
        %v3306 = vpop.xlane.xlu0 %3305
        %3307 = vmax.xlane.f32.xlu0 %v3250
        %v3308 = vpop.xlane.xlu0 %3307
        %3309 = vmax.xlane.f32.xlu0 %v3251
        %v3310 = vpop.xlane.xlu0 %3309
        %3311 = vmax.xlane.f32.xlu0 %v3252
        %v3312 = vpop.xlane.xlu0 %3311
        %3313 = vmax.xlane.f32.xlu0 %v3253
        %v3314 = vpop.xlane.xlu0 %3313
        %3315 = vmax.xlane.f32.xlu0 %v3254
        %v3316 = vpop.xlane.xlu0 %3315
        %3317 = vmax.xlane.f32.xlu0 %v3255
        %v3318 = vpop.xlane.xlu0 %3317
        %3319 = vmax.xlane.f32.xlu0 %v3256
        %v3320 = vpop.xlane.xlu0 %3319
        %v3321 = vsub.f32 %v3225, %v3258
        %v3322 = vsub.f32 %v3226, %v3260
        %v3323 = vsub.f32 %v3227, %v3262
        %v3324 = vsub.f32 %v3228, %v3264
        %v3325 = vsub.f32 %v3229, %v3266
        %v3326 = vsub.f32 %v3230, %v3268
        %v3327 = vsub.f32 %v3231, %v3270
        %v3328 = vsub.f32 %v3232, %v3272
        %v3329 = vsub.f32 %v3233, %v3274
        %v3330 = vsub.f32 %v3234, %v3276
        %v3331 = vsub.f32 %v3235, %v3278
        %v3332 = vsub.f32 %v3236, %v3280
        %v3333 = vsub.f32 %v3237, %v3282
        %v3334 = vsub.f32 %v3238, %v3284
        %v3335 = vsub.f32 %v3239, %v3286
        %v3336 = vsub.f32 %v3240, %v3288
        %v3337 = vsub.f32 %v3241, %v3290
        %v3338 = vsub.f32 %v3242, %v3292
        %v3339 = vsub.f32 %v3243, %v3294
        %v3340 = vsub.f32 %v3244, %v3296
        %v3341 = vsub.f32 %v3245, %v3298
        %v3342 = vsub.f32 %v3246, %v3300
        %v3343 = vsub.f32 %v3247, %v3302
        %v3344 = vsub.f32 %v3248, %v3304
        %v3345 = vsub.f32 %v3249, %v3306
        %v3346 = vsub.f32 %v3250, %v3308
        %v3347 = vsub.f32 %v3251, %v3310
        %v3348 = vsub.f32 %v3252, %v3312
        %v3349 = vsub.f32 %v3253, %v3314
        %v3350 = vsub.f32 %v3254, %v3316
        %v3351 = vsub.f32 %v3255, %v3318
        %v3352 = vsub.f32 %v3256, %v3320
        %v3353 = vmul.f32 %v3321, 1.442695
        %v3354 = vpow.pop %v3353
        %v3355 = vmul.f32 %v3322, 1.442695
        %v3356 = vpow.pop %v3355
        %v3357 = vmul.f32 %v3323, 1.442695
        %v3358 = vpow.pop %v3357
        %v3359 = vmul.f32 %v3324, 1.442695
        %v3360 = vpow.pop %v3359
        %v3361 = vmul.f32 %v3325, 1.442695
        %v3362 = vpow.pop %v3361
        %v3363 = vmul.f32 %v3326, 1.442695
        %v3364 = vpow.pop %v3363
        %v3365 = vmul.f32 %v3327, 1.442695
        %v3366 = vpow.pop %v3365
        %v3367 = vmul.f32 %v3328, 1.442695
        %v3368 = vpow.pop %v3367
        %v3369 = vmul.f32 %v3329, 1.442695
        %v3370 = vpow.pop %v3369
        %v3371 = vmul.f32 %v3330, 1.442695
        %v3372 = vpow.pop %v3371
        %v3373 = vmul.f32 %v3331, 1.442695
        %v3374 = vpow.pop %v3373
        %v3375 = vmul.f32 %v3332, 1.442695
        %v3376 = vpow.pop %v3375
        %v3377 = vmul.f32 %v3333, 1.442695
        %v3378 = vpow.pop %v3377
        %v3379 = vmul.f32 %v3334, 1.442695
        %v3380 = vpow.pop %v3379
        %v3381 = vmul.f32 %v3335, 1.442695
        %v3382 = vpow.pop %v3381
        %v3383 = vmul.f32 %v3336, 1.442695
        %v3384 = vpow.pop %v3383
        %v3385 = vmul.f32 %v3337, 1.442695
        %v3386 = vpow.pop %v3385
        %v3387 = vmul.f32 %v3338, 1.442695
        %v3388 = vpow.pop %v3387
        %v3389 = vmul.f32 %v3339, 1.442695
        %v3390 = vpow.pop %v3389
        %v3391 = vmul.f32 %v3340, 1.442695
        %v3392 = vpow.pop %v3391
        %v3393 = vmul.f32 %v3341, 1.442695
        %v3394 = vpow.pop %v3393
        %v3395 = vmul.f32 %v3342, 1.442695
        %v3396 = vpow.pop %v3395
        %v3397 = vmul.f32 %v3343, 1.442695
        %v3398 = vpow.pop %v3397
        %v3399 = vmul.f32 %v3344, 1.442695
        %v3400 = vpow.pop %v3399
        %v3401 = vmul.f32 %v3345, 1.442695
        %v3402 = vpow.pop %v3401
        %v3403 = vmul.f32 %v3346, 1.442695
        %v3404 = vpow.pop %v3403
        %v3405 = vmul.f32 %v3347, 1.442695
        %v3406 = vpow.pop %v3405
        %v3407 = vmul.f32 %v3348, 1.442695
        %v3408 = vpow.pop %v3407
        %v3409 = vmul.f32 %v3349, 1.442695
        %v3410 = vpow.pop %v3409
        %v3411 = vmul.f32 %v3350, 1.442695
        %v3412 = vpow.pop %v3411
        %v3413 = vmul.f32 %v3351, 1.442695
        %v3414 = vpow.pop %v3413
        %v3415 = vmul.f32 %v3352, 1.442695
        %v3416 = vpow.pop %v3415
        %3417 = vadd.xlane.f32.xlu0 %v3354
        %v3418 = vpop.xlane.xlu0 %3417
        %3419 = vadd.xlane.f32.xlu0 %v3356
        %v3420 = vpop.xlane.xlu0 %3419
        %3421 = vadd.xlane.f32.xlu0 %v3358
        %v3422 = vpop.xlane.xlu0 %3421
        %3423 = vadd.xlane.f32.xlu0 %v3360
        %v3424 = vpop.xlane.xlu0 %3423
        %3425 = vadd.xlane.f32.xlu0 %v3362
        %v3426 = vpop.xlane.xlu0 %3425
        %3427 = vadd.xlane.f32.xlu0 %v3364
        %v3428 = vpop.xlane.xlu0 %3427
        %3429 = vadd.xlane.f32.xlu0 %v3366
        %v3430 = vpop.xlane.xlu0 %3429
        %3431 = vadd.xlane.f32.xlu0 %v3368
        %v3432 = vpop.xlane.xlu0 %3431
        %3433 = vadd.xlane.f32.xlu0 %v3370
        %v3434 = vpop.xlane.xlu0 %3433
        %3435 = vadd.xlane.f32.xlu0 %v3372
        %v3436 = vpop.xlane.xlu0 %3435
        %3437 = vadd.xlane.f32.xlu0 %v3374
        %v3438 = vpop.xlane.xlu0 %3437
        %3439 = vadd.xlane.f32.xlu0 %v3376
        %v3440 = vpop.xlane.xlu0 %3439
        %3441 = vadd.xlane.f32.xlu0 %v3378
        %v3442 = vpop.xlane.xlu0 %3441
        %3443 = vadd.xlane.f32.xlu0 %v3380
        %v3444 = vpop.xlane.xlu0 %3443
        %3445 = vadd.xlane.f32.xlu0 %v3382
        %v3446 = vpop.xlane.xlu0 %3445
        %3447 = vadd.xlane.f32.xlu0 %v3384
        %v3448 = vpop.xlane.xlu0 %3447
        %3449 = vadd.xlane.f32.xlu0 %v3386
        %v3450 = vpop.xlane.xlu0 %3449
        %3451 = vadd.xlane.f32.xlu0 %v3388
        %v3452 = vpop.xlane.xlu0 %3451
        %3453 = vadd.xlane.f32.xlu0 %v3390
        %v3454 = vpop.xlane.xlu0 %3453
        %3455 = vadd.xlane.f32.xlu0 %v3392
        %v3456 = vpop.xlane.xlu0 %3455
        %3457 = vadd.xlane.f32.xlu0 %v3394
        %v3458 = vpop.xlane.xlu0 %3457
        %3459 = vadd.xlane.f32.xlu0 %v3396
        %v3460 = vpop.xlane.xlu0 %3459
        %3461 = vadd.xlane.f32.xlu0 %v3398
        %v3462 = vpop.xlane.xlu0 %3461
        %3463 = vadd.xlane.f32.xlu0 %v3400
        %v3464 = vpop.xlane.xlu0 %3463
        %3465 = vadd.xlane.f32.xlu0 %v3402
        %v3466 = vpop.xlane.xlu0 %3465
        %3467 = vadd.xlane.f32.xlu0 %v3404
        %v3468 = vpop.xlane.xlu0 %3467
        %3469 = vadd.xlane.f32.xlu0 %v3406
        %v3470 = vpop.xlane.xlu0 %3469
        %3471 = vadd.xlane.f32.xlu0 %v3408
        %v3472 = vpop.xlane.xlu0 %3471
        %3473 = vadd.xlane.f32.xlu0 %v3410
        %v3474 = vpop.xlane.xlu0 %3473
        %3475 = vadd.xlane.f32.xlu0 %v3412
        %v3476 = vpop.xlane.xlu0 %3475
        %3477 = vadd.xlane.f32.xlu0 %v3414
        %v3478 = vpop.xlane.xlu0 %3477
        %3479 = vadd.xlane.f32.xlu0 %v3416
        %v3480 = vpop.xlane.xlu0 %3479
        %v3481 = vrcp.pop %v3418
        %v3482 = vrcp.pop %v3420
        %v3483 = vrcp.pop %v3422
        %v3484 = vrcp.pop %v3424
        %v3485 = vrcp.pop %v3426
        %v3486 = vrcp.pop %v3428
        %v3487 = vrcp.pop %v3430
        %v3488 = vrcp.pop %v3432
        %v3489 = vrcp.pop %v3434
        %v3490 = vrcp.pop %v3436
        %v3491 = vrcp.pop %v3438
        %v3492 = vrcp.pop %v3440
        %v3493 = vrcp.pop %v3442
        %v3494 = vrcp.pop %v3444
        %v3495 = vrcp.pop %v3446
        %v3496 = vrcp.pop %v3448
        %v3497 = vrcp.pop %v3450
        %v3498 = vrcp.pop %v3452
        %v3499 = vrcp.pop %v3454
        %v3500 = vrcp.pop %v3456
        %v3501 = vrcp.pop %v3458
        %v3502 = vrcp.pop %v3460
        %v3503 = vrcp.pop %v3462
        %v3504 = vrcp.pop %v3464
        %v3505 = vrcp.pop %v3466
        %v3506 = vrcp.pop %v3468
        %v3507 = vrcp.pop %v3470
        %v3508 = vrcp.pop %v3472
        %v3509 = vrcp.pop %v3474
        %v3510 = vrcp.pop %v3476
        %v3511 = vrcp.pop %v3478
        %v3512 = vrcp.pop %v3480
        %v3513 = vmul.f32 %v3354, %v3481
        %v3514 = vmul.f32 %v3356, %v3482
        %v3515 = vmul.f32 %v3358, %v3483
        %v3516 = vmul.f32 %v3360, %v3484
        %v3517 = vmul.f32 %v3362, %v3485
        %v3518 = vmul.f32 %v3364, %v3486
        %v3519 = vmul.f32 %v3366, %v3487
        %v3520 = vmul.f32 %v3368, %v3488
        %v3521 = vmul.f32 %v3370, %v3489
        %v3522 = vmul.f32 %v3372, %v3490
        %v3523 = vmul.f32 %v3374, %v3491
        %v3524 = vmul.f32 %v3376, %v3492
        %v3525 = vmul.f32 %v3378, %v3493
        %v3526 = vmul.f32 %v3380, %v3494
        %v3527 = vmul.f32 %v3382, %v3495
        %v3528 = vmul.f32 %v3384, %v3496
        %v3529 = vmul.f32 %v3386, %v3497
        %v3530 = vmul.f32 %v3388, %v3498
        %v3531 = vmul.f32 %v3390, %v3499
        %v3532 = vmul.f32 %v3392, %v3500
        %v3533 = vmul.f32 %v3394, %v3501
        %v3534 = vmul.f32 %v3396, %v3502
        %v3535 = vmul.f32 %v3398, %v3503
        %v3536 = vmul.f32 %v3400, %v3504
        %v3537 = vmul.f32 %v3402, %v3505
        %v3538 = vmul.f32 %v3404, %v3506
        %v3539 = vmul.f32 %v3406, %v3507
        %v3540 = vmul.f32 %v3408, %v3508
        %v3541 = vmul.f32 %v3410, %v3509
        %v3542 = vmul.f32 %v3412, %v3510
        %v3543 = vmul.f32 %v3414, %v3511
        %v3544 = vmul.f32 %v3416, %v3512
        %v3545 = vpack.c.bf16 %v3514, %v3513
        %v3546 = vpack.c.bf16 %v3516, %v3515
        %v3547 = vpack.c.bf16 %v3518, %v3517
        %v3548 = vpack.c.bf16 %v3520, %v3519
        %v3549 = vpack.c.bf16 %v3522, %v3521
        %v3550 = vpack.c.bf16 %v3524, %v3523
        %v3551 = vpack.c.bf16 %v3526, %v3525
        %v3552 = vpack.c.bf16 %v3528, %v3527
        %v3553 = vpack.c.bf16 %v3530, %v3529
        %v3554 = vpack.c.bf16 %v3532, %v3531
        %v3555 = vpack.c.bf16 %v3534, %v3533
        %v3556 = vpack.c.bf16 %v3536, %v3535
        %v3557 = vpack.c.bf16 %v3538, %v3537
        %v3558 = vpack.c.bf16 %v3540, %v3539
        %v3559 = vpack.c.bf16 %v3542, %v3541
        %v3560 = vpack.c.bf16 %v3544, %v3543
        %v3561 = vpack.c.bf16 %v2856, %v2853
        %v3562 = vpack.c.bf16 %v2864, %v2861
        %v3563 = vpack.c.bf16 %v2872, %v2869
        %v3564 = vpack.c.bf16 %v2880, %v2877
        %v3565 = vpack.c.bf16 %v2888, %v2885
        %v3566 = vpack.c.bf16 %v2896, %v2893
        %v3567 = vpack.c.bf16 %v2904, %v2901
        %v3568 = vpack.c.bf16 %v2912, %v2909
        %v3569 = vpack.c.bf16 %v2920, %v2917
        %v3570 = vpack.c.bf16 %v2928, %v2925
        %v3571 = vpack.c.bf16 %v2936, %v2933
        %v3572 = vpack.c.bf16 %v2944, %v2941
        %v3573 = vpack.c.bf16 %v2952, %v2949
        %v3574 = vpack.c.bf16 %v2960, %v2957
        %v3575 = vpack.c.bf16 %v2968, %v2965
        %v3576 = vpack.c.bf16 %v2976, %v2973
        %3577 = vmatprep.subr.bf16.mxu0 0
        %3578 = vmatpush1.bf16.xpose.msra.mxu0 %v3561
        %3579 = vmatprep.subr.bf16.mxu0 0
        %3580 = vmatpush1.bf16.xpose.msra.mxu0 %v3562
        %3581 = vmatprep.subr.bf16.mxu0 0
        %3582 = vmatpush1.bf16.xpose.msra.mxu0 %v3563
        %3583 = vmatprep.subr.bf16.mxu0 0
        %3584 = vmatpush1.bf16.xpose.msra.mxu0 %v3564
        %3585 = vmatprep.subr.bf16.mxu0 0
        %3586 = vmatpush1.bf16.xpose.msra.mxu0 %v3565
        %3587 = vmatprep.subr.bf16.mxu0 0
        %3588 = vmatpush1.bf16.xpose.msra.mxu0 %v3566
        %3589 = vmatprep.subr.bf16.mxu0 0
        %3590 = vmatpush1.bf16.xpose.msra.mxu0 %v3567
        %3591 = vmatprep.subr.bf16.mxu0 0
        %3592 = vmatpush1.bf16.xpose.msra.mxu0 %v3568
        %3593 = vmatprep.subr.bf16.mxu0 0
        %3594 = vmatpush1.bf16.xpose.msra.mxu0 %v3569
        %3595 = vmatprep.subr.bf16.mxu0 0
        %3596 = vmatpush1.bf16.xpose.msra.mxu0 %v3570
        %3597 = vmatprep.subr.bf16.mxu0 0
        %3598 = vmatpush1.bf16.xpose.msra.mxu0 %v3571
        %3599 = vmatprep.subr.bf16.mxu0 0
        %3600 = vmatpush1.bf16.xpose.msra.mxu0 %v3572
        %3601 = vmatprep.subr.bf16.mxu0 0
        %3602 = vmatpush1.bf16.xpose.msra.mxu0 %v3573
        %3603 = vmatprep.subr.bf16.mxu0 0
        %3604 = vmatpush1.bf16.xpose.msra.mxu0 %v3574
        %3605 = vmatprep.subr.bf16.mxu0 0
        %3606 = vmatpush1.bf16.xpose.msra.mxu0 %v3575
        %3607 = vmatprep.subr.bf16.mxu0 0
        %3608 = vmatpush1.bf16.xpose.msra.mxu0 %v3576
        %3609 = vmatprep.mubr.bf16.mxu0 0
        %3610 = vmatmul.mubr.bf16.gmra.mrb[0].mxu0 %v3545
        %v3611 = vpop.f32.mrb[0].mxu0
        %v3612 = vadd.f32 0.0, %v3611
        %v3613 = vpop.f32.mrb[0].mxu0
        %v3614 = vadd.f32 0.0, %v3613
        %v3615 = vpop.f32.mrb[0].mxu0
        %v3616 = vadd.f32 0.0, %v3615
        %v3617 = vpop.f32.mrb[0].mxu0
        %v3618 = vadd.f32 0.0, %v3617
        %3619 = vmatprep.mubr.bf16.mxu0 0
        %3620 = vmatmul.mubr.bf16.gmra.mrb[0].mxu0 %v3546
        %v3621 = vpop.f32.mrb[0].mxu0
        %v3622 = vadd.f32 0.0, %v3621
        %v3623 = vpop.f32.mrb[0].mxu0
        %v3624 = vadd.f32 0.0, %v3623
        %v3625 = vpop.f32.mrb[0].mxu0
        %v3626 = vadd.f32 0.0, %v3625
        %v3627 = vpop.f32.mrb[0].mxu0
        %v3628 = vadd.f32 0.0, %v3627
        %3629 = vmatprep.mubr.bf16.mxu0 0
        %3630 = vmatmul.mubr.bf16.gmra.mrb[0].mxu0 %v3547
        %v3631 = vpop.f32.mrb[0].mxu0
        %v3632 = vadd.f32 0.0, %v3631
        %v3633 = vpop.f32.mrb[0].mxu0
        %v3634 = vadd.f32 0.0, %v3633
        %v3635 = vpop.f32.mrb[0].mxu0
        %v3636 = vadd.f32 0.0, %v3635
        %v3637 = vpop.f32.mrb[0].mxu0
        %v3638 = vadd.f32 0.0, %v3637
        %3639 = vmatprep.mubr.bf16.mxu0 0
        %3640 = vmatmul.mubr.bf16.gmra.mrb[0].mxu0 %v3548
        %v3641 = vpop.f32.mrb[0].mxu0
        %v3642 = vadd.f32 0.0, %v3641
        %v3643 = vpop.f32.mrb[0].mxu0
        %v3644 = vadd.f32 0.0, %v3643
        %v3645 = vpop.f32.mrb[0].mxu0
        %v3646 = vadd.f32 0.0, %v3645
        %v3647 = vpop.f32.mrb[0].mxu0
        %v3648 = vadd.f32 0.0, %v3647
        %3649 = vmatprep.mubr.bf16.mxu0 0
        %3650 = vmatmul.mubr.bf16.gmra.mrb[0].mxu0 %v3549
        %v3651 = vpop.f32.mrb[0].mxu0
        %v3652 = vadd.f32 0.0, %v3651
        %v3653 = vpop.f32.mrb[0].mxu0
        %v3654 = vadd.f32 0.0, %v3653
        %v3655 = vpop.f32.mrb[0].mxu0
        %v3656 = vadd.f32 0.0, %v3655
        %v3657 = vpop.f32.mrb[0].mxu0
        %v3658 = vadd.f32 0.0, %v3657
        %3659 = vmatprep.mubr.bf16.mxu0 0
        %3660 = vmatmul.mubr.bf16.gmra.mrb[0].mxu0 %v3550
        %v3661 = vpop.f32.mrb[0].mxu0
        %v3662 = vadd.f32 0.0, %v3661
        %v3663 = vpop.f32.mrb[0].mxu0
        %v3664 = vadd.f32 0.0, %v3663
        %v3665 = vpop.f32.mrb[0].mxu0
        %v3666 = vadd.f32 0.0, %v3665
        %v3667 = vpop.f32.mrb[0].mxu0
        %v3668 = vadd.f32 0.0, %v3667
        %3669 = vmatprep.mubr.bf16.mxu0 0
        %3670 = vmatmul.mubr.bf16.gmra.mrb[0].mxu0 %v3551
        %v3671 = vpop.f32.mrb[0].mxu0
        %v3672 = vadd.f32 0.0, %v3671
        %v3673 = vpop.f32.mrb[0].mxu0
        %v3674 = vadd.f32 0.0, %v3673
        %v3675 = vpop.f32.mrb[0].mxu0
        %v3676 = vadd.f32 0.0, %v3675
        %v3677 = vpop.f32.mrb[0].mxu0
        %v3678 = vadd.f32 0.0, %v3677
        %3679 = vmatprep.mubr.bf16.mxu0 0
        %3680 = vmatmul.mubr.bf16.gmra.mrb[0].mxu0 %v3552
        %v3681 = vpop.f32.mrb[0].mxu0
        %v3682 = vadd.f32 0.0, %v3681
        %v3683 = vpop.f32.mrb[0].mxu0
        %v3684 = vadd.f32 0.0, %v3683
        %v3685 = vpop.f32.mrb[0].mxu0
        %v3686 = vadd.f32 0.0, %v3685
        %v3687 = vpop.f32.mrb[0].mxu0
        %v3688 = vadd.f32 0.0, %v3687
        %3689 = vmatprep.mubr.bf16.mxu0 0
        %3690 = vmatmul.mubr.bf16.gmra.mrb[0].mxu0 %v3553
        %v3691 = vpop.f32.mrb[0].mxu0
        %v3692 = vadd.f32 0.0, %v3691
        %v3693 = vpop.f32.mrb[0].mxu0
        %v3694 = vadd.f32 0.0, %v3693
        %v3695 = vpop.f32.mrb[0].mxu0
        %v3696 = vadd.f32 0.0, %v3695
        %v3697 = vpop.f32.mrb[0].mxu0
        %v3698 = vadd.f32 0.0, %v3697
        %3699 = vmatprep.mubr.bf16.mxu0 0
        %3700 = vmatmul.mubr.bf16.gmra.mrb[0].mxu0 %v3554
        %v3701 = vpop.f32.mrb[0].mxu0
        %v3702 = vadd.f32 0.0, %v3701
        %v3703 = vpop.f32.mrb[0].mxu0
        %v3704 = vadd.f32 0.0, %v3703
        %v3705 = vpop.f32.mrb[0].mxu0
        %v3706 = vadd.f32 0.0, %v3705
        %v3707 = vpop.f32.mrb[0].mxu0
        %v3708 = vadd.f32 0.0, %v3707
        %3709 = vmatprep.mubr.bf16.mxu0 0
        %3710 = vmatmul.mubr.bf16.gmra.mrb[0].mxu0 %v3555
        %v3711 = vpop.f32.mrb[0].mxu0
        %v3712 = vadd.f32 0.0, %v3711
        %v3713 = vpop.f32.mrb[0].mxu0
        %v3714 = vadd.f32 0.0, %v3713
        %v3715 = vpop.f32.mrb[0].mxu0
        %v3716 = vadd.f32 0.0, %v3715
        %v3717 = vpop.f32.mrb[0].mxu0
        %v3718 = vadd.f32 0.0, %v3717
        %3719 = vmatprep.mubr.bf16.mxu0 0
        %3720 = vmatmul.mubr.bf16.gmra.mrb[0].mxu0 %v3556
        %v3721 = vpop.f32.mrb[0].mxu0
        %v3722 = vadd.f32 0.0, %v3721
        %v3723 = vpop.f32.mrb[0].mxu0
        %v3724 = vadd.f32 0.0, %v3723
        %v3725 = vpop.f32.mrb[0].mxu0
        %v3726 = vadd.f32 0.0, %v3725
        %v3727 = vpop.f32.mrb[0].mxu0
        %v3728 = vadd.f32 0.0, %v3727
        %3729 = vmatprep.mubr.bf16.mxu0 0
        %3730 = vmatmul.mubr.bf16.gmra.mrb[0].mxu0 %v3557
        %v3731 = vpop.f32.mrb[0].mxu0
        %v3732 = vadd.f32 0.0, %v3731
        %v3733 = vpop.f32.mrb[0].mxu0
        %v3734 = vadd.f32 0.0, %v3733
        %v3735 = vpop.f32.mrb[0].mxu0
        %v3736 = vadd.f32 0.0, %v3735
        %v3737 = vpop.f32.mrb[0].mxu0
        %v3738 = vadd.f32 0.0, %v3737
        %3739 = vmatprep.mubr.bf16.mxu0 0
        %3740 = vmatmul.mubr.bf16.gmra.mrb[0].mxu0 %v3558
        %v3741 = vpop.f32.mrb[0].mxu0
        %v3742 = vadd.f32 0.0, %v3741
        %v3743 = vpop.f32.mrb[0].mxu0
        %v3744 = vadd.f32 0.0, %v3743
        %v3745 = vpop.f32.mrb[0].mxu0
        %v3746 = vadd.f32 0.0, %v3745
        %v3747 = vpop.f32.mrb[0].mxu0
        %v3748 = vadd.f32 0.0, %v3747
        %3749 = vmatprep.mubr.bf16.mxu0 0
        %3750 = vmatmul.mubr.bf16.gmra.mrb[0].mxu0 %v3559
        %v3751 = vpop.f32.mrb[0].mxu0
        %v3752 = vadd.f32 0.0, %v3751
        %v3753 = vpop.f32.mrb[0].mxu0
        %v3754 = vadd.f32 0.0, %v3753
        %v3755 = vpop.f32.mrb[0].mxu0
        %v3756 = vadd.f32 0.0, %v3755
        %v3757 = vpop.f32.mrb[0].mxu0
        %v3758 = vadd.f32 0.0, %v3757
        %3759 = vmatprep.mubr.bf16.mxu0 0
        %3760 = vmatmul.mubr.bf16.gmra.mrb[0].mxu0 %v3560
        %v3761 = vpop.f32.mrb[0].mxu0
        %v3762 = vadd.f32 0.0, %v3761
        %v3763 = vpop.f32.mrb[0].mxu0
        %v3764 = vadd.f32 0.0, %v3763
        %v3765 = vpop.f32.mrb[0].mxu0
        %v3766 = vadd.f32 0.0, %v3765
        %v3767 = vpop.f32.mrb[0].mxu0
        %v3768 = vadd.f32 0.0, %v3767
        %3769 = vdwg.mxu0
        %v3770 = vld [vmem:[#allocation10] sm:$0xf]
        %v3771 = vpack.c.bf16 %v3616, %v3612
        %v3772 = vpack.c.bf16 %v3618, %v3614
        %v3773 = vpack.c.bf16 %v3626, %v3622
        %v3774 = vpack.c.bf16 %v3628, %v3624
        %v3775 = vpack.c.bf16 %v3636, %v3632
        %v3776 = vpack.c.bf16 %v3638, %v3634
        %v3777 = vpack.c.bf16 %v3646, %v3642
        %v3778 = vpack.c.bf16 %v3648, %v3644
        %v3779 = vpack.c.bf16 %v3656, %v3652
        %v3780 = vpack.c.bf16 %v3658, %v3654
        %v3781 = vpack.c.bf16 %v3666, %v3662
        %v3782 = vpack.c.bf16 %v3668, %v3664
        %v3783 = vpack.c.bf16 %v3676, %v3672
        %v3784 = vpack.c.bf16 %v3678, %v3674
        %v3785 = vpack.c.bf16 %v3686, %v3682
        %v3786 = vpack.c.bf16 %v3688, %v3684
        %v3787 = vpack.c.bf16 %v3696, %v3692
        %v3788 = vpack.c.bf16 %v3698, %v3694
        %v3789 = vpack.c.bf16 %v3706, %v3702
        %v3790 = vpack.c.bf16 %v3708, %v3704
        %v3791 = vpack.c.bf16 %v3716, %v3712
        %v3792 = vpack.c.bf16 %v3718, %v3714
        %v3793 = vpack.c.bf16 %v3726, %v3722
        %v3794 = vpack.c.bf16 %v3728, %v3724
        %v3795 = vpack.c.bf16 %v3736, %v3732
        %v3796 = vpack.c.bf16 %v3738, %v3734
        %v3797 = vpack.c.bf16 %v3746, %v3742
        %v3798 = vpack.c.bf16 %v3748, %v3744
        %v3799 = vpack.c.bf16 %v3756, %v3752
        %v3800 = vpack.c.bf16 %v3758, %v3754
        %v3801 = vpack.c.bf16 %v3766, %v3762
        %v3802 = vpack.c.bf16 %v3768, %v3764
        %v3803 = vld [vmem:[#allocation11] sm:$0xf]
        %3805 = vset.pattern.permute.xlu0 0
        %3806 = vperm.xlu0 %3805, %v3803
        %v3807 = vpop.permute.xlu0 %3806
        %v3811 = vunpack.c.l.s4 1983009808
        %v3812 = vunpack.c.0.s8 %v3811
        %v3813 = vlaneseq
        %v3814 = vshrl.u32 %v3813, 7
        %v3815 = vsub.s32 %v3812, %v3814
        %v3816 = vrot.slane %v3770, %v3815
        %v3817 = vcombine.high %v3816, %v3816
        %3820 = vmatprep.subr.bf16.mxu0 %v3772
        %3821 = vmatpush1.bf16.msra.mxu0 %v3771
        %3822 = vmatprep.subr.bf16.mxu0 %v3774
        %3823 = vmatpush1.bf16.msra.mxu0 %v3773
        %3824 = vmatprep.subr.bf16.mxu0 %v3776
        %3825 = vmatpush1.bf16.msra.mxu0 %v3775
        %3826 = vmatprep.subr.bf16.mxu0 %v3778
        %3827 = vmatpush1.bf16.msra.mxu0 %v3777
        %3828 = vmatprep.subr.bf16.mxu0 %v3780
        %3829 = vmatpush1.bf16.msra.mxu0 %v3779
        %3830 = vmatprep.subr.bf16.mxu0 %v3782
        %3831 = vmatpush1.bf16.msra.mxu0 %v3781
        %3832 = vmatprep.subr.bf16.mxu0 %v3784
        %3833 = vmatpush1.bf16.msra.mxu0 %v3783
        %3834 = vmatprep.subr.bf16.mxu0 %v3786
        %3835 = vmatpush1.bf16.msra.mxu0 %v3785
        %3836 = vmatprep.subr.bf16.mxu0 %v3788
        %3837 = vmatpush1.bf16.msra.mxu0 %v3787
        %3838 = vmatprep.subr.bf16.mxu0 %v3790
        %3839 = vmatpush1.bf16.msra.mxu0 %v3789
        %3840 = vmatprep.subr.bf16.mxu0 %v3792
        %3841 = vmatpush1.bf16.msra.mxu0 %v3791
        %3842 = vmatprep.subr.bf16.mxu0 %v3794
        %3843 = vmatpush1.bf16.msra.mxu0 %v3793
        %3844 = vmatprep.subr.bf16.mxu0 %v3796
        %3845 = vmatpush1.bf16.msra.mxu0 %v3795
        %3846 = vmatprep.subr.bf16.mxu0 %v3798
        %3847 = vmatpush1.bf16.msra.mxu0 %v3797
        %3848 = vmatprep.subr.bf16.mxu0 %v3800
        %3849 = vmatpush1.bf16.msra.mxu0 %v3799
        %3850 = vmatprep.subr.bf16.mxu0 %v3802
        %3851 = vmatpush1.bf16.msra.mxu0 %v3801
        %3852 = vmatprep.mubr.bf16.mxu0 %v3817
        %3853 = vmatmul.mubr.bf16.gmra.mrb[0].mxu0 %v3816
        %v3854 = vpop.f32.mrb[0].mxu0
        %v3855 = vadd.f32 %v3807, %v3854
        %v3856 = vpop.f32.mrb[0].mxu0
        %v3857 = vadd.f32 %v3807, %v3856
        %v3858 = vpop.f32.mrb[0].mxu0
        %v3859 = vpop.f32.mrb[0].mxu0
        %3860 = vdwg.mxu0
        %v3863 = vcombine.low %v3855, %v3857
        %v3865 = vadd.f32 %v338, %v3863
        %3866 = vst [vmem:[%s336] sm:$0xff] %v3865
        %s3867 = sand.u32 %s165, 1
        %s3868 = scalar_lea.sflag [#allocation4], %s3867
        %s3869 = sand.u32 %s165, 1
        %s3870 = smul.addr %s3869, 8
        %s3871 = scalar_lea.vmem [#allocation13], %s3870
        // Predicated region
        $region69: #{tpu_custom_call.1} parent=43 // pred_check
          %p3872 = pneg %p175
        $region70: #{tpu_custom_call.1} parent=43 // pred_check_branch
          %3874 = sbr.rel (%p3872) target = $region72
        $region71: #{tpu_custom_call.1} parent=43 // pred_region
          %s3876 = ssub.s32 128, 128
          %3877 = vsyncadd %s3868, %s3876
          %s3878 = smul.addr %s26, 2
          %s3879 = smul.addr %s3878, 64
          %s3880 = scalar_lea.hbm %s6, %s3879
          %s3882 = sshll.u32 %s3871, 4
          %s3883 = int_to_ptr.vmem [resolvable:$true] %s3882
          %3885 = dma.vmem_to_hbm [thread:$0]  %s3883, 128, %s3880, %s3868
        $region72: #{tpu_custom_call.1} parent=43 // pred_fallthru
          _
      $region44: #{tpu_custom_call.1} parent=5 // pred_fallthru
        _
      %p3886 = scmp.le.s32.totalorder 2, %s21
      // Predicated region
      $region73: #{tpu_custom_call.1} parent=5 // pred_check
        %p3887 = pneg %p3886
      $region74: #{tpu_custom_call.1} parent=5 // pred_check_branch
        %3889 = sbr.rel (%p3887) target = $region76
      $region75: #{tpu_custom_call.1} parent=5 // pred_region
        %s3890 = ssub.s32 %s21, 2
        // Predicated region
        $region77: #{tpu_custom_call.1} parent=75 // pred_check
          %p3891 = pneg %p181
        $region78: #{tpu_custom_call.1} parent=75 // pred_check_branch
          %3893 = sbr.rel (%p3891) target = $region80
        $region79: #{tpu_custom_call.1} parent=75 // pred_region
          %s3894 = sand.u32 %s166, 1
          %s3895 = scalar_lea.sflag [#allocation4], %s3894
          %s3896 = sand.u32 %s166, 1
          %s3897 = smul.addr %s3896, 8
          %s3898 = scalar_lea.vmem [#allocation13], %s3897
          %3899 = dma.done %s3895, 128
        $region80: #{tpu_custom_call.1} parent=75 // pred_fallthru
          _
      $region76: #{tpu_custom_call.1} parent=5 // pred_fallthru
        _
    $region6: #{tpu_custom_call.1} parent=1 // loop_footer
      %s25 = sadd.s32 1, %s21
    $region7: #{tpu_custom_call.1} parent=1 // loop_footer_branch
      %20 = sbr.rel target = $region3
    $region8: #{tpu_custom_call.1} parent=1 // loop_exit
      _
    %3900 = vsyncpa [#allocation3], 1
    %s3901 = scalar_lea.sflag [#allocation3], 1
    %3902 = vsyncpa %s3901, 1
    %3903 = vsyncpa [#allocation6], 1
    %3904 = vsyncpa [#allocation9], 1
    %3905 = vsyncpa [#allocation12], 1
    %3906 = vsyncpa [#allocation4], 1
    %s3907 = scalar_lea.sflag [#allocation4], 1
    %3908 = vsyncpa %s3907, 1

</llo_original>
